<compile_context>
chip_gen: v7x
topology: tpu7x:2x2x1
jax: 0.10.0
libtpu: 0.0.40
codegen_flags: <defaults>
</compile_context>

<pallas_src>
import functools

import jax
import jax.numpy as jnp
import numpy as np
from jax.experimental import pallas as pl
from jax.experimental.pallas import tpu as pltpu


# --------------------------------------------------------------------------- #
# Kernel A: input_proj + per-head Q/K/V projections (row-tiled, parallel grid)
# --------------------------------------------------------------------------- #
def _proj_kernel(*refs, num_heads, has_input_proj):
    f32, bf16 = jnp.float32, jnp.bfloat16
    if has_input_proj:
        (x_ref, wp_ref, bp_ref, wq_ref, bq_ref, wk_ref, bk_ref, wv_ref, bv_ref,
         xp_ref, q_ref, k_ref, v_ref) = refs
        xp = jnp.dot(x_ref[...].astype(bf16), wp_ref[...],
                     preferred_element_type=f32) + bp_ref[...]
    else:  # nn.Identity: no matmul at all
        (x_ref, wq_ref, bq_ref, wk_ref, bk_ref, wv_ref, bv_ref,
         xp_ref, q_ref, k_ref, v_ref) = refs
        xp = x_ref[...]

    xp_ref[...] = xp
    xb = xp.astype(bf16)
    # Static unroll over heads; per-head (F_pad, D) weights -> no lane slicing.
    for h in range(num_heads):
        q_ref[h, :, :] = (jnp.dot(xb, wq_ref[h], preferred_element_type=f32)
                          + bq_ref[h]).astype(bf16)
        k_ref[h, :, :] = (jnp.dot(xb, wk_ref[h], preferred_element_type=f32)
                          + bk_ref[h]).astype(bf16)
        v_ref[h, :, :] = (jnp.dot(xb, wv_ref[h], preferred_element_type=f32)
                          + bv_ref[h]).astype(bf16)


# --------------------------------------------------------------------------- #
# Kernel B: masked head-axis softmax attention + mha_proj + 2x LayerNorm + FFN
# --------------------------------------------------------------------------- #
def _attn_ffn_kernel(adj_ref, xp_ref, q_ref, k_ref, v_ref, wo_ref, bo_ref,
                     g1_ref, be1_ref, w1_ref, b1_ref, w2_ref, b2_ref,
                     g2_ref, be2_ref, o_ref,
                     *, num_heads, head_dim, n_real, f_real):
    f32, bf16 = jnp.float32, jnp.bfloat16
    tile_q, n_pad = adj_ref.shape
    f_pad = xp_ref.shape[-1]
    scale = 1.0 / float(head_dim) ** 0.5

    no_edge = adj_ref[...].astype(jnp.int32) == 0                    # (T, Np)
    key_valid = (jax.lax.broadcasted_iota(jnp.int32, (1, n_pad), 1)
                 < n_real).astype(f32)                               # zero padded keys
    feat_valid = (jax.lax.broadcasted_iota(jnp.int32, (1, f_pad), 1)
                  < f_real).astype(f32)                              # LayerNorm mask

    def head_scores(h):
        # (T, D) x (Np, D) contracted on last axes -> (T, Np); no transpose op.
        s = jax.lax.dot_general(q_ref[h], k_ref[h],
                                (((1,), (1,)), ((), ())),
                                preferred_element_type=f32) * scale
        return jnp.where(no_edge, -1e9, s)

    # ---- pass 1: online max/sum over the HEAD axis (torch softmax(dim=1)) ----
    m = head_scores(0)
    z = jnp.ones_like(m)
    for h in range(1, num_heads):
        s = head_scores(h)
        m_new = jnp.maximum(m, s)
        z = z * jnp.exp(m - m_new) + jnp.exp(s - m_new)
        m = m_new
    inv_z = pl.reciprocal(z, approx=True) * key_valid                # EUP reciprocal

    # ---- pass 2: recompute per-head weights, fuse mha_proj (no concatenate) ----
    xp = xp_ref[...]                                                 # (T, Fp) f32
    acc = jnp.zeros(xp.shape, f32)
    for h in range(num_heads):
        w = jnp.exp(head_scores(h) - m) * inv_z                      # (T, Np) f32
        o_h = jnp.dot(w.astype(bf16), v_ref[h], preferred_element_type=f32)
        acc = acc + jnp.dot(o_h.astype(bf16), wo_ref[h], preferred_element_type=f32)
    attn = acc + bo_ref[...]

    def layer_norm(y, gamma, beta, eps=1e-5):
        # Masked stats so the 128-lane padding does not perturb mean / var.
        ym = y * feat_valid
        mu = jnp.sum(ym, axis=-1, keepdims=True) * (1.0 / f_real)
        d = (y - mu) * feat_valid
        var = jnp.sum(d * d, axis=-1, keepdims=True) * (1.0 / f_real)
        return d * jax.lax.rsqrt(var + eps) * gamma + beta

    x1 = layer_norm(xp + attn, g1_ref[...], be1_ref[...])

    h1 = jnp.dot(x1.astype(bf16), w1_ref[...], preferred_element_type=f32) + b1_ref[...]
    h1 = jnp.maximum(h1, 0.0)
    ff = jnp.dot(h1.astype(bf16), w2_ref[...], preferred_element_type=f32) + b2_ref[...]

    o_ref[...] = layer_norm(x1 + ff, g2_ref[...], be2_ref[...])


# --------------------------------------------------------------------------- #
# Wrapper: padding, per-head weight restructuring, BlockSpecs, two pallas_calls
# --------------------------------------------------------------------------- #
def _round_up(a, b):
    return (a + b - 1) // b * b


def _snap_tile(tile_q):
    for t in (128, 64, 32):
        if tile_q >= t:
            return t
    return 32


def _pad2(a, rows, cols):
    return jnp.pad(a, ((0, rows - a.shape[0]), (0, cols - a.shape[1])))


def _split_heads_in(w, b, num_heads, f_pad):
    # w: (F, F) columns grouped per head -> (H, F_pad, D) bf16 ; b -> (H, 1, D) f32
    f_in, f_out = w.shape
    d = f_out // num_heads
    wh = w.reshape(f_in, num_heads, d).transpose(1, 0, 2)
    wh = jnp.pad(wh, ((0, 0), (0, f_pad - f_in), (0, 0))).astype(jnp.bfloat16)
    bh = b.reshape(num_heads, 1, d).astype(jnp.float32)
    return wh, bh


def _split_heads_out(w, num_heads, f_pad):
    # w: (F, F) rows grouped per head -> (H, D, F_pad) bf16
    f_in, f_out = w.shape
    d = f_in // num_heads
    wh = w.reshape(num_heads, d, f_out)
    return jnp.pad(wh, ((0, 0), (0, 0), (0, f_pad - f_out))).astype(jnp.bfloat16)


def graph_transformer_layer(x, edge_index, params, num_heads, *, tile_q=128):
    n, in_f = x.shape
    out_f = params["wq"].shape[1]
    head_dim = out_f // num_heads
    has_proj = "wp" in params                 # nn.Identity => skip the matmul

    f_pad = _round_up(out_f, 128)
    in_pad = _round_up(in_f, 128) if has_proj else f_pad
    ff_pad = _round_up(params["w1"].shape[1], 128)
    tile = _snap_tile(tile_q)                 # 32/64/128 rows per grid step
    n_pad = _round_up(n, 128)                 # tile always divides n_pad
    grid = (n_pad // tile,)

    f32, bf16, i8 = jnp.float32, jnp.bfloat16, jnp.int8
    cparams = pltpu.CompilerParams(
        dimension_semantics=("parallel",),    # row tiles are independent
        vmem_limit_bytes=48 * 1024 * 1024,    # explicit; fits v7x 64MiB, < v5e/v6e
    )

    # glue: dense int8 adjacency from edge_index (scatter); padded keys masked in-kernel
    adj = jnp.zeros((n_pad, n_pad), i8).at[edge_index[0], edge_index[1]].set(1)
    x_p = _pad2(x.astype(f32), n_pad, in_pad)

    # lane-dense padded weights; matmul operands in bf16, biases/LN params in f32
    wq, bq = _split_heads_in(params["wq"], params["bq"], num_heads, f_pad)
    wk, bk = _split_heads_in(params["wk"], params["bk"], num_heads, f_pad)
    wv, bv = _split_heads_in(params["wv"], params["bv"], num_heads, f_pad)
    wo = _split_heads_out(params["wo"], num_heads, f_pad)
    bo = _pad2(params["bo"], 1, f_pad).astype(f32)
    g1 = _pad2(params["g1"], 1, f_pad).astype(f32)
    be1 = _pad2(params["be1"], 1, f_pad).astype(f32)
    w1 = _pad2(params["w1"], f_pad, ff_pad).astype(bf16)
    b1 = _pad2(params["bf1"], 1, ff_pad).astype(f32)
    w2 = _pad2(params["w2"], ff_pad, f_pad).astype(bf16)
    b2 = _pad2(params["bf2"], 1, f_pad).astype(f32)
    g2 = _pad2(params["g2"], 1, f_pad).astype(f32)
    be2 = _pad2(params["be2"], 1, f_pad).astype(f32)

    const2 = lambda shape: pl.BlockSpec(shape, lambda i: (0, 0))
    const3 = lambda shape: pl.BlockSpec(shape, lambda i: (0, 0, 0))

    # ---------------- Kernel A: input_proj + per-head Q/K/V ---------------- #
    a_args = [x_p]
    a_specs = [pl.BlockSpec((tile, in_pad), lambda i: (i, 0))]
    if has_proj:
        a_args += [_pad2(params["wp"], in_pad, f_pad).astype(bf16),
                   _pad2(params["bp"], 1, f_pad).astype(f32)]
        a_specs += [const2((in_pad, f_pad)), const2((1, f_pad))]
    a_args += [wq, bq, wk, bk, wv, bv]
    a_specs += [const3((num_heads, f_pad, head_dim)),
                const3((num_heads, 1, head_dim))] * 3

    xp, q, k, v = pl.pallas_call(
        functools.partial(_proj_kernel, num_heads=num_heads, has_input_proj=has_proj),
        grid=grid,
        in_specs=a_specs,
        out_specs=(
            pl.BlockSpec((tile, f_pad), lambda i: (i, 0)),
            pl.BlockSpec((num_heads, tile, head_dim), lambda i: (0, i, 0)),
            pl.BlockSpec((num_heads, tile, head_dim), lambda i: (0, i, 0)),
            pl.BlockSpec((num_heads, tile, head_dim), lambda i: (0, i, 0)),
        ),
        out_shape=(
            jax.ShapeDtypeStruct((n_pad, f_pad), f32),
            jax.ShapeDtypeStruct((num_heads, n_pad, head_dim), bf16),
            jax.ShapeDtypeStruct((num_heads, n_pad, head_dim), bf16),
            jax.ShapeDtypeStruct((num_heads, n_pad, head_dim), bf16),
        ),
        compiler_params=cparams,
    )(*a_args)

    # ------------- Kernel B: attention + mha_proj + LN + FFN + LN ------------ #
    b_args = [adj, xp, q, k, v, wo, bo, g1, be1, w1, b1, w2, b2, g2, be2]
    b_specs = [
        pl.BlockSpec((tile, n_pad), lambda i: (i, 0)),                   # adj tile (int8)
        pl.BlockSpec((tile, f_pad), lambda i: (i, 0)),                   # x_proj tile
        pl.BlockSpec((num_heads, tile, head_dim), lambda i: (0, i, 0)),  # Q tile
        const3((num_heads, n_pad, head_dim)),                            # K (VMEM resident)
        const3((num_heads, n_pad, head_dim)),                            # V (VMEM resident)
        const3((num_heads, head_dim, f_pad)),                            # W_o per head
        const2((1, f_pad)), const2((1, f_pad)), const2((1, f_pad)),      # bo, g1, be1
        const2((f_pad, ff_pad)), const2((1, ff_pad)),                    # w1, b1
        const2((ff_pad, f_pad)), const2((1, f_pad)),                     # w2, b2
        const2((1, f_pad)), const2((1, f_pad)),                          # g2, be2
    ]
    out = pl.pallas_call(
        functools.partial(_attn_ffn_kernel, num_heads=num_heads, head_dim=head_dim,
                          n_real=n, f_real=out_f),
        grid=grid,
        in_specs=b_specs,
        out_specs=pl.BlockSpec((tile, f_pad), lambda i: (i, 0)),
        out_shape=jax.ShapeDtypeStruct((n_pad, f_pad), f32),
        compiler_params=cparams,
    )(*b_args)

    return out[:n, :out_f]


# --------------------------------------------------------------------------- #
# Parameters + pure-JAX reference (mirror of the PyTorch forward)
# --------------------------------------------------------------------------- #
def init_params(key, in_features, out_features):
    def lin(k, fin, fout, scale=0.1):
        kw, kb = jax.random.split(k)
        w = jax.random.normal(kw, (fin, fout), jnp.float32) * scale
        b = jax.random.normal(kb, (1, fout), jnp.float32) * scale
        return w, b

    ks = jax.random.split(key, 7)
    p = {}
    if in_features != out_features:
        p["wp"], p["bp"] = lin(ks[0], in_features, out_features)
    # identity case: no wp/bp at all -> the identity matmul is skipped
    p["wq"], p["bq"] = lin(ks[1], out_features, out_features)
    p["wk"], p["bk"] = lin(ks[2], out_features, out_features)
    p["wv"], p["bv"] = lin(ks[3], out_features, out_features)
    p["wo"], p["bo"] = lin(ks[4], out_features, out_features)
    p["w1"], p["bf1"] = lin(ks[5], out_features, out_features * 2)
    p["w2"], p["bf2"] = lin(ks[6], out_features * 2, out_features)
    p["g1"] = jnp.ones((1, out_features), jnp.float32)
    p["be1"] = jnp.zeros((1, out_features), jnp.float32)
    p["g2"] = jnp.ones((1, out_features), jnp.float32)
    p["be2"] = jnp.zeros((1, out_features), jnp.float32)
    return p


def _layer_norm(x, gamma, beta, eps=1e-5):
    mu = jnp.mean(x, axis=-1, keepdims=True)
    var = jnp.mean((x - mu) ** 2, axis=-1, keepdims=True)
    return (x - mu) * jax.lax.rsqrt(var + eps) * gamma + beta


def reference_forward(x, edge_index, p, num_heads):
    n = x.shape[0]
    f = p["wq"].shape[1]
    d = f // num_heads
    adj = jnp.zeros((n, n), jnp.float32).at[edge_index[0], edge_index[1]].set(1.0)
    if "wp" in p:
        x = x @ p["wp"] + p["bp"]
    q = (x @ p["wq"] + p["bq"]).reshape(-1, num_heads, d)
    k = (x @ p["wk"] + p["bk"]).reshape(-1, num_heads, d)
    v = (x @ p["wv"] + p["bv"]).reshape(-1, num_heads, d)
    s = jnp.einsum('nhd,mhd->nhm', q, k) / d ** 0.5
    s = jnp.where(adj[:, None, :] == 0, -1e9, s)
    w = jax.nn.softmax(s, axis=1)            # softmax over heads, as in the torch code
    o = jnp.einsum('nhm,mhd->nhd', w, v).reshape(-1, f)
    o = o @ p["wo"] + p["bo"]
    x = _layer_norm(x + o, p["g1"], p["be1"])
    ff = jnp.maximum(x @ p["w1"] + p["bf1"], 0.0) @ p["w2"] + p["bf2"]
    return _layer_norm(x + ff, p["g2"], p["be2"])


if __name__ == "__main__":
    N = 64              # number of graph nodes
    IN_FEATURES = 16
    OUT_FEATURES = 32
    NUM_HEADS = 4

    key = jax.random.PRNGKey(0)
    kx, kp = jax.random.split(key)
    x = jax.random.normal(kx, (N, IN_FEATURES), jnp.float32)

    # deterministic edge set: ring edges + skip-7 edges + self loops, shape (2, 3N)
    idx = jnp.arange(N)
    src = jnp.concatenate([idx, idx, idx])
    dst = jnp.concatenate([(idx + 1) % N, (idx + 7) % N, idx])
    edge_index = jnp.stack([src, dst]).astype(jnp.int32)

    # case 1: in_features != out_features (Linear input_proj)
    params = init_params(kp, IN_FEATURES, OUT_FEATURES)
    out = jax.block_until_ready(
        graph_transformer_layer(x, edge_index, params, NUM_HEADS, tile_q=32))
    ref = jax.block_until_ready(reference_forward(x, edge_index, params, NUM_HEADS))
    np.testing.assert_allclose(np.asarray(out), np.asarray(ref), rtol=5e-2, atol=5e-2)

    # case 2: in_features == out_features (nn.Identity -> projection skipped)
    x2 = jax.random.normal(jax.random.PRNGKey(1), (N, OUT_FEATURES), jnp.float32)
    params2 = init_params(jax.random.PRNGKey(2), OUT_FEATURES, OUT_FEATURES)
    out2 = jax.block_until_ready(
        graph_transformer_layer(x2, edge_index, params2, NUM_HEADS, tile_q=32))
    ref2 = jax.block_until_ready(reference_forward(x2, edge_index, params2, NUM_HEADS))
    np.testing.assert_allclose(np.asarray(out2), np.asarray(ref2), rtol=5e-2, atol=5e-2)

    print("KERNEL_OK")
</pallas_src>

<mosaic_0001>
module attributes {stable_mosaic.version = 11 : i64} {
  func.func @_proj_kernel(%arg0: i32, %arg1: memref<32x128xf32, #tpu.memory_space<vmem>>, %arg2: memref<128x128xbf16, #tpu.memory_space<vmem>>, %arg3: memref<1x128xf32, #tpu.memory_space<vmem>>, %arg4: memref<4x128x8xbf16, #tpu.memory_space<vmem>>, %arg5: memref<4x1x8xf32, #tpu.memory_space<vmem>>, %arg6: memref<4x128x8xbf16, #tpu.memory_space<vmem>>, %arg7: memref<4x1x8xf32, #tpu.memory_space<vmem>>, %arg8: memref<4x128x8xbf16, #tpu.memory_space<vmem>>, %arg9: memref<4x1x8xf32, #tpu.memory_space<vmem>>, %arg10: memref<32x128xf32, #tpu.memory_space<vmem>>, %arg11: memref<4x32x8xbf16, #tpu.memory_space<vmem>>, %arg12: memref<4x32x8xbf16, #tpu.memory_space<vmem>>, %arg13: memref<4x32x8xbf16, #tpu.memory_space<vmem>>) attributes {dimension_semantics = [#tpu.dimension_semantics<parallel>], iteration_bounds = array<i64: 4>, scalar_prefetch = 0 : i64, scratch_operands = 0 : i64, tpu.core_type = #tpu.core_type<tc>, window_params = [{transform_indices = @transform_0, window_bounds = array<i64: 32, 128>}, {pipeline_mode = #tpu.pipeline_mode<synchronous>, transform_indices = @transform_1, window_bounds = array<i64: 128, 128>}, {pipeline_mode = #tpu.pipeline_mode<synchronous>, transform_indices = @transform_2, window_bounds = array<i64: 1, 128>}, {pipeline_mode = #tpu.pipeline_mode<synchronous>, transform_indices = @transform_3, window_bounds = array<i64: 4, 128, 8>}, {pipeline_mode = #tpu.pipeline_mode<synchronous>, transform_indices = @transform_4, window_bounds = array<i64: 4, 1, 8>}, {pipeline_mode = #tpu.pipeline_mode<synchronous>, transform_indices = @transform_5, window_bounds = array<i64: 4, 128, 8>}, {pipeline_mode = #tpu.pipeline_mode<synchronous>, transform_indices = @transform_6, window_bounds = array<i64: 4, 1, 8>}, {pipeline_mode = #tpu.pipeline_mode<synchronous>, transform_indices = @transform_7, window_bounds = array<i64: 4, 128, 8>}, {pipeline_mode = #tpu.pipeline_mode<synchronous>, transform_indices = @transform_8, window_bounds = array<i64: 4, 1, 8>}, {transform_indices = @transform_9, window_bounds = array<i64: 32, 128>}, {transform_indices = @transform_10, window_bounds = array<i64: 4, 32, 8>}, {transform_indices = @transform_11, window_bounds = array<i64: 4, 32, 8>}, {transform_indices = @transform_12, window_bounds = array<i64: 4, 32, 8>}]} {
    %c0 = arith.constant 0 : index
    %c0_0 = arith.constant 0 : index
    %0 = vector.load %arg1[%c0, %c0_0] : memref<32x128xf32, #tpu.memory_space<vmem>>, vector<32x128xf32>
    %1 = arith.truncf %0 : vector<32x128xf32> to vector<32x128xbf16>
    %c0_1 = arith.constant 0 : index
    %c0_2 = arith.constant 0 : index
    %2 = vector.load %arg2[%c0_1, %c0_2] : memref<128x128xbf16, #tpu.memory_space<vmem>>, vector<128x128xbf16>
    %cst = arith.constant dense<0.000000e+00> : vector<32x128xf32>
    %3 = tpu.matmul %1, %2, %cst {dimension_numbers = #tpu.dot_dimension_numbers<[1], [0], [0], [1], [0, 0, 1, 1], [], []>} : vector<32x128xbf16>, vector<128x128xbf16>, vector<32x128xf32> -> vector<32x128xf32>
    %c0_3 = arith.constant 0 : index
    %c0_4 = arith.constant 0 : index
    %4 = vector.load %arg3[%c0_3, %c0_4] : memref<1x128xf32, #tpu.memory_space<vmem>>, vector<1x128xf32>
    %5 = vector.broadcast %4 : vector<1x128xf32> to vector<32x128xf32>
    %6 = arith.addf %3, %5 : vector<32x128xf32>
    %c0_5 = arith.constant 0 : index
    %c0_6 = arith.constant 0 : index
    %7 = vector.load %arg10[%c0_5, %c0_6] : memref<32x128xf32, #tpu.memory_space<vmem>>, vector<32x128xf32>
    tpu.vector_store %arg10[%c0_5, %c0_6], %6 {strides = array<i32>} : memref<32x128xf32, #tpu.memory_space<vmem>>, vector<32x128xf32>,
    %8 = arith.truncf %6 : vector<32x128xf32> to vector<32x128xbf16>
    %c0_7 = arith.constant 0 : index
    %c0_8 = arith.constant 0 : index
    %c0_9 = arith.constant 0 : index
    %9 = vector.load %arg4[%c0_7, %c0_8, %c0_9] : memref<4x128x8xbf16, #tpu.memory_space<vmem>>, vector<1x128x8xbf16>
    %10 = vector.shape_cast %9 : vector<1x128x8xbf16> to vector<128x8xbf16>
    %cst_10 = arith.constant dense<0.000000e+00> : vector<32x8xf32>
    %11 = tpu.matmul %8, %10, %cst_10 {dimension_numbers = #tpu.dot_dimension_numbers<[1], [0], [0], [1], [0, 0, 1, 1], [], []>} : vector<32x128xbf16>, vector<128x8xbf16>, vector<32x8xf32> -> vector<32x8xf32>
    %c0_11 = arith.constant 0 : index
    %c0_12 = arith.constant 0 : index
    %c0_13 = arith.constant 0 : index
    %12 = vector.load %arg5[%c0_11, %c0_12, %c0_13] : memref<4x1x8xf32, #tpu.memory_space<vmem>>, vector<1x1x8xf32>
    %13 = vector.shape_cast %12 : vector<1x1x8xf32> to vector<1x8xf32>
    %14 = vector.broadcast %13 : vector<1x8xf32> to vector<32x8xf32>
    %15 = arith.addf %11, %14 : vector<32x8xf32>
    %16 = arith.truncf %15 : vector<32x8xf32> to vector<32x8xbf16>
    %c0_14 = arith.constant 0 : index
    %c0_15 = arith.constant 0 : index
    %c0_16 = arith.constant 0 : index
    %17 = vector.load %arg11[%c0_14, %c0_15, %c0_16] : memref<4x32x8xbf16, #tpu.memory_space<vmem>>, vector<1x32x8xbf16>
    %18 = vector.shape_cast %17 : vector<1x32x8xbf16> to vector<32x8xbf16>
    %19 = vector.shape_cast %16 : vector<32x8xbf16> to vector<1x32x8xbf16>
    tpu.vector_store %arg11[%c0_14, %c0_15, %c0_16], %19 {strides = array<i32>} : memref<4x32x8xbf16, #tpu.memory_space<vmem>>, vector<1x32x8xbf16>,
    %c0_17 = arith.constant 0 : index
    %c0_18 = arith.constant 0 : index
    %c0_19 = arith.constant 0 : index
    %20 = vector.load %arg6[%c0_17, %c0_18, %c0_19] : memref<4x128x8xbf16, #tpu.memory_space<vmem>>, vector<1x128x8xbf16>
    %21 = vector.shape_cast %20 : vector<1x128x8xbf16> to vector<128x8xbf16>
    %cst_20 = arith.constant dense<0.000000e+00> : vector<32x8xf32>
    %22 = tpu.matmul %8, %21, %cst_20 {dimension_numbers = #tpu.dot_dimension_numbers<[1], [0], [0], [1], [0, 0, 1, 1], [], []>} : vector<32x128xbf16>, vector<128x8xbf16>, vector<32x8xf32> -> vector<32x8xf32>
    %c0_21 = arith.constant 0 : index
    %c0_22 = arith.constant 0 : index
    %c0_23 = arith.constant 0 : index
    %23 = vector.load %arg7[%c0_21, %c0_22, %c0_23] : memref<4x1x8xf32, #tpu.memory_space<vmem>>, vector<1x1x8xf32>
    %24 = vector.shape_cast %23 : vector<1x1x8xf32> to vector<1x8xf32>
    %25 = vector.broadcast %24 : vector<1x8xf32> to vector<32x8xf32>
    %26 = arith.addf %22, %25 : vector<32x8xf32>
    %27 = arith.truncf %26 : vector<32x8xf32> to vector<32x8xbf16>
    %c0_24 = arith.constant 0 : index
    %c0_25 = arith.constant 0 : index
    %c0_26 = arith.constant 0 : index
    %28 = vector.load %arg12[%c0_24, %c0_25, %c0_26] : memref<4x32x8xbf16, #tpu.memory_space<vmem>>, vector<1x32x8xbf16>
    %29 = vector.shape_cast %28 : vector<1x32x8xbf16> to vector<32x8xbf16>
    %30 = vector.shape_cast %27 : vector<32x8xbf16> to vector<1x32x8xbf16>
    tpu.vector_store %arg12[%c0_24, %c0_25, %c0_26], %30 {strides = array<i32>} : memref<4x32x8xbf16, #tpu.memory_space<vmem>>, vector<1x32x8xbf16>,
    %c0_27 = arith.constant 0 : index
    %c0_28 = arith.constant 0 : index
    %c0_29 = arith.constant 0 : index
    %31 = vector.load %arg8[%c0_27, %c0_28, %c0_29] : memref<4x128x8xbf16, #tpu.memory_space<vmem>>, vector<1x128x8xbf16>
    %32 = vector.shape_cast %31 : vector<1x128x8xbf16> to vector<128x8xbf16>
    %cst_30 = arith.constant dense<0.000000e+00> : vector<32x8xf32>
    %33 = tpu.matmul %8, %32, %cst_30 {dimension_numbers = #tpu.dot_dimension_numbers<[1], [0], [0], [1], [0, 0, 1, 1], [], []>} : vector<32x128xbf16>, vector<128x8xbf16>, vector<32x8xf32> -> vector<32x8xf32>
    %c0_31 = arith.constant 0 : index
    %c0_32 = arith.constant 0 : index
    %c0_33 = arith.constant 0 : index
    %34 = vector.load %arg9[%c0_31, %c0_32, %c0_33] : memref<4x1x8xf32, #tpu.memory_space<vmem>>, vector<1x1x8xf32>
    %35 = vector.shape_cast %34 : vector<1x1x8xf32> to vector<1x8xf32>
    %36 = vector.broadcast %35 : vector<1x8xf32> to vector<32x8xf32>
    %37 = arith.addf %33, %36 : vector<32x8xf32>
    %38 = arith.truncf %37 : vector<32x8xf32> to vector<32x8xbf16>
    %c0_34 = arith.constant 0 : index
    %c0_35 = arith.constant 0 : index
    %c0_36 = arith.constant 0 : index
    %39 = vector.load %arg13[%c0_34, %c0_35, %c0_36] : memref<4x32x8xbf16, #tpu.memory_space<vmem>>, vector<1x32x8xbf16>
    %40 = vector.shape_cast %39 : vector<1x32x8xbf16> to vector<32x8xbf16>
    %41 = vector.shape_cast %38 : vector<32x8xbf16> to vector<1x32x8xbf16>
    tpu.vector_store %arg13[%c0_34, %c0_35, %c0_36], %41 {strides = array<i32>} : memref<4x32x8xbf16, #tpu.memory_space<vmem>>, vector<1x32x8xbf16>,
    %c1 = arith.constant 1 : index
    %c0_37 = arith.constant 0 : index
    %c0_38 = arith.constant 0 : index
    %42 = vector.load %arg4[%c1, %c0_37, %c0_38] : memref<4x128x8xbf16, #tpu.memory_space<vmem>>, vector<1x128x8xbf16>
    %43 = vector.shape_cast %42 : vector<1x128x8xbf16> to vector<128x8xbf16>
    %cst_39 = arith.constant dense<0.000000e+00> : vector<32x8xf32>
    %44 = tpu.matmul %8, %43, %cst_39 {dimension_numbers = #tpu.dot_dimension_numbers<[1], [0], [0], [1], [0, 0, 1, 1], [], []>} : vector<32x128xbf16>, vector<128x8xbf16>, vector<32x8xf32> -> vector<32x8xf32>
    %c1_40 = arith.constant 1 : index
    %c0_41 = arith.constant 0 : index
    %c0_42 = arith.constant 0 : index
    %45 = vector.load %arg5[%c1_40, %c0_41, %c0_42] : memref<4x1x8xf32, #tpu.memory_space<vmem>>, vector<1x1x8xf32>
    %46 = vector.shape_cast %45 : vector<1x1x8xf32> to vector<1x8xf32>
    %47 = vector.broadcast %46 : vector<1x8xf32> to vector<32x8xf32>
    %48 = arith.addf %44, %47 : vector<32x8xf32>
    %49 = arith.truncf %48 : vector<32x8xf32> to vector<32x8xbf16>
    %c1_43 = arith.constant 1 : index
    %c0_44 = arith.constant 0 : index
    %c0_45 = arith.constant 0 : index
    %50 = vector.load %arg11[%c1_43, %c0_44, %c0_45] : memref<4x32x8xbf16, #tpu.memory_space<vmem>>, vector<1x32x8xbf16>
    %51 = vector.shape_cast %50 : vector<1x32x8xbf16> to vector<32x8xbf16>
    %52 = vector.shape_cast %49 : vector<32x8xbf16> to vector<1x32x8xbf16>
    tpu.vector_store %arg11[%c1_43, %c0_44, %c0_45], %52 {strides = array<i32>} : memref<4x32x8xbf16, #tpu.memory_space<vmem>>, vector<1x32x8xbf16>,
    %c1_46 = arith.constant 1 : index
    %c0_47 = arith.constant 0 : index
    %c0_48 = arith.constant 0 : index
    %53 = vector.load %arg6[%c1_46, %c0_47, %c0_48] : memref<4x128x8xbf16, #tpu.memory_space<vmem>>, vector<1x128x8xbf16>
    %54 = vector.shape_cast %53 : vector<1x128x8xbf16> to vector<128x8xbf16>
    %cst_49 = arith.constant dense<0.000000e+00> : vector<32x8xf32>
    %55 = tpu.matmul %8, %54, %cst_49 {dimension_numbers = #tpu.dot_dimension_numbers<[1], [0], [0], [1], [0, 0, 1, 1], [], []>} : vector<32x128xbf16>, vector<128x8xbf16>, vector<32x8xf32> -> vector<32x8xf32>
    %c1_50 = arith.constant 1 : index
    %c0_51 = arith.constant 0 : index
    %c0_52 = arith.constant 0 : index
    %56 = vector.load %arg7[%c1_50, %c0_51, %c0_52] : memref<4x1x8xf32, #tpu.memory_space<vmem>>, vector<1x1x8xf32>
    %57 = vector.shape_cast %56 : vector<1x1x8xf32> to vector<1x8xf32>
    %58 = vector.broadcast %57 : vector<1x8xf32> to vector<32x8xf32>
    %59 = arith.addf %55, %58 : vector<32x8xf32>
    %60 = arith.truncf %59 : vector<32x8xf32> to vector<32x8xbf16>
    %c1_53 = arith.constant 1 : index
    %c0_54 = arith.constant 0 : index
    %c0_55 = arith.constant 0 : index
    %61 = vector.load %arg12[%c1_53, %c0_54, %c0_55] : memref<4x32x8xbf16, #tpu.memory_space<vmem>>, vector<1x32x8xbf16>
    %62 = vector.shape_cast %61 : vector<1x32x8xbf16> to vector<32x8xbf16>
    %63 = vector.shape_cast %60 : vector<32x8xbf16> to vector<1x32x8xbf16>
    tpu.vector_store %arg12[%c1_53, %c0_54, %c0_55], %63 {strides = array<i32>} : memref<4x32x8xbf16, #tpu.memory_space<vmem>>, vector<1x32x8xbf16>,
    %c1_56 = arith.constant 1 : index
    %c0_57 = arith.constant 0 : index
    %c0_58 = arith.constant 0 : index
    %64 = vector.load %arg8[%c1_56, %c0_57, %c0_58] : memref<4x128x8xbf16, #tpu.memory_space<vmem>>, vector<1x128x8xbf16>
    %65 = vector.shape_cast %64 : vector<1x128x8xbf16> to vector<128x8xbf16>
    %cst_59 = arith.constant dense<0.000000e+00> : vector<32x8xf32>
    %66 = tpu.matmul %8, %65, %cst_59 {dimension_numbers = #tpu.dot_dimension_numbers<[1], [0], [0], [1], [0, 0, 1, 1], [], []>} : vector<32x128xbf16>, vector<128x8xbf16>, vector<32x8xf32> -> vector<32x8xf32>
    %c1_60 = arith.constant 1 : index
    %c0_61 = arith.constant 0 : index
    %c0_62 = arith.constant 0 : index
    %67 = vector.load %arg9[%c1_60, %c0_61, %c0_62] : memref<4x1x8xf32, #tpu.memory_space<vmem>>, vector<1x1x8xf32>
    %68 = vector.shape_cast %67 : vector<1x1x8xf32> to vector<1x8xf32>
    %69 = vector.broadcast %68 : vector<1x8xf32> to vector<32x8xf32>
    %70 = arith.addf %66, %69 : vector<32x8xf32>
    %71 = arith.truncf %70 : vector<32x8xf32> to vector<32x8xbf16>
    %c1_63 = arith.constant 1 : index
    %c0_64 = arith.constant 0 : index
    %c0_65 = arith.constant 0 : index
    %72 = vector.load %arg13[%c1_63, %c0_64, %c0_65] : memref<4x32x8xbf16, #tpu.memory_space<vmem>>, vector<1x32x8xbf16>
    %73 = vector.shape_cast %72 : vector<1x32x8xbf16> to vector<32x8xbf16>
    %74 = vector.shape_cast %71 : vector<32x8xbf16> to vector<1x32x8xbf16>
    tpu.vector_store %arg13[%c1_63, %c0_64, %c0_65], %74 {strides = array<i32>} : memref<4x32x8xbf16, #tpu.memory_space<vmem>>, vector<1x32x8xbf16>,
    %c2 = arith.constant 2 : index
    %c0_66 = arith.constant 0 : index
    %c0_67 = arith.constant 0 : index
    %75 = vector.load %arg4[%c2, %c0_66, %c0_67] : memref<4x128x8xbf16, #tpu.memory_space<vmem>>, vector<1x128x8xbf16>
    %76 = vector.shape_cast %75 : vector<1x128x8xbf16> to vector<128x8xbf16>
    %cst_68 = arith.constant dense<0.000000e+00> : vector<32x8xf32>
    %77 = tpu.matmul %8, %76, %cst_68 {dimension_numbers = #tpu.dot_dimension_numbers<[1], [0], [0], [1], [0, 0, 1, 1], [], []>} : vector<32x128xbf16>, vector<128x8xbf16>, vector<32x8xf32> -> vector<32x8xf32>
    %c2_69 = arith.constant 2 : index
    %c0_70 = arith.constant 0 : index
    %c0_71 = arith.constant 0 : index
    %78 = vector.load %arg5[%c2_69, %c0_70, %c0_71] : memref<4x1x8xf32, #tpu.memory_space<vmem>>, vector<1x1x8xf32>
    %79 = vector.shape_cast %78 : vector<1x1x8xf32> to vector<1x8xf32>
    %80 = vector.broadcast %79 : vector<1x8xf32> to vector<32x8xf32>
    %81 = arith.addf %77, %80 : vector<32x8xf32>
    %82 = arith.truncf %81 : vector<32x8xf32> to vector<32x8xbf16>
    %c2_72 = arith.constant 2 : index
    %c0_73 = arith.constant 0 : index
    %c0_74 = arith.constant 0 : index
    %83 = vector.load %arg11[%c2_72, %c0_73, %c0_74] : memref<4x32x8xbf16, #tpu.memory_space<vmem>>, vector<1x32x8xbf16>
    %84 = vector.shape_cast %83 : vector<1x32x8xbf16> to vector<32x8xbf16>
    %85 = vector.shape_cast %82 : vector<32x8xbf16> to vector<1x32x8xbf16>
    tpu.vector_store %arg11[%c2_72, %c0_73, %c0_74], %85 {strides = array<i32>} : memref<4x32x8xbf16, #tpu.memory_space<vmem>>, vector<1x32x8xbf16>,
    %c2_75 = arith.constant 2 : index
    %c0_76 = arith.constant 0 : index
    %c0_77 = arith.constant 0 : index
    %86 = vector.load %arg6[%c2_75, %c0_76, %c0_77] : memref<4x128x8xbf16, #tpu.memory_space<vmem>>, vector<1x128x8xbf16>
    %87 = vector.shape_cast %86 : vector<1x128x8xbf16> to vector<128x8xbf16>
    %cst_78 = arith.constant dense<0.000000e+00> : vector<32x8xf32>
    %88 = tpu.matmul %8, %87, %cst_78 {dimension_numbers = #tpu.dot_dimension_numbers<[1], [0], [0], [1], [0, 0, 1, 1], [], []>} : vector<32x128xbf16>, vector<128x8xbf16>, vector<32x8xf32> -> vector<32x8xf32>
    %c2_79 = arith.constant 2 : index
    %c0_80 = arith.constant 0 : index
    %c0_81 = arith.constant 0 : index
    %89 = vector.load %arg7[%c2_79, %c0_80, %c0_81] : memref<4x1x8xf32, #tpu.memory_space<vmem>>, vector<1x1x8xf32>
    %90 = vector.shape_cast %89 : vector<1x1x8xf32> to vector<1x8xf32>
    %91 = vector.broadcast %90 : vector<1x8xf32> to vector<32x8xf32>
    %92 = arith.addf %88, %91 : vector<32x8xf32>
    %93 = arith.truncf %92 : vector<32x8xf32> to vector<32x8xbf16>
    %c2_82 = arith.constant 2 : index
    %c0_83 = arith.constant 0 : index
    %c0_84 = arith.constant 0 : index
    %94 = vector.load %arg12[%c2_82, %c0_83, %c0_84] : memref<4x32x8xbf16, #tpu.memory_space<vmem>>, vector<1x32x8xbf16>
    %95 = vector.shape_cast %94 : vector<1x32x8xbf16> to vector<32x8xbf16>
    %96 = vector.shape_cast %93 : vector<32x8xbf16> to vector<1x32x8xbf16>
    tpu.vector_store %arg12[%c2_82, %c0_83, %c0_84], %96 {strides = array<i32>} : memref<4x32x8xbf16, #tpu.memory_space<vmem>>, vector<1x32x8xbf16>,
    %c2_85 = arith.constant 2 : index
    %c0_86 = arith.constant 0 : index
    %c0_87 = arith.constant 0 : index
    %97 = vector.load %arg8[%c2_85, %c0_86, %c0_87] : memref<4x128x8xbf16, #tpu.memory_space<vmem>>, vector<1x128x8xbf16>
    %98 = vector.shape_cast %97 : vector<1x128x8xbf16> to vector<128x8xbf16>
    %cst_88 = arith.constant dense<0.000000e+00> : vector<32x8xf32>
    %99 = tpu.matmul %8, %98, %cst_88 {dimension_numbers = #tpu.dot_dimension_numbers<[1], [0], [0], [1], [0, 0, 1, 1], [], []>} : vector<32x128xbf16>, vector<128x8xbf16>, vector<32x8xf32> -> vector<32x8xf32>
    %c2_89 = arith.constant 2 : index
    %c0_90 = arith.constant 0 : index
    %c0_91 = arith.constant 0 : index
    %100 = vector.load %arg9[%c2_89, %c0_90, %c0_91] : memref<4x1x8xf32, #tpu.memory_space<vmem>>, vector<1x1x8xf32>
    %101 = vector.shape_cast %100 : vector<1x1x8xf32> to vector<1x8xf32>
    %102 = vector.broadcast %101 : vector<1x8xf32> to vector<32x8xf32>
    %103 = arith.addf %99, %102 : vector<32x8xf32>
    %104 = arith.truncf %103 : vector<32x8xf32> to vector<32x8xbf16>
    %c2_92 = arith.constant 2 : index
    %c0_93 = arith.constant 0 : index
    %c0_94 = arith.constant 0 : index
    %105 = vector.load %arg13[%c2_92, %c0_93, %c0_94] : memref<4x32x8xbf16, #tpu.memory_space<vmem>>, vector<1x32x8xbf16>
    %106 = vector.shape_cast %105 : vector<1x32x8xbf16> to vector<32x8xbf16>
    %107 = vector.shape_cast %104 : vector<32x8xbf16> to vector<1x32x8xbf16>
    tpu.vector_store %arg13[%c2_92, %c0_93, %c0_94], %107 {strides = array<i32>} : memref<4x32x8xbf16, #tpu.memory_space<vmem>>, vector<1x32x8xbf16>,
    %c3 = arith.constant 3 : index
    %c0_95 = arith.constant 0 : index
    %c0_96 = arith.constant 0 : index
    %108 = vector.load %arg4[%c3, %c0_95, %c0_96] : memref<4x128x8xbf16, #tpu.memory_space<vmem>>, vector<1x128x8xbf16>
    %109 = vector.shape_cast %108 : vector<1x128x8xbf16> to vector<128x8xbf16>
    %cst_97 = arith.constant dense<0.000000e+00> : vector<32x8xf32>
    %110 = tpu.matmul %8, %109, %cst_97 {dimension_numbers = #tpu.dot_dimension_numbers<[1], [0], [0], [1], [0, 0, 1, 1], [], []>} : vector<32x128xbf16>, vector<128x8xbf16>, vector<32x8xf32> -> vector<32x8xf32>
    %c3_98 = arith.constant 3 : index
    %c0_99 = arith.constant 0 : index
    %c0_100 = arith.constant 0 : index
    %111 = vector.load %arg5[%c3_98, %c0_99, %c0_100] : memref<4x1x8xf32, #tpu.memory_space<vmem>>, vector<1x1x8xf32>
    %112 = vector.shape_cast %111 : vector<1x1x8xf32> to vector<1x8xf32>
    %113 = vector.broadcast %112 : vector<1x8xf32> to vector<32x8xf32>
    %114 = arith.addf %110, %113 : vector<32x8xf32>
    %115 = arith.truncf %114 : vector<32x8xf32> to vector<32x8xbf16>
    %c3_101 = arith.constant 3 : index
    %c0_102 = arith.constant 0 : index
    %c0_103 = arith.constant 0 : index
    %116 = vector.load %arg11[%c3_101, %c0_102, %c0_103] : memref<4x32x8xbf16, #tpu.memory_space<vmem>>, vector<1x32x8xbf16>
    %117 = vector.shape_cast %116 : vector<1x32x8xbf16> to vector<32x8xbf16>
    %118 = vector.shape_cast %115 : vector<32x8xbf16> to vector<1x32x8xbf16>
    tpu.vector_store %arg11[%c3_101, %c0_102, %c0_103], %118 {strides = array<i32>} : memref<4x32x8xbf16, #tpu.memory_space<vmem>>, vector<1x32x8xbf16>,
    %c3_104 = arith.constant 3 : index
    %c0_105 = arith.constant 0 : index
    %c0_106 = arith.constant 0 : index
    %119 = vector.load %arg6[%c3_104, %c0_105, %c0_106] : memref<4x128x8xbf16, #tpu.memory_space<vmem>>, vector<1x128x8xbf16>
    %120 = vector.shape_cast %119 : vector<1x128x8xbf16> to vector<128x8xbf16>
    %cst_107 = arith.constant dense<0.000000e+00> : vector<32x8xf32>
    %121 = tpu.matmul %8, %120, %cst_107 {dimension_numbers = #tpu.dot_dimension_numbers<[1], [0], [0], [1], [0, 0, 1, 1], [], []>} : vector<32x128xbf16>, vector<128x8xbf16>, vector<32x8xf32> -> vector<32x8xf32>
    %c3_108 = arith.constant 3 : index
    %c0_109 = arith.constant 0 : index
    %c0_110 = arith.constant 0 : index
    %122 = vector.load %arg7[%c3_108, %c0_109, %c0_110] : memref<4x1x8xf32, #tpu.memory_space<vmem>>, vector<1x1x8xf32>
    %123 = vector.shape_cast %122 : vector<1x1x8xf32> to vector<1x8xf32>
    %124 = vector.broadcast %123 : vector<1x8xf32> to vector<32x8xf32>
    %125 = arith.addf %121, %124 : vector<32x8xf32>
    %126 = arith.truncf %125 : vector<32x8xf32> to vector<32x8xbf16>
    %c3_111 = arith.constant 3 : index
    %c0_112 = arith.constant 0 : index
    %c0_113 = arith.constant 0 : index
    %127 = vector.load %arg12[%c3_111, %c0_112, %c0_113] : memref<4x32x8xbf16, #tpu.memory_space<vmem>>, vector<1x32x8xbf16>
    %128 = vector.shape_cast %127 : vector<1x32x8xbf16> to vector<32x8xbf16>
    %129 = vector.shape_cast %126 : vector<32x8xbf16> to vector<1x32x8xbf16>
    tpu.vector_store %arg12[%c3_111, %c0_112, %c0_113], %129 {strides = array<i32>} : memref<4x32x8xbf16, #tpu.memory_space<vmem>>, vector<1x32x8xbf16>,
    %c3_114 = arith.constant 3 : index
    %c0_115 = arith.constant 0 : index
    %c0_116 = arith.constant 0 : index
    %130 = vector.load %arg8[%c3_114, %c0_115, %c0_116] : memref<4x128x8xbf16, #tpu.memory_space<vmem>>, vector<1x128x8xbf16>
    %131 = vector.shape_cast %130 : vector<1x128x8xbf16> to vector<128x8xbf16>
    %cst_117 = arith.constant dense<0.000000e+00> : vector<32x8xf32>
    %132 = tpu.matmul %8, %131, %cst_117 {dimension_numbers = #tpu.dot_dimension_numbers<[1], [0], [0], [1], [0, 0, 1, 1], [], []>} : vector<32x128xbf16>, vector<128x8xbf16>, vector<32x8xf32> -> vector<32x8xf32>
    %c3_118 = arith.constant 3 : index
    %c0_119 = arith.constant 0 : index
    %c0_120 = arith.constant 0 : index
    %133 = vector.load %arg9[%c3_118, %c0_119, %c0_120] : memref<4x1x8xf32, #tpu.memory_space<vmem>>, vector<1x1x8xf32>
    %134 = vector.shape_cast %133 : vector<1x1x8xf32> to vector<1x8xf32>
    %135 = vector.broadcast %134 : vector<1x8xf32> to vector<32x8xf32>
    %136 = arith.addf %132, %135 : vector<32x8xf32>
    %137 = arith.truncf %136 : vector<32x8xf32> to vector<32x8xbf16>
    %c3_121 = arith.constant 3 : index
    %c0_122 = arith.constant 0 : index
    %c0_123 = arith.constant 0 : index
    %138 = vector.load %arg13[%c3_121, %c0_122, %c0_123] : memref<4x32x8xbf16, #tpu.memory_space<vmem>>, vector<1x32x8xbf16>
    %139 = vector.shape_cast %138 : vector<1x32x8xbf16> to vector<32x8xbf16>
    %140 = vector.shape_cast %137 : vector<32x8xbf16> to vector<1x32x8xbf16>
    tpu.vector_store %arg13[%c3_121, %c0_122, %c0_123], %140 {strides = array<i32>} : memref<4x32x8xbf16, #tpu.memory_space<vmem>>, vector<1x32x8xbf16>,
    return
  }
  func.func @transform_0(%arg0: i32) -> (i32, i32) {
    %c0_i32 = arith.constant 0 : i32
    %c0_i32_0 = arith.constant 0 : i32
    return %arg0, %c0_i32 : i32, i32
  }
  func.func @transform_1(%arg0: i32) -> (i32, i32) {
    %c0_i32 = arith.constant 0 : i32
    %c0_i32_0 = arith.constant 0 : i32
    %c0_i32_1 = arith.constant 0 : i32
    return %c0_i32, %c0_i32_0 : i32, i32
  }
  func.func @transform_2(%arg0: i32) -> (i32, i32) {
    %c0_i32 = arith.constant 0 : i32
    %c0_i32_0 = arith.constant 0 : i32
    %c0_i32_1 = arith.constant 0 : i32
    return %c0_i32, %c0_i32_0 : i32, i32
  }
  func.func @transform_3(%arg0: i32) -> (i32, i32, i32) {
    %c0_i32 = arith.constant 0 : i32
    %c0_i32_0 = arith.constant 0 : i32
    %c0_i32_1 = arith.constant 0 : i32
    %c0_i32_2 = arith.constant 0 : i32
    return %c0_i32, %c0_i32_0, %c0_i32_1 : i32, i32, i32
  }
  func.func @transform_4(%arg0: i32) -> (i32, i32, i32) {
    %c0_i32 = arith.constant 0 : i32
    %c0_i32_0 = arith.constant 0 : i32
    %c0_i32_1 = arith.constant 0 : i32
    %c0_i32_2 = arith.constant 0 : i32
    return %c0_i32, %c0_i32_0, %c0_i32_1 : i32, i32, i32
  }
  func.func @transform_5(%arg0: i32) -> (i32, i32, i32) {
    %c0_i32 = arith.constant 0 : i32
    %c0_i32_0 = arith.constant 0 : i32
    %c0_i32_1 = arith.constant 0 : i32
    %c0_i32_2 = arith.constant 0 : i32
    return %c0_i32, %c0_i32_0, %c0_i32_1 : i32, i32, i32
  }
  func.func @transform_6(%arg0: i32) -> (i32, i32, i32) {
    %c0_i32 = arith.constant 0 : i32
    %c0_i32_0 = arith.constant 0 : i32
    %c0_i32_1 = arith.constant 0 : i32
    %c0_i32_2 = arith.constant 0 : i32
    return %c0_i32, %c0_i32_0, %c0_i32_1 : i32, i32, i32
  }
  func.func @transform_7(%arg0: i32) -> (i32, i32, i32) {
    %c0_i32 = arith.constant 0 : i32
    %c0_i32_0 = arith.constant 0 : i32
    %c0_i32_1 = arith.constant 0 : i32
    %c0_i32_2 = arith.constant 0 : i32
    return %c0_i32, %c0_i32_0, %c0_i32_1 : i32, i32, i32
  }
  func.func @transform_8(%arg0: i32) -> (i32, i32, i32) {
    %c0_i32 = arith.constant 0 : i32
    %c0_i32_0 = arith.constant 0 : i32
    %c0_i32_1 = arith.constant 0 : i32
    %c0_i32_2 = arith.constant 0 : i32
    return %c0_i32, %c0_i32_0, %c0_i32_1 : i32, i32, i32
  }
  func.func @transform_9(%arg0: i32) -> (i32, i32) {
    %c0_i32 = arith.constant 0 : i32
    %c0_i32_0 = arith.constant 0 : i32
    return %arg0, %c0_i32 : i32, i32
  }
  func.func @transform_10(%arg0: i32) -> (i32, i32, i32) {
    %c0_i32 = arith.constant 0 : i32
    %c0_i32_0 = arith.constant 0 : i32
    %c0_i32_1 = arith.constant 0 : i32
    return %c0_i32, %arg0, %c0_i32_0 : i32, i32, i32
  }
  func.func @transform_11(%arg0: i32) -> (i32, i32, i32) {
    %c0_i32 = arith.constant 0 : i32
    %c0_i32_0 = arith.constant 0 : i32
    %c0_i32_1 = arith.constant 0 : i32
    return %c0_i32, %arg0, %c0_i32_0 : i32, i32, i32
  }
  func.func @transform_12(%arg0: i32) -> (i32, i32, i32) {
    %c0_i32 = arith.constant 0 : i32
    %c0_i32_0 = arith.constant 0 : i32
    %c0_i32_1 = arith.constant 0 : i32
    return %c0_i32, %arg0, %c0_i32_0 : i32, i32, i32
  }
}

</mosaic_0001>

<llo_original>
// kernel: tpu_custom_call.1
$region0: #{tpu_custom_call.1}
  #allocation0 [shape = 'u32[]', space=smem, size = 0x4, offset = 0x4, fixed_abs, tag = 'smem constant byte address 0x4 - core index']
  #allocation1 [shape = 'u32[144,128]{1,0:T(1,128)}', space=vmem, size = 0x12000, scoped, tag = 'internal scratch']
  %s0 = inlined_call_operand.vmem [shape: f32[128,128], index: 0, kind: input, shape index: {}]
  %s1 = inlined_call_operand.vmem [shape: bf16[128,128], index: 1, kind: input, shape index: {}]
  %s2 = inlined_call_operand.vmem [shape: f32[1,128], index: 2, kind: input, shape index: {}]
  %s3 = inlined_call_operand.vmem [shape: bf16[4,128,8], index: 3, kind: input, shape index: {}]
  %s4 = inlined_call_operand.vmem [shape: f32[4,1,8], index: 4, kind: input, shape index: {}]
  %s5 = inlined_call_operand.vmem [shape: bf16[4,128,8], index: 5, kind: input, shape index: {}]
  %s6 = inlined_call_operand.vmem [shape: f32[4,1,8], index: 6, kind: input, shape index: {}]
  %s7 = inlined_call_operand.vmem [shape: bf16[4,128,8], index: 7, kind: input, shape index: {}]
  %s8 = inlined_call_operand.vmem [shape: f32[4,1,8], index: 8, kind: input, shape index: {}]
  %s9 = inlined_call_operand.hbm [shape: f32[128,128], index: 9, kind: output, shape index: {0}]
  %s10 = inlined_call_operand.vmem [shape: bf16[4,128,8], index: 10, kind: output, shape index: {1}]
  %s11 = inlined_call_operand.vmem [shape: bf16[4,128,8], index: 11, kind: output, shape index: {2}]
  %s12 = inlined_call_operand.vmem [shape: bf16[4,128,8], index: 12, kind: output, shape index: {3}]
  %13 = xla_tuple %s9, %s10, %s11, %s12
  %s14 = sld [smem:[#allocation0]]
  $region204: #{tpu_custom_call.1} parent=0
    _
  %s16 = ssub.s32 1, %s14
  %s17 = scalar_select 0, %s16, %s14
  $region1: #{tpu_custom_call.1} parent=0
    #allocation2 [shape = 'u8[32768]{0}', space=vmem, size = 0x8000, scoped, tag = 'output window, operand 0']
    #allocation3 [shape = 's32[2]{0}', space=sflag, size = 0x8, scoped, tag = 'scoped memory for tpu_custom_call.1']
    #allocation4 [shape = 'u8[65536]{0}', space=vmem, size = 0x10000, scoped, tag = 'output window, operand 1']
    #allocation5 [shape = 'u8[65536]{0}', space=vmem, size = 0x10000, scoped, tag = 'output window, operand 2']
    #allocation6 [shape = 'u8[65536]{0}', space=vmem, size = 0x10000, scoped, tag = 'output window, operand 3']
    %18 = vsyncpa [#allocation3], 0
    %s19 = scalar_lea.sflag [#allocation3], 1
    %20 = vsyncpa %s19, 0
    loop: start=0, step=1, limit=6
    $region2: #{tpu_custom_call.1} parent=1 // loop_pre_header
      _
    $region3: #{tpu_custom_call.1} parent=1 // loop_header
      %s22 = sphi 0, %s26
      %p23 = scmp.ge.s32.totalorder %s22, 6
      %s32 = sphi 0, %s34
      %s35 = sphi 0, %s32
      %s36 = sphi 0, %s35
      %s52 = sphi 0, %s36
      %s56 = sphi 0, %s56
      %s58 = sphi 0, %s56
      %s59 = sphi 0, %s58
      %s73 = sphi 0, %s59
      %s77 = sphi 0, %s77
      %s79 = sphi 0, %s77
      %s80 = sphi 0, %s79
      %s94 = sphi 0, %s80
      %s98 = sphi 0, %s98
      %s100 = sphi 0, %s98
      %s101 = sphi 0, %s100
      %s115 = sphi 0, %s101
      %s119 = sphi 0, %s119
      %s121 = sphi 0, %s119
      %s122 = sphi 0, %s121
      %s136 = sphi 0, %s122
      %s140 = sphi 0, %s140
      %s142 = sphi 0, %s140
      %s143 = sphi 0, %s142
      %s157 = sphi 0, %s143
      %s161 = sphi 0, %s161
      %s163 = sphi 0, %s161
      %s164 = sphi 0, %s163
      %s178 = sphi 0, %s164
      %s182 = sphi 0, %s182
      %s184 = sphi 0, %s182
      %s185 = sphi 0, %s184
      %s199 = sphi 0, %s185
      %s203 = sphi 0, %s203
      %s205 = sphi 0, %s203
      %s206 = sphi 0, %s205
      %s220 = sphi 0, %s206
      %s226 = sphi 0, %s228
      %s229 = sphi 0, %s226
      %s230 = sphi 0, %s229
      %s246 = sphi 0, %s230
      %s252 = sphi 0, %s254
      %s255 = sphi 0, %s252
      %s256 = sphi 0, %s255
      %s272 = sphi 0, %s256
      %s278 = sphi 0, %s280
      %s281 = sphi 0, %s278
      %s282 = sphi 0, %s281
      %s298 = sphi 0, %s282
      %s304 = sphi 0, %s306
      %s307 = sphi 0, %s304
      %s308 = sphi 0, %s307
      %s324 = sphi 0, %s308
    $region4: #{tpu_custom_call.1} parent=1 // loop_header_branch
      %25 = sbr.rel (%p23) target = $region8
    $region5: #{tpu_custom_call.1} parent=1 // loop_body
      %s27 = ssub.s32 %s22, 1
      %s28 = ssub.s32 %s22, 2
      %s29 = sadd.s32 %s22, 1
      %s30 = ssub.s32 %s22, %s29
      %p31 = scmp.eq.s32.totalorder %s30, 0
      %s33 = sadd.s32 %s32, 1
      %s34 = scalar_select %p31, %s32, %s33
      %p37 = pneg %p31
      %p38 = scmp.eq.s32.totalorder %s22, 3
      %p39 = por %p37, %p38
      %p40 = scmp.ne.s32.totalorder %s32, %s35
      %p41 = scmp.eq.s32.totalorder %s22, 0
      %p42 = por %p40, %p41
      %p43 = scmp.ne.s32.totalorder %s32, %s35
      %p44 = scmp.eq.s32.totalorder %s27, 3
      %p45 = por %p43, %p44
      %p46 = scmp.ne.s32.totalorder %s35, %s36
      %p47 = scmp.eq.s32.totalorder %s27, 0
      %p48 = por %p46, %p47
      %p49 = scmp.ne.s32.totalorder %s35, %s36
      %p50 = scmp.eq.s32.totalorder %s28, 3
      %p51 = por %p49, %p50
      %p53 = scmp.ne.s32.totalorder %s36, %s52
      %p54 = scmp.eq.s32.totalorder %s28, 0
      %p55 = por %p53, %p54
      %s57 = sadd.s32 %s56, 1
      %p60 = scmp.eq.s32.totalorder %s22, 3
      %p61 = scmp.ne.s32.totalorder %s56, %s58
      %p62 = scmp.eq.s32.totalorder %s22, 0
      %p63 = por %p61, %p62
      %p64 = scmp.ne.s32.totalorder %s56, %s58
      %p65 = scmp.eq.s32.totalorder %s27, 3
      %p66 = por %p64, %p65
      %p67 = scmp.ne.s32.totalorder %s58, %s59
      %p68 = scmp.eq.s32.totalorder %s27, 0
      %p69 = por %p67, %p68
      %p70 = scmp.ne.s32.totalorder %s58, %s59
      %p71 = scmp.eq.s32.totalorder %s28, 3
      %p72 = por %p70, %p71
      %p74 = scmp.ne.s32.totalorder %s59, %s73
      %p75 = scmp.eq.s32.totalorder %s28, 0
      %p76 = por %p74, %p75
      %s78 = sadd.s32 %s77, 1
      %p81 = scmp.eq.s32.totalorder %s22, 3
      %p82 = scmp.ne.s32.totalorder %s77, %s79
      %p83 = scmp.eq.s32.totalorder %s22, 0
      %p84 = por %p82, %p83
      %p85 = scmp.ne.s32.totalorder %s77, %s79
      %p86 = scmp.eq.s32.totalorder %s27, 3
      %p87 = por %p85, %p86
      %p88 = scmp.ne.s32.totalorder %s79, %s80
      %p89 = scmp.eq.s32.totalorder %s27, 0
      %p90 = por %p88, %p89
      %p91 = scmp.ne.s32.totalorder %s79, %s80
      %p92 = scmp.eq.s32.totalorder %s28, 3
      %p93 = por %p91, %p92
      %p95 = scmp.ne.s32.totalorder %s80, %s94
      %p96 = scmp.eq.s32.totalorder %s28, 0
      %p97 = por %p95, %p96
      %s99 = sadd.s32 %s98, 1
      %p102 = scmp.eq.s32.totalorder %s22, 3
      %p103 = scmp.ne.s32.totalorder %s98, %s100
      %p104 = scmp.eq.s32.totalorder %s22, 0
      %p105 = por %p103, %p104
      %p106 = scmp.ne.s32.totalorder %s98, %s100
      %p107 = scmp.eq.s32.totalorder %s27, 3
      %p108 = por %p106, %p107
      %p109 = scmp.ne.s32.totalorder %s100, %s101
      %p110 = scmp.eq.s32.totalorder %s27, 0
      %p111 = por %p109, %p110
      %p112 = scmp.ne.s32.totalorder %s100, %s101
      %p113 = scmp.eq.s32.totalorder %s28, 3
      %p114 = por %p112, %p113
      %p116 = scmp.ne.s32.totalorder %s101, %s115
      %p117 = scmp.eq.s32.totalorder %s28, 0
      %p118 = por %p116, %p117
      %s120 = sadd.s32 %s119, 1
      %p123 = scmp.eq.s32.totalorder %s22, 3
      %p124 = scmp.ne.s32.totalorder %s119, %s121
      %p125 = scmp.eq.s32.totalorder %s22, 0
      %p126 = por %p124, %p125
      %p127 = scmp.ne.s32.totalorder %s119, %s121
      %p128 = scmp.eq.s32.totalorder %s27, 3
      %p129 = por %p127, %p128
      %p130 = scmp.ne.s32.totalorder %s121, %s122
      %p131 = scmp.eq.s32.totalorder %s27, 0
      %p132 = por %p130, %p131
      %p133 = scmp.ne.s32.totalorder %s121, %s122
      %p134 = scmp.eq.s32.totalorder %s28, 3
      %p135 = por %p133, %p134
      %p137 = scmp.ne.s32.totalorder %s122, %s136
      %p138 = scmp.eq.s32.totalorder %s28, 0
      %p139 = por %p137, %p138
      %s141 = sadd.s32 %s140, 1
      %p144 = scmp.eq.s32.totalorder %s22, 3
      %p145 = scmp.ne.s32.totalorder %s140, %s142
      %p146 = scmp.eq.s32.totalorder %s22, 0
      %p147 = por %p145, %p146
      %p148 = scmp.ne.s32.totalorder %s140, %s142
      %p149 = scmp.eq.s32.totalorder %s27, 3
      %p150 = por %p148, %p149
      %p151 = scmp.ne.s32.totalorder %s142, %s143
      %p152 = scmp.eq.s32.totalorder %s27, 0
      %p153 = por %p151, %p152
      %p154 = scmp.ne.s32.totalorder %s142, %s143
      %p155 = scmp.eq.s32.totalorder %s28, 3
      %p156 = por %p154, %p155
      %p158 = scmp.ne.s32.totalorder %s143, %s157
      %p159 = scmp.eq.s32.totalorder %s28, 0
      %p160 = por %p158, %p159
      %s162 = sadd.s32 %s161, 1
      %p165 = scmp.eq.s32.totalorder %s22, 3
      %p166 = scmp.ne.s32.totalorder %s161, %s163
      %p167 = scmp.eq.s32.totalorder %s22, 0
      %p168 = por %p166, %p167
      %p169 = scmp.ne.s32.totalorder %s161, %s163
      %p170 = scmp.eq.s32.totalorder %s27, 3
      %p171 = por %p169, %p170
      %p172 = scmp.ne.s32.totalorder %s163, %s164
      %p173 = scmp.eq.s32.totalorder %s27, 0
      %p174 = por %p172, %p173
      %p175 = scmp.ne.s32.totalorder %s163, %s164
      %p176 = scmp.eq.s32.totalorder %s28, 3
      %p177 = por %p175, %p176
      %p179 = scmp.ne.s32.totalorder %s164, %s178
      %p180 = scmp.eq.s32.totalorder %s28, 0
      %p181 = por %p179, %p180
      %s183 = sadd.s32 %s182, 1
      %p186 = scmp.eq.s32.totalorder %s22, 3
      %p187 = scmp.ne.s32.totalorder %s182, %s184
      %p188 = scmp.eq.s32.totalorder %s22, 0
      %p189 = por %p187, %p188
      %p190 = scmp.ne.s32.totalorder %s182, %s184
      %p191 = scmp.eq.s32.totalorder %s27, 3
      %p192 = por %p190, %p191
      %p193 = scmp.ne.s32.totalorder %s184, %s185
      %p194 = scmp.eq.s32.totalorder %s27, 0
      %p195 = por %p193, %p194
      %p196 = scmp.ne.s32.totalorder %s184, %s185
      %p197 = scmp.eq.s32.totalorder %s28, 3
      %p198 = por %p196, %p197
      %p200 = scmp.ne.s32.totalorder %s185, %s199
      %p201 = scmp.eq.s32.totalorder %s28, 0
      %p202 = por %p200, %p201
      %s204 = sadd.s32 %s203, 1
      %p207 = scmp.eq.s32.totalorder %s22, 3
      %p208 = scmp.ne.s32.totalorder %s203, %s205
      %p209 = scmp.eq.s32.totalorder %s22, 0
      %p210 = por %p208, %p209
      %p211 = scmp.ne.s32.totalorder %s203, %s205
      %p212 = scmp.eq.s32.totalorder %s27, 3
      %p213 = por %p211, %p212
      %p214 = scmp.ne.s32.totalorder %s205, %s206
      %p215 = scmp.eq.s32.totalorder %s27, 0
      %p216 = por %p214, %p215
      %p217 = scmp.ne.s32.totalorder %s205, %s206
      %p218 = scmp.eq.s32.totalorder %s28, 3
      %p219 = por %p217, %p218
      %p221 = scmp.ne.s32.totalorder %s206, %s220
      %p222 = scmp.eq.s32.totalorder %s28, 0
      %p223 = por %p221, %p222
      %s224 = ssub.s32 %s22, %s29
      %p225 = scmp.eq.s32.totalorder %s224, 0
      %s227 = sadd.s32 %s226, 1
      %s228 = scalar_select %p225, %s226, %s227
      %p231 = pneg %p225
      %p232 = scmp.eq.s32.totalorder %s22, 3
      %p233 = por %p231, %p232
      %p234 = scmp.ne.s32.totalorder %s226, %s229
      %p235 = scmp.eq.s32.totalorder %s22, 0
      %p236 = por %p234, %p235
      %p237 = scmp.ne.s32.totalorder %s226, %s229
      %p238 = scmp.eq.s32.totalorder %s27, 3
      %p239 = por %p237, %p238
      %p240 = scmp.ne.s32.totalorder %s229, %s230
      %p241 = scmp.eq.s32.totalorder %s27, 0
      %p242 = por %p240, %p241
      %p243 = scmp.ne.s32.totalorder %s229, %s230
      %p244 = scmp.eq.s32.totalorder %s28, 3
      %p245 = por %p243, %p244
      %p247 = scmp.ne.s32.totalorder %s230, %s246
      %p248 = scmp.eq.s32.totalorder %s28, 0
      %p249 = por %p247, %p248
      %s250 = ssub.s32 %s22, %s29
      %p251 = scmp.eq.s32.totalorder %s250, 0
      %s253 = sadd.s32 %s252, 1
      %s254 = scalar_select %p251, %s252, %s253
      %p257 = pneg %p251
      %p258 = scmp.eq.s32.totalorder %s22, 3
      %p259 = por %p257, %p258
      %p260 = scmp.ne.s32.totalorder %s252, %s255
      %p261 = scmp.eq.s32.totalorder %s22, 0
      %p262 = por %p260, %p261
      %p263 = scmp.ne.s32.totalorder %s252, %s255
      %p264 = scmp.eq.s32.totalorder %s27, 3
      %p265 = por %p263, %p264
      %p266 = scmp.ne.s32.totalorder %s255, %s256
      %p267 = scmp.eq.s32.totalorder %s27, 0
      %p268 = por %p266, %p267
      %p269 = scmp.ne.s32.totalorder %s255, %s256
      %p270 = scmp.eq.s32.totalorder %s28, 3
      %p271 = por %p269, %p270
      %p273 = scmp.ne.s32.totalorder %s256, %s272
      %p274 = scmp.eq.s32.totalorder %s28, 0
      %p275 = por %p273, %p274
      %s276 = ssub.s32 %s22, %s29
      %p277 = scmp.eq.s32.totalorder %s276, 0
      %s279 = sadd.s32 %s278, 1
      %s280 = scalar_select %p277, %s278, %s279
      %p283 = pneg %p277
      %p284 = scmp.eq.s32.totalorder %s22, 3
      %p285 = por %p283, %p284
      %p286 = scmp.ne.s32.totalorder %s278, %s281
      %p287 = scmp.eq.s32.totalorder %s22, 0
      %p288 = por %p286, %p287
      %p289 = scmp.ne.s32.totalorder %s278, %s281
      %p290 = scmp.eq.s32.totalorder %s27, 3
      %p291 = por %p289, %p290
      %p292 = scmp.ne.s32.totalorder %s281, %s282
      %p293 = scmp.eq.s32.totalorder %s27, 0
      %p294 = por %p292, %p293
      %p295 = scmp.ne.s32.totalorder %s281, %s282
      %p296 = scmp.eq.s32.totalorder %s28, 3
      %p297 = por %p295, %p296
      %p299 = scmp.ne.s32.totalorder %s282, %s298
      %p300 = scmp.eq.s32.totalorder %s28, 0
      %p301 = por %p299, %p300
      %s302 = ssub.s32 %s22, %s29
      %p303 = scmp.eq.s32.totalorder %s302, 0
      %s305 = sadd.s32 %s304, 1
      %s306 = scalar_select %p303, %s304, %s305
      %p309 = pneg %p303
      %p310 = scmp.eq.s32.totalorder %s22, 3
      %p311 = por %p309, %p310
      %p312 = scmp.ne.s32.totalorder %s304, %s307
      %p313 = scmp.eq.s32.totalorder %s22, 0
      %p314 = por %p312, %p313
      %p315 = scmp.ne.s32.totalorder %s304, %s307
      %p316 = scmp.eq.s32.totalorder %s27, 3
      %p317 = por %p315, %p316
      %p318 = scmp.ne.s32.totalorder %s307, %s308
      %p319 = scmp.eq.s32.totalorder %s27, 0
      %p320 = por %p318, %p319
      %p321 = scmp.ne.s32.totalorder %s307, %s308
      %p322 = scmp.eq.s32.totalorder %s28, 3
      %p323 = por %p321, %p322
      %p325 = scmp.ne.s32.totalorder %s308, %s324
      %p326 = scmp.eq.s32.totalorder %s28, 0
      %p327 = por %p325, %p326
      %p328 = scmp.le.s32.totalorder 1, %s22
      %p329 = scmp.lt.s32.totalorder %s22, 5
      %p330 = pnand %p328, %p329
      %p331 = pneg %p330
      // Predicated region
      $region9: #{tpu_custom_call.1} parent=5 // pred_check
        _
      $region10: #{tpu_custom_call.1} parent=5 // pred_check_branch
        %333 = sbr.rel (%p330) target = $region12
      $region11: #{tpu_custom_call.1} parent=5 // pred_region
        %s334 = ssub.s32 %s22, 1
        // Predicated region
        $region13: #{tpu_custom_call.1} parent=11 // pred_check
          %p335 = pneg %p69
        $region14: #{tpu_custom_call.1} parent=11 // pred_check_branch
          %337 = sbr.rel (%p335) target = $region16
        $region15: #{tpu_custom_call.1} parent=11 // pred_region
          _
        $region16: #{tpu_custom_call.1} parent=11 // pred_fallthru
          _
        // Predicated region
        $region17: #{tpu_custom_call.1} parent=11 // pred_check
          %p338 = pneg %p90
        $region18: #{tpu_custom_call.1} parent=11 // pred_check_branch
          %340 = sbr.rel (%p338) target = $region20
        $region19: #{tpu_custom_call.1} parent=11 // pred_region
          _
        $region20: #{tpu_custom_call.1} parent=11 // pred_fallthru
          _
        // Predicated region
        $region21: #{tpu_custom_call.1} parent=11 // pred_check
          %p341 = pneg %p111
        $region22: #{tpu_custom_call.1} parent=11 // pred_check_branch
          %343 = sbr.rel (%p341) target = $region24
        $region23: #{tpu_custom_call.1} parent=11 // pred_region
          _
        $region24: #{tpu_custom_call.1} parent=11 // pred_fallthru
          _
        // Predicated region
        $region25: #{tpu_custom_call.1} parent=11 // pred_check
          %p344 = pneg %p132
        $region26: #{tpu_custom_call.1} parent=11 // pred_check_branch
          %346 = sbr.rel (%p344) target = $region28
        $region27: #{tpu_custom_call.1} parent=11 // pred_region
          _
        $region28: #{tpu_custom_call.1} parent=11 // pred_fallthru
          _
        // Predicated region
        $region29: #{tpu_custom_call.1} parent=11 // pred_check
          %p347 = pneg %p153
        $region30: #{tpu_custom_call.1} parent=11 // pred_check_branch
          %349 = sbr.rel (%p347) target = $region32
        $region31: #{tpu_custom_call.1} parent=11 // pred_region
          _
        $region32: #{tpu_custom_call.1} parent=11 // pred_fallthru
          _
        // Predicated region
        $region33: #{tpu_custom_call.1} parent=11 // pred_check
          %p350 = pneg %p174
        $region34: #{tpu_custom_call.1} parent=11 // pred_check_branch
          %352 = sbr.rel (%p350) target = $region36
        $region35: #{tpu_custom_call.1} parent=11 // pred_region
          _
        $region36: #{tpu_custom_call.1} parent=11 // pred_fallthru
          _
        // Predicated region
        $region37: #{tpu_custom_call.1} parent=11 // pred_check
          %p353 = pneg %p195
        $region38: #{tpu_custom_call.1} parent=11 // pred_check_branch
          %355 = sbr.rel (%p353) target = $region40
        $region39: #{tpu_custom_call.1} parent=11 // pred_region
          _
        $region40: #{tpu_custom_call.1} parent=11 // pred_fallthru
          _
        // Predicated region
        $region41: #{tpu_custom_call.1} parent=11 // pred_check
          %p356 = pneg %p216
        $region42: #{tpu_custom_call.1} parent=11 // pred_check_branch
          %358 = sbr.rel (%p356) target = $region44
        $region43: #{tpu_custom_call.1} parent=11 // pred_region
          _
        $region44: #{tpu_custom_call.1} parent=11 // pred_fallthru
          _
      $region12: #{tpu_custom_call.1} parent=5 // pred_fallthru
        _
      %p359 = scmp.lt.s32.totalorder %s22, 4
      // Predicated region
      $region45: #{tpu_custom_call.1} parent=5 // pred_check
        %p360 = pneg %p359
      $region46: #{tpu_custom_call.1} parent=5 // pred_check_branch
        %362 = sbr.rel (%p360) target = $region48
      $region47: #{tpu_custom_call.1} parent=5 // pred_region
        // Predicated region
        $region49: #{tpu_custom_call.1} parent=47 // pred_check
          %p363 = pneg %p42
        $region50: #{tpu_custom_call.1} parent=47 // pred_check_branch
          %365 = sbr.rel (%p363) target = $region52
        $region51: #{tpu_custom_call.1} parent=47 // pred_region
          %s366 = smul.u32 4, %s22
          %p367 = scmp.lt.s32.totalorder %s366, 15
          %s368 = scalar_select %p367, %s366, 15
          %s369 = smul.addr %s368, 8
          %s370 = scalar_lea.vmem %s0, %s369
          %s371 = smul.u32 4, %s22
        $region52: #{tpu_custom_call.1} parent=47 // pred_fallthru
          _
      $region48: #{tpu_custom_call.1} parent=5 // pred_fallthru
        _
      %p372 = scmp.le.s32.totalorder 1, %s22
      %p373 = scmp.lt.s32.totalorder %s22, 5
      %p374 = pnand %p372, %p373
      %p375 = pneg %p374
      // Predicated region
      $region53: #{tpu_custom_call.1} parent=5 // pred_check
        _
      $region54: #{tpu_custom_call.1} parent=5 // pred_check_branch
        %377 = sbr.rel (%p374) target = $region56
      $region55: #{tpu_custom_call.1} parent=5 // pred_region
        %s378 = ssub.s32 %s22, 1
        %s379 = smul.u32 4, %s27
        %p380 = scmp.lt.s32.totalorder %s379, 15
        %s381 = scalar_select %p380, %s379, 15
        %s382 = smul.addr %s381, 8
        %s383 = scalar_lea.vmem %s0, %s382
        %p384 = pneg %p48
        %p385 = pneg %p45
        %p386 = pneg %p69
        %p387 = pneg %p66
        %p388 = pneg %p90
        %p389 = pneg %p87
        %p390 = pneg %p111
        %p391 = pneg %p108
        %p392 = pneg %p132
        %p393 = pneg %p129
        %p394 = pneg %p153
        %p395 = pneg %p150
        %p396 = pneg %p174
        %p397 = pneg %p171
        %p398 = pneg %p195
        %p399 = pneg %p192
        %p400 = pneg %p216
        %p401 = pneg %p213
        %p402 = pneg %p242
        %p403 = pneg %p239
        %s404 = sand.u32 %s229, 1
        %s405 = scalar_lea.sflag [#allocation3], %s404
        %s406 = sand.u32 %s229, 1
        %s407 = smul.addr %s406, 32
        %s408 = scalar_lea.vmem [#allocation2], %s407
        %p409 = pneg %p268
        %p410 = pneg %p265
        %s411 = sand.u32 %s255, 1
        %s412 = sand.u32 %s255, 1
        %s413 = smul.addr %s412, 64
        %s414 = scalar_lea.vmem [#allocation4], %s413
        %p415 = pneg %p294
        %p416 = pneg %p291
        %s417 = sand.u32 %s281, 1
        %s418 = sand.u32 %s281, 1
        %s419 = smul.addr %s418, 64
        %s420 = scalar_lea.vmem [#allocation5], %s419
        %p421 = pneg %p320
        %p422 = pneg %p317
        %s423 = sand.u32 %s307, 1
        %s424 = sand.u32 %s307, 1
        %s425 = smul.addr %s424, 64
        %s426 = scalar_lea.vmem [#allocation6], %s425
        %s427 = smul.u32 4, %s27
        %p428 = scmp.lt.s32.totalorder %s427, 15
        %s429 = scalar_select %p428, %s427, 15
        %s430 = smul.addr %s429, 8
        %s431 = scalar_lea.vmem %s0, %s430
        %s432 = smul.u32 4, %s27
        %s433 = smul.u32 4, %s27
        %s434 = smul.u32 4, %s27
        %s435 = smul.u32 4, %s27
        %s436 = smul.u32 4, %s27
        %v438 = vld [vmem:[%s431] sm:$0xff]
        %v439 = vld [vmem:[%s431 + $0x8] sm:$0xff]
        %v440 = vld [vmem:[%s431 + $0x10] sm:$0xff]
        %v441 = vld [vmem:[%s431 + $0x18] sm:$0xff]
        %v442 = vpack.c.bf16 %v439, %v438
        %v443 = vpack.c.bf16 %v441, %v440
        %v444 = vld [vmem:[%s1] sm:$0xf]
        %v445 = vld [vmem:[%s1 + $0x4] sm:$0xf]
        %v446 = vld [vmem:[%s1 + $0x8] sm:$0xf]
        %v447 = vld [vmem:[%s1 + $0xc] sm:$0xf]
        %v448 = vld [vmem:[%s1 + $0x10] sm:$0xf]
        %v449 = vld [vmem:[%s1 + $0x14] sm:$0xf]
        %v450 = vld [vmem:[%s1 + $0x18] sm:$0xf]
        %v451 = vld [vmem:[%s1 + $0x1c] sm:$0xf]
        %v452 = vld [vmem:[%s1 + $0x20] sm:$0xf]
        %v453 = vld [vmem:[%s1 + $0x24] sm:$0xf]
        %v454 = vld [vmem:[%s1 + $0x28] sm:$0xf]
        %v455 = vld [vmem:[%s1 + $0x2c] sm:$0xf]
        %v456 = vld [vmem:[%s1 + $0x30] sm:$0xf]
        %v457 = vld [vmem:[%s1 + $0x34] sm:$0xf]
        %v458 = vld [vmem:[%s1 + $0x38] sm:$0xf]
        %v459 = vld [vmem:[%s1 + $0x3c] sm:$0xf]
        %v460 = vld [vmem:[%s2] sm:$0x1]
        %v462 = vlaneseq
        %v463 = vshrl.u32 %v462, 7
        %v464 = vsub.s32 0, %v463
        %v465 = vrot.slane %v460, %v464
        %v483 = vunpack.c.l.b16 %v444
        %v484 = vunpack.c.l.b16 %v445
        %v485 = vunpack.c.l.b16 %v446
        %v486 = vunpack.c.l.b16 %v447
        %v487 = vunpack.c.l.b16 %v448
        %v488 = vunpack.c.l.b16 %v449
        %v489 = vunpack.c.l.b16 %v450
        %v490 = vunpack.c.l.b16 %v451
        %v491 = vunpack.c.l.b16 %v452
        %v492 = vunpack.c.l.b16 %v453
        %v493 = vunpack.c.l.b16 %v454
        %v494 = vunpack.c.l.b16 %v455
        %v495 = vunpack.c.l.b16 %v456
        %v496 = vunpack.c.l.b16 %v457
        %v497 = vunpack.c.l.b16 %v458
        %v498 = vunpack.c.l.b16 %v459
        %v499 = vpack.c.b16 %v484, %v483
        %v500 = vpack.c.b16 %v486, %v485
        %v501 = vpack.c.b16 %v488, %v487
        %v502 = vpack.c.b16 %v490, %v489
        %v503 = vpack.c.b16 %v492, %v491
        %v504 = vpack.c.b16 %v494, %v493
        %v505 = vpack.c.b16 %v496, %v495
        %v506 = vpack.c.b16 %v498, %v497
        %515 = vmatprep.subr.bf16.mxu0 0
        %516 = vmatpush1.bf16.msra.mxu0 %v499
        %517 = vmatprep.subr.bf16.mxu0 0
        %518 = vmatpush1.bf16.msra.mxu0 %v500
        %519 = vmatprep.subr.bf16.mxu0 0
        %520 = vmatpush1.bf16.msra.mxu0 %v501
        %521 = vmatprep.subr.bf16.mxu0 0
        %522 = vmatpush1.bf16.msra.mxu0 %v502
        %523 = vmatprep.subr.bf16.mxu0 0
        %524 = vmatpush1.bf16.msra.mxu0 %v503
        %525 = vmatprep.subr.bf16.mxu0 0
        %526 = vmatpush1.bf16.msra.mxu0 %v504
        %527 = vmatprep.subr.bf16.mxu0 0
        %528 = vmatpush1.bf16.msra.mxu0 %v505
        %529 = vmatprep.subr.bf16.mxu0 0
        %530 = vmatpush1.bf16.msra.mxu0 %v506
        %531 = vmatprep.subr.bf16.mxu0 0
        %532 = vmatpush1.bf16.msra.mxu0 0
        %533 = vmatprep.subr.bf16.mxu0 0
        %534 = vmatpush1.bf16.msra.mxu0 0
        %535 = vmatprep.subr.bf16.mxu0 0
        %536 = vmatpush1.bf16.msra.mxu0 0
        %537 = vmatprep.subr.bf16.mxu0 0
        %538 = vmatpush1.bf16.msra.mxu0 0
        %539 = vmatprep.subr.bf16.mxu0 0
        %540 = vmatpush1.bf16.msra.mxu0 0
        %541 = vmatprep.subr.bf16.mxu0 0
        %542 = vmatpush1.bf16.msra.mxu0 0
        %543 = vmatprep.subr.bf16.mxu0 0
        %544 = vmatpush1.bf16.msra.mxu0 0
        %545 = vmatprep.subr.bf16.mxu0 0
        %546 = vmatpush1.bf16.msra.mxu0 0
        %547 = vmatprep.mubr.bf16.mxu0 0
        %548 = vmatmul.mubr.bf16.gmra.mrb[0].mxu0 %v442
        %v549 = vpop.f32.mrb[0].mxu0
        %v550 = vadd.f32 %v465, %v549
        %v551 = vpop.f32.mrb[0].mxu0
        %v552 = vpop.f32.mrb[0].mxu0
        %v553 = vadd.f32 %v465, %v552
        %v554 = vpop.f32.mrb[0].mxu0
        %555 = vmatprep.mubr.bf16.mxu0 0
        %556 = vmatmul.mubr.bf16.gmra.mrb[0].mxu0 %v443
        %v557 = vpop.f32.mrb[0].mxu0
        %v558 = vadd.f32 %v465, %v557
        %v559 = vpop.f32.mrb[0].mxu0
        %v560 = vpop.f32.mrb[0].mxu0
        %v561 = vadd.f32 %v465, %v560
        %v562 = vpop.f32.mrb[0].mxu0
        %563 = vdwg.mxu0
        %564 = vst [vmem:[%s408] sm:$0xff] %v550
        %565 = vst [vmem:[%s408 + $0x8] sm:$0xff] %v553
        %566 = vst [vmem:[%s408 + $0x10] sm:$0xff] %v558
        %567 = vst [vmem:[%s408 + $0x18] sm:$0xff] %v561
        %v568 = vpack.c.bf16 %v553, %v550
        %v569 = vpack.c.bf16 %v561, %v558
        %v570 = vld [vmem:[%s3] sm:$0xf]
        %v571 = vld [vmem:[%s3 + $0x4] sm:$0xf]
        %v572 = vld [vmem:[%s3 + $0x8] sm:$0xf]
        %v573 = vld [vmem:[%s3 + $0xc] sm:$0xf]
        %v574 = vld [vmem:[%s3 + $0x10] sm:$0xf]
        %v575 = vld [vmem:[%s3 + $0x14] sm:$0xf]
        %v576 = vld [vmem:[%s3 + $0x18] sm:$0xf]
        %v577 = vld [vmem:[%s3 + $0x1c] sm:$0xf]
        %v578 = vld [vmem:[%s3 + $0x20] sm:$0xf]
        %v579 = vld [vmem:[%s3 + $0x24] sm:$0xf]
        %v580 = vld [vmem:[%s3 + $0x28] sm:$0xf]
        %v581 = vld [vmem:[%s3 + $0x2c] sm:$0xf]
        %v582 = vld [vmem:[%s3 + $0x30] sm:$0xf]
        %v583 = vld [vmem:[%s3 + $0x34] sm:$0xf]
        %v584 = vld [vmem:[%s3 + $0x38] sm:$0xf]
        %v585 = vld [vmem:[%s3 + $0x3c] sm:$0xf]
        %v586 = vld [vmem:[%s4] sm:$0x1]
        %v588 = vlaneseq
        %v589 = vshrl.u32 %v588, 7
        %v590 = vsub.s32 0, %v589
        %v591 = vrot.slane %v586, %v590
        %v609 = vunpack.c.l.b16 %v570
        %v610 = vunpack.c.l.b16 %v571
        %v611 = vunpack.c.l.b16 %v572
        %v612 = vunpack.c.l.b16 %v573
        %v613 = vunpack.c.l.b16 %v574
        %v614 = vunpack.c.l.b16 %v575
        %v615 = vunpack.c.l.b16 %v576
        %v616 = vunpack.c.l.b16 %v577
        %v617 = vunpack.c.l.b16 %v578
        %v618 = vunpack.c.l.b16 %v579
        %v619 = vunpack.c.l.b16 %v580
        %v620 = vunpack.c.l.b16 %v581
        %v621 = vunpack.c.l.b16 %v582
        %v622 = vunpack.c.l.b16 %v583
        %v623 = vunpack.c.l.b16 %v584
        %v624 = vunpack.c.l.b16 %v585
        %v625 = vpack.c.b16 %v610, %v609
        %v626 = vpack.c.b16 %v612, %v611
        %v627 = vpack.c.b16 %v614, %v613
        %v628 = vpack.c.b16 %v616, %v615
        %v629 = vpack.c.b16 %v618, %v617
        %v630 = vpack.c.b16 %v620, %v619
        %v631 = vpack.c.b16 %v622, %v621
        %v632 = vpack.c.b16 %v624, %v623
        %641 = vmatprep.subr.bf16.mxu0 0
        %642 = vmatpush1.bf16.msra.mxu0 %v625
        %643 = vmatprep.subr.bf16.mxu0 0
        %644 = vmatpush1.bf16.msra.mxu0 %v626
        %645 = vmatprep.subr.bf16.mxu0 0
        %646 = vmatpush1.bf16.msra.mxu0 %v627
        %647 = vmatprep.subr.bf16.mxu0 0
        %648 = vmatpush1.bf16.msra.mxu0 %v628
        %649 = vmatprep.subr.bf16.mxu0 0
        %650 = vmatpush1.bf16.msra.mxu0 %v629
        %651 = vmatprep.subr.bf16.mxu0 0
        %652 = vmatpush1.bf16.msra.mxu0 %v630
        %653 = vmatprep.subr.bf16.mxu0 0
        %654 = vmatpush1.bf16.msra.mxu0 %v631
        %655 = vmatprep.subr.bf16.mxu0 0
        %656 = vmatpush1.bf16.msra.mxu0 %v632
        %657 = vmatprep.subr.bf16.mxu0 0
        %658 = vmatpush1.bf16.msra.mxu0 0
        %659 = vmatprep.subr.bf16.mxu0 0
        %660 = vmatpush1.bf16.msra.mxu0 0
        %661 = vmatprep.subr.bf16.mxu0 0
        %662 = vmatpush1.bf16.msra.mxu0 0
        %663 = vmatprep.subr.bf16.mxu0 0
        %664 = vmatpush1.bf16.msra.mxu0 0
        %665 = vmatprep.subr.bf16.mxu0 0
        %666 = vmatpush1.bf16.msra.mxu0 0
        %667 = vmatprep.subr.bf16.mxu0 0
        %668 = vmatpush1.bf16.msra.mxu0 0
        %669 = vmatprep.subr.bf16.mxu0 0
        %670 = vmatpush1.bf16.msra.mxu0 0
        %671 = vmatprep.subr.bf16.mxu0 0
        %672 = vmatpush1.bf16.msra.mxu0 0
        %673 = vmatprep.mubr.bf16.mxu0 0
        %674 = vmatmul.mubr.bf16.gmra.mrb[0].mxu0 %v568
        %v675 = vpop.f32.mrb[0].mxu0
        %v676 = vadd.f32 %v591, %v675
        %v677 = vpop.f32.mrb[0].mxu0
        %v678 = vpop.f32.mrb[0].mxu0
        %v679 = vadd.f32 %v591, %v678
        %v680 = vpop.f32.mrb[0].mxu0
        %681 = vmatprep.mubr.bf16.mxu0 0
        %682 = vmatmul.mubr.bf16.gmra.mrb[0].mxu0 %v569
        %v683 = vpop.f32.mrb[0].mxu0
        %v684 = vadd.f32 %v591, %v683
        %v685 = vpop.f32.mrb[0].mxu0
        %v686 = vpop.f32.mrb[0].mxu0
        %v687 = vadd.f32 %v591, %v686
        %v688 = vpop.f32.mrb[0].mxu0
        %689 = vdwg.mxu0
        %v690 = vpack.c.bf16 %v679, %v676
        %v691 = vpack.c.bf16 %v687, %v684
        %v694 = vunpack.c.l.b16 %v690
        %v695 = vunpack.c.h.b16 %v690
        %v696 = vunpack.c.l.b16 %v691
        %v697 = vunpack.c.h.b16 %v691
        %v698 = vpack.c.b16 %v694, %v694
        %v699 = vpack.c.b16 %v695, %v695
        %v700 = vpack.c.b16 %v696, %v696
        %v701 = vpack.c.b16 %v697, %v697
        %vm706 = vcmask 60416
        %707 = vst.msk [vmem:[%s414] sm:$0xf] %vm706, %v698
        %708 = vst.msk [vmem:[%s414 + $0x4] sm:$0xf] %vm706, %v699
        %709 = vst.msk [vmem:[%s414 + $0x8] sm:$0xf] %vm706, %v700
        %710 = vst.msk [vmem:[%s414 + $0xc] sm:$0xf] %vm706, %v701
        %v711 = vld [vmem:[%s5] sm:$0xf]
        %v712 = vld [vmem:[%s5 + $0x4] sm:$0xf]
        %v713 = vld [vmem:[%s5 + $0x8] sm:$0xf]
        %v714 = vld [vmem:[%s5 + $0xc] sm:$0xf]
        %v715 = vld [vmem:[%s5 + $0x10] sm:$0xf]
        %v716 = vld [vmem:[%s5 + $0x14] sm:$0xf]
        %v717 = vld [vmem:[%s5 + $0x18] sm:$0xf]
        %v718 = vld [vmem:[%s5 + $0x1c] sm:$0xf]
        %v719 = vld [vmem:[%s5 + $0x20] sm:$0xf]
        %v720 = vld [vmem:[%s5 + $0x24] sm:$0xf]
        %v721 = vld [vmem:[%s5 + $0x28] sm:$0xf]
        %v722 = vld [vmem:[%s5 + $0x2c] sm:$0xf]
        %v723 = vld [vmem:[%s5 + $0x30] sm:$0xf]
        %v724 = vld [vmem:[%s5 + $0x34] sm:$0xf]
        %v725 = vld [vmem:[%s5 + $0x38] sm:$0xf]
        %v726 = vld [vmem:[%s5 + $0x3c] sm:$0xf]
        %v727 = vld [vmem:[%s6] sm:$0x1]
        %v729 = vlaneseq
        %v730 = vshrl.u32 %v729, 7
        %v731 = vsub.s32 0, %v730
        %v732 = vrot.slane %v727, %v731
        %v750 = vunpack.c.l.b16 %v711
        %v751 = vunpack.c.l.b16 %v712
        %v752 = vunpack.c.l.b16 %v713
        %v753 = vunpack.c.l.b16 %v714
        %v754 = vunpack.c.l.b16 %v715
        %v755 = vunpack.c.l.b16 %v716
        %v756 = vunpack.c.l.b16 %v717
        %v757 = vunpack.c.l.b16 %v718
        %v758 = vunpack.c.l.b16 %v719
        %v759 = vunpack.c.l.b16 %v720
        %v760 = vunpack.c.l.b16 %v721
        %v761 = vunpack.c.l.b16 %v722
        %v762 = vunpack.c.l.b16 %v723
        %v763 = vunpack.c.l.b16 %v724
        %v764 = vunpack.c.l.b16 %v725
        %v765 = vunpack.c.l.b16 %v726
        %v766 = vpack.c.b16 %v751, %v750
        %v767 = vpack.c.b16 %v753, %v752
        %v768 = vpack.c.b16 %v755, %v754
        %v769 = vpack.c.b16 %v757, %v756
        %v770 = vpack.c.b16 %v759, %v758
        %v771 = vpack.c.b16 %v761, %v760
        %v772 = vpack.c.b16 %v763, %v762
        %v773 = vpack.c.b16 %v765, %v764
        %782 = vmatprep.subr.bf16.mxu0 0
        %783 = vmatpush1.bf16.msra.mxu0 %v766
        %784 = vmatprep.subr.bf16.mxu0 0
        %785 = vmatpush1.bf16.msra.mxu0 %v767
        %786 = vmatprep.subr.bf16.mxu0 0
        %787 = vmatpush1.bf16.msra.mxu0 %v768
        %788 = vmatprep.subr.bf16.mxu0 0
        %789 = vmatpush1.bf16.msra.mxu0 %v769
        %790 = vmatprep.subr.bf16.mxu0 0
        %791 = vmatpush1.bf16.msra.mxu0 %v770
        %792 = vmatprep.subr.bf16.mxu0 0
        %793 = vmatpush1.bf16.msra.mxu0 %v771
        %794 = vmatprep.subr.bf16.mxu0 0
        %795 = vmatpush1.bf16.msra.mxu0 %v772
        %796 = vmatprep.subr.bf16.mxu0 0
        %797 = vmatpush1.bf16.msra.mxu0 %v773
        %798 = vmatprep.subr.bf16.mxu0 0
        %799 = vmatpush1.bf16.msra.mxu0 0
        %800 = vmatprep.subr.bf16.mxu0 0
        %801 = vmatpush1.bf16.msra.mxu0 0
        %802 = vmatprep.subr.bf16.mxu0 0
        %803 = vmatpush1.bf16.msra.mxu0 0
        %804 = vmatprep.subr.bf16.mxu0 0
        %805 = vmatpush1.bf16.msra.mxu0 0
        %806 = vmatprep.subr.bf16.mxu0 0
        %807 = vmatpush1.bf16.msra.mxu0 0
        %808 = vmatprep.subr.bf16.mxu0 0
        %809 = vmatpush1.bf16.msra.mxu0 0
        %810 = vmatprep.subr.bf16.mxu0 0
        %811 = vmatpush1.bf16.msra.mxu0 0
        %812 = vmatprep.subr.bf16.mxu0 0
        %813 = vmatpush1.bf16.msra.mxu0 0
        %814 = vmatprep.mubr.bf16.mxu0 0
        %815 = vmatmul.mubr.bf16.gmra.mrb[0].mxu0 %v568
        %v816 = vpop.f32.mrb[0].mxu0
        %v817 = vadd.f32 %v732, %v816
        %v818 = vpop.f32.mrb[0].mxu0
        %v819 = vpop.f32.mrb[0].mxu0
        %v820 = vadd.f32 %v732, %v819
        %v821 = vpop.f32.mrb[0].mxu0
        %822 = vmatprep.mubr.bf16.mxu0 0
        %823 = vmatmul.mubr.bf16.gmra.mrb[0].mxu0 %v569
        %v824 = vpop.f32.mrb[0].mxu0
        %v825 = vadd.f32 %v732, %v824
        %v826 = vpop.f32.mrb[0].mxu0
        %v827 = vpop.f32.mrb[0].mxu0
        %v828 = vadd.f32 %v732, %v827
        %v829 = vpop.f32.mrb[0].mxu0
        %830 = vdwg.mxu0
        %v831 = vpack.c.bf16 %v820, %v817
        %v832 = vpack.c.bf16 %v828, %v825
        %v835 = vunpack.c.l.b16 %v831
        %v836 = vunpack.c.h.b16 %v831
        %v837 = vunpack.c.l.b16 %v832
        %v838 = vunpack.c.h.b16 %v832
        %v839 = vpack.c.b16 %v835, %v835
        %v840 = vpack.c.b16 %v836, %v836
        %v841 = vpack.c.b16 %v837, %v837
        %v842 = vpack.c.b16 %v838, %v838
        %847 = vst.msk [vmem:[%s420] sm:$0xf] %vm706, %v839
        %848 = vst.msk [vmem:[%s420 + $0x4] sm:$0xf] %vm706, %v840
        %849 = vst.msk [vmem:[%s420 + $0x8] sm:$0xf] %vm706, %v841
        %850 = vst.msk [vmem:[%s420 + $0xc] sm:$0xf] %vm706, %v842
        %v851 = vld [vmem:[%s7] sm:$0xf]
        %v852 = vld [vmem:[%s7 + $0x4] sm:$0xf]
        %v853 = vld [vmem:[%s7 + $0x8] sm:$0xf]
        %v854 = vld [vmem:[%s7 + $0xc] sm:$0xf]
        %v855 = vld [vmem:[%s7 + $0x10] sm:$0xf]
        %v856 = vld [vmem:[%s7 + $0x14] sm:$0xf]
        %v857 = vld [vmem:[%s7 + $0x18] sm:$0xf]
        %v858 = vld [vmem:[%s7 + $0x1c] sm:$0xf]
        %v859 = vld [vmem:[%s7 + $0x20] sm:$0xf]
        %v860 = vld [vmem:[%s7 + $0x24] sm:$0xf]
        %v861 = vld [vmem:[%s7 + $0x28] sm:$0xf]
        %v862 = vld [vmem:[%s7 + $0x2c] sm:$0xf]
        %v863 = vld [vmem:[%s7 + $0x30] sm:$0xf]
        %v864 = vld [vmem:[%s7 + $0x34] sm:$0xf]
        %v865 = vld [vmem:[%s7 + $0x38] sm:$0xf]
        %v866 = vld [vmem:[%s7 + $0x3c] sm:$0xf]
        %v867 = vld [vmem:[%s8] sm:$0x1]
        %v869 = vlaneseq
        %v870 = vshrl.u32 %v869, 7
        %v871 = vsub.s32 0, %v870
        %v872 = vrot.slane %v867, %v871
        %v890 = vunpack.c.l.b16 %v851
        %v891 = vunpack.c.l.b16 %v852
        %v892 = vunpack.c.l.b16 %v853
        %v893 = vunpack.c.l.b16 %v854
        %v894 = vunpack.c.l.b16 %v855
        %v895 = vunpack.c.l.b16 %v856
        %v896 = vunpack.c.l.b16 %v857
        %v897 = vunpack.c.l.b16 %v858
        %v898 = vunpack.c.l.b16 %v859
        %v899 = vunpack.c.l.b16 %v860
        %v900 = vunpack.c.l.b16 %v861
        %v901 = vunpack.c.l.b16 %v862
        %v902 = vunpack.c.l.b16 %v863
        %v903 = vunpack.c.l.b16 %v864
        %v904 = vunpack.c.l.b16 %v865
        %v905 = vunpack.c.l.b16 %v866
        %v906 = vpack.c.b16 %v891, %v890
        %v907 = vpack.c.b16 %v893, %v892
        %v908 = vpack.c.b16 %v895, %v894
        %v909 = vpack.c.b16 %v897, %v896
        %v910 = vpack.c.b16 %v899, %v898
        %v911 = vpack.c.b16 %v901, %v900
        %v912 = vpack.c.b16 %v903, %v902
        %v913 = vpack.c.b16 %v905, %v904
        %922 = vmatprep.subr.bf16.mxu0 0
        %923 = vmatpush1.bf16.msra.mxu0 %v906
        %924 = vmatprep.subr.bf16.mxu0 0
        %925 = vmatpush1.bf16.msra.mxu0 %v907
        %926 = vmatprep.subr.bf16.mxu0 0
        %927 = vmatpush1.bf16.msra.mxu0 %v908
        %928 = vmatprep.subr.bf16.mxu0 0
        %929 = vmatpush1.bf16.msra.mxu0 %v909
        %930 = vmatprep.subr.bf16.mxu0 0
        %931 = vmatpush1.bf16.msra.mxu0 %v910
        %932 = vmatprep.subr.bf16.mxu0 0
        %933 = vmatpush1.bf16.msra.mxu0 %v911
        %934 = vmatprep.subr.bf16.mxu0 0
        %935 = vmatpush1.bf16.msra.mxu0 %v912
        %936 = vmatprep.subr.bf16.mxu0 0
        %937 = vmatpush1.bf16.msra.mxu0 %v913
        %938 = vmatprep.subr.bf16.mxu0 0
        %939 = vmatpush1.bf16.msra.mxu0 0
        %940 = vmatprep.subr.bf16.mxu0 0
        %941 = vmatpush1.bf16.msra.mxu0 0
        %942 = vmatprep.subr.bf16.mxu0 0
        %943 = vmatpush1.bf16.msra.mxu0 0
        %944 = vmatprep.subr.bf16.mxu0 0
        %945 = vmatpush1.bf16.msra.mxu0 0
        %946 = vmatprep.subr.bf16.mxu0 0
        %947 = vmatpush1.bf16.msra.mxu0 0
        %948 = vmatprep.subr.bf16.mxu0 0
        %949 = vmatpush1.bf16.msra.mxu0 0
        %950 = vmatprep.subr.bf16.mxu0 0
        %951 = vmatpush1.bf16.msra.mxu0 0
        %952 = vmatprep.subr.bf16.mxu0 0
        %953 = vmatpush1.bf16.msra.mxu0 0
        %954 = vmatprep.mubr.bf16.mxu0 0
        %955 = vmatmul.mubr.bf16.gmra.mrb[0].mxu0 %v568
        %v956 = vpop.f32.mrb[0].mxu0
        %v957 = vadd.f32 %v872, %v956
        %v958 = vpop.f32.mrb[0].mxu0
        %v959 = vpop.f32.mrb[0].mxu0
        %v960 = vadd.f32 %v872, %v959
        %v961 = vpop.f32.mrb[0].mxu0
        %962 = vmatprep.mubr.bf16.mxu0 0
        %963 = vmatmul.mubr.bf16.gmra.mrb[0].mxu0 %v569
        %v964 = vpop.f32.mrb[0].mxu0
        %v965 = vadd.f32 %v872, %v964
        %v966 = vpop.f32.mrb[0].mxu0
        %v967 = vpop.f32.mrb[0].mxu0
        %v968 = vadd.f32 %v872, %v967
        %v969 = vpop.f32.mrb[0].mxu0
        %970 = vdwg.mxu0
        %v971 = vpack.c.bf16 %v960, %v957
        %v972 = vpack.c.bf16 %v968, %v965
        %v975 = vunpack.c.l.b16 %v971
        %v976 = vunpack.c.h.b16 %v971
        %v977 = vunpack.c.l.b16 %v972
        %v978 = vunpack.c.h.b16 %v972
        %v979 = vpack.c.b16 %v975, %v975
        %v980 = vpack.c.b16 %v976, %v976
        %v981 = vpack.c.b16 %v977, %v977
        %v982 = vpack.c.b16 %v978, %v978
        %987 = vst.msk [vmem:[%s426] sm:$0xf] %vm706, %v979
        %988 = vst.msk [vmem:[%s426 + $0x4] sm:$0xf] %vm706, %v980
        %989 = vst.msk [vmem:[%s426 + $0x8] sm:$0xf] %vm706, %v981
        %990 = vst.msk [vmem:[%s426 + $0xc] sm:$0xf] %vm706, %v982
        %s991 = scalar_lea.vmem %s3, 64
        %v992 = vld [vmem:[%s991] sm:$0xf]
        %v993 = vld [vmem:[%s991 + $0x4] sm:$0xf]
        %v994 = vld [vmem:[%s991 + $0x8] sm:$0xf]
        %v995 = vld [vmem:[%s991 + $0xc] sm:$0xf]
        %v996 = vld [vmem:[%s991 + $0x10] sm:$0xf]
        %v997 = vld [vmem:[%s991 + $0x14] sm:$0xf]
        %v998 = vld [vmem:[%s991 + $0x18] sm:$0xf]
        %v999 = vld [vmem:[%s991 + $0x1c] sm:$0xf]
        %v1000 = vld [vmem:[%s991 + $0x20] sm:$0xf]
        %v1001 = vld [vmem:[%s991 + $0x24] sm:$0xf]
        %v1002 = vld [vmem:[%s991 + $0x28] sm:$0xf]
        %v1003 = vld [vmem:[%s991 + $0x2c] sm:$0xf]
        %v1004 = vld [vmem:[%s991 + $0x30] sm:$0xf]
        %v1005 = vld [vmem:[%s991 + $0x34] sm:$0xf]
        %v1006 = vld [vmem:[%s991 + $0x38] sm:$0xf]
        %v1007 = vld [vmem:[%s991 + $0x3c] sm:$0xf]
        %s1008 = scalar_lea.vmem %s4, 1
        %v1009 = vld [vmem:[%s1008] sm:$0x1]
        %v1011 = vlaneseq
        %v1012 = vshrl.u32 %v1011, 7
        %v1013 = vsub.s32 0, %v1012
        %v1014 = vrot.slane %v1009, %v1013
        %v1032 = vunpack.c.l.b16 %v992
        %v1033 = vunpack.c.l.b16 %v993
        %v1034 = vunpack.c.l.b16 %v994
        %v1035 = vunpack.c.l.b16 %v995
        %v1036 = vunpack.c.l.b16 %v996
        %v1037 = vunpack.c.l.b16 %v997
        %v1038 = vunpack.c.l.b16 %v998
        %v1039 = vunpack.c.l.b16 %v999
        %v1040 = vunpack.c.l.b16 %v1000
        %v1041 = vunpack.c.l.b16 %v1001
        %v1042 = vunpack.c.l.b16 %v1002
        %v1043 = vunpack.c.l.b16 %v1003
        %v1044 = vunpack.c.l.b16 %v1004
        %v1045 = vunpack.c.l.b16 %v1005
        %v1046 = vunpack.c.l.b16 %v1006
        %v1047 = vunpack.c.l.b16 %v1007
        %v1048 = vpack.c.b16 %v1033, %v1032
        %v1049 = vpack.c.b16 %v1035, %v1034
        %v1050 = vpack.c.b16 %v1037, %v1036
        %v1051 = vpack.c.b16 %v1039, %v1038
        %v1052 = vpack.c.b16 %v1041, %v1040
        %v1053 = vpack.c.b16 %v1043, %v1042
        %v1054 = vpack.c.b16 %v1045, %v1044
        %v1055 = vpack.c.b16 %v1047, %v1046
        %1064 = vmatprep.subr.bf16.mxu0 0
        %1065 = vmatpush1.bf16.msra.mxu0 %v1048
        %1066 = vmatprep.subr.bf16.mxu0 0
        %1067 = vmatpush1.bf16.msra.mxu0 %v1049
        %1068 = vmatprep.subr.bf16.mxu0 0
        %1069 = vmatpush1.bf16.msra.mxu0 %v1050
        %1070 = vmatprep.subr.bf16.mxu0 0
        %1071 = vmatpush1.bf16.msra.mxu0 %v1051
        %1072 = vmatprep.subr.bf16.mxu0 0
        %1073 = vmatpush1.bf16.msra.mxu0 %v1052
        %1074 = vmatprep.subr.bf16.mxu0 0
        %1075 = vmatpush1.bf16.msra.mxu0 %v1053
        %1076 = vmatprep.subr.bf16.mxu0 0
        %1077 = vmatpush1.bf16.msra.mxu0 %v1054
        %1078 = vmatprep.subr.bf16.mxu0 0
        %1079 = vmatpush1.bf16.msra.mxu0 %v1055
        %1080 = vmatprep.subr.bf16.mxu0 0
        %1081 = vmatpush1.bf16.msra.mxu0 0
        %1082 = vmatprep.subr.bf16.mxu0 0
        %1083 = vmatpush1.bf16.msra.mxu0 0
        %1084 = vmatprep.subr.bf16.mxu0 0
        %1085 = vmatpush1.bf16.msra.mxu0 0
        %1086 = vmatprep.subr.bf16.mxu0 0
        %1087 = vmatpush1.bf16.msra.mxu0 0
        %1088 = vmatprep.subr.bf16.mxu0 0
        %1089 = vmatpush1.bf16.msra.mxu0 0
        %1090 = vmatprep.subr.bf16.mxu0 0
        %1091 = vmatpush1.bf16.msra.mxu0 0
        %1092 = vmatprep.subr.bf16.mxu0 0
        %1093 = vmatpush1.bf16.msra.mxu0 0
        %1094 = vmatprep.subr.bf16.mxu0 0
        %1095 = vmatpush1.bf16.msra.mxu0 0
        %1096 = vmatprep.mubr.bf16.mxu0 0
        %1097 = vmatmul.mubr.bf16.gmra.mrb[0].mxu0 %v568
        %v1098 = vpop.f32.mrb[0].mxu0
        %v1099 = vadd.f32 %v1014, %v1098
        %v1100 = vpop.f32.mrb[0].mxu0
        %v1101 = vpop.f32.mrb[0].mxu0
        %v1102 = vadd.f32 %v1014, %v1101
        %v1103 = vpop.f32.mrb[0].mxu0
        %1104 = vmatprep.mubr.bf16.mxu0 0
        %1105 = vmatmul.mubr.bf16.gmra.mrb[0].mxu0 %v569
        %v1106 = vpop.f32.mrb[0].mxu0
        %v1107 = vadd.f32 %v1014, %v1106
        %v1108 = vpop.f32.mrb[0].mxu0
        %v1109 = vpop.f32.mrb[0].mxu0
        %v1110 = vadd.f32 %v1014, %v1109
        %v1111 = vpop.f32.mrb[0].mxu0
        %1112 = vdwg.mxu0
        %v1113 = vpack.c.bf16 %v1102, %v1099
        %v1114 = vpack.c.bf16 %v1110, %v1107
        %v1117 = vunpack.c.l.b16 %v1113
        %v1118 = vunpack.c.h.b16 %v1113
        %v1119 = vunpack.c.l.b16 %v1114
        %v1120 = vunpack.c.h.b16 %v1114
        %v1121 = vpack.c.b16 %v1117, %v1117
        %v1122 = vpack.c.b16 %v1118, %v1118
        %v1123 = vpack.c.b16 %v1119, %v1119
        %v1124 = vpack.c.b16 %v1120, %v1120
        %s1129 = scalar_lea.vmem %s414, 16 [#allocation4]
        %1130 = vst.msk [vmem:[%s1129] sm:$0xf] %vm706, %v1121
        %1131 = vst.msk [vmem:[%s1129 + $0x4] sm:$0xf] %vm706, %v1122
        %1132 = vst.msk [vmem:[%s1129 + $0x8] sm:$0xf] %vm706, %v1123
        %1133 = vst.msk [vmem:[%s1129 + $0xc] sm:$0xf] %vm706, %v1124
        %s1134 = scalar_lea.vmem %s5, 64
        %v1135 = vld [vmem:[%s1134] sm:$0xf]
        %v1136 = vld [vmem:[%s1134 + $0x4] sm:$0xf]
        %v1137 = vld [vmem:[%s1134 + $0x8] sm:$0xf]
        %v1138 = vld [vmem:[%s1134 + $0xc] sm:$0xf]
        %v1139 = vld [vmem:[%s1134 + $0x10] sm:$0xf]
        %v1140 = vld [vmem:[%s1134 + $0x14] sm:$0xf]
        %v1141 = vld [vmem:[%s1134 + $0x18] sm:$0xf]
        %v1142 = vld [vmem:[%s1134 + $0x1c] sm:$0xf]
        %v1143 = vld [vmem:[%s1134 + $0x20] sm:$0xf]
        %v1144 = vld [vmem:[%s1134 + $0x24] sm:$0xf]
        %v1145 = vld [vmem:[%s1134 + $0x28] sm:$0xf]
        %v1146 = vld [vmem:[%s1134 + $0x2c] sm:$0xf]
        %v1147 = vld [vmem:[%s1134 + $0x30] sm:$0xf]
        %v1148 = vld [vmem:[%s1134 + $0x34] sm:$0xf]
        %v1149 = vld [vmem:[%s1134 + $0x38] sm:$0xf]
        %v1150 = vld [vmem:[%s1134 + $0x3c] sm:$0xf]
        %s1151 = scalar_lea.vmem %s6, 1
        %v1152 = vld [vmem:[%s1151] sm:$0x1]
        %v1154 = vlaneseq
        %v1155 = vshrl.u32 %v1154, 7
        %v1156 = vsub.s32 0, %v1155
        %v1157 = vrot.slane %v1152, %v1156
        %v1175 = vunpack.c.l.b16 %v1135
        %v1176 = vunpack.c.l.b16 %v1136
        %v1177 = vunpack.c.l.b16 %v1137
        %v1178 = vunpack.c.l.b16 %v1138
        %v1179 = vunpack.c.l.b16 %v1139
        %v1180 = vunpack.c.l.b16 %v1140
        %v1181 = vunpack.c.l.b16 %v1141
        %v1182 = vunpack.c.l.b16 %v1142
        %v1183 = vunpack.c.l.b16 %v1143
        %v1184 = vunpack.c.l.b16 %v1144
        %v1185 = vunpack.c.l.b16 %v1145
        %v1186 = vunpack.c.l.b16 %v1146
        %v1187 = vunpack.c.l.b16 %v1147
        %v1188 = vunpack.c.l.b16 %v1148
        %v1189 = vunpack.c.l.b16 %v1149
        %v1190 = vunpack.c.l.b16 %v1150
        %v1191 = vpack.c.b16 %v1176, %v1175
        %v1192 = vpack.c.b16 %v1178, %v1177
        %v1193 = vpack.c.b16 %v1180, %v1179
        %v1194 = vpack.c.b16 %v1182, %v1181
        %v1195 = vpack.c.b16 %v1184, %v1183
        %v1196 = vpack.c.b16 %v1186, %v1185
        %v1197 = vpack.c.b16 %v1188, %v1187
        %v1198 = vpack.c.b16 %v1190, %v1189
        %1207 = vmatprep.subr.bf16.mxu0 0
        %1208 = vmatpush1.bf16.msra.mxu0 %v1191
        %1209 = vmatprep.subr.bf16.mxu0 0
        %1210 = vmatpush1.bf16.msra.mxu0 %v1192
        %1211 = vmatprep.subr.bf16.mxu0 0
        %1212 = vmatpush1.bf16.msra.mxu0 %v1193
        %1213 = vmatprep.subr.bf16.mxu0 0
        %1214 = vmatpush1.bf16.msra.mxu0 %v1194
        %1215 = vmatprep.subr.bf16.mxu0 0
        %1216 = vmatpush1.bf16.msra.mxu0 %v1195
        %1217 = vmatprep.subr.bf16.mxu0 0
        %1218 = vmatpush1.bf16.msra.mxu0 %v1196
        %1219 = vmatprep.subr.bf16.mxu0 0
        %1220 = vmatpush1.bf16.msra.mxu0 %v1197
        %1221 = vmatprep.subr.bf16.mxu0 0
        %1222 = vmatpush1.bf16.msra.mxu0 %v1198
        %1223 = vmatprep.subr.bf16.mxu0 0
        %1224 = vmatpush1.bf16.msra.mxu0 0
        %1225 = vmatprep.subr.bf16.mxu0 0
        %1226 = vmatpush1.bf16.msra.mxu0 0
        %1227 = vmatprep.subr.bf16.mxu0 0
        %1228 = vmatpush1.bf16.msra.mxu0 0
        %1229 = vmatprep.subr.bf16.mxu0 0
        %1230 = vmatpush1.bf16.msra.mxu0 0
        %1231 = vmatprep.subr.bf16.mxu0 0
        %1232 = vmatpush1.bf16.msra.mxu0 0
        %1233 = vmatprep.subr.bf16.mxu0 0
        %1234 = vmatpush1.bf16.msra.mxu0 0
        %1235 = vmatprep.subr.bf16.mxu0 0
        %1236 = vmatpush1.bf16.msra.mxu0 0
        %1237 = vmatprep.subr.bf16.mxu0 0
        %1238 = vmatpush1.bf16.msra.mxu0 0
        %1239 = vmatprep.mubr.bf16.mxu0 0
        %1240 = vmatmul.mubr.bf16.gmra.mrb[0].mxu0 %v568
        %v1241 = vpop.f32.mrb[0].mxu0
        %v1242 = vadd.f32 %v1157, %v1241
        %v1243 = vpop.f32.mrb[0].mxu0
        %v1244 = vpop.f32.mrb[0].mxu0
        %v1245 = vadd.f32 %v1157, %v1244
        %v1246 = vpop.f32.mrb[0].mxu0
        %1247 = vmatprep.mubr.bf16.mxu0 0
        %1248 = vmatmul.mubr.bf16.gmra.mrb[0].mxu0 %v569
        %v1249 = vpop.f32.mrb[0].mxu0
        %v1250 = vadd.f32 %v1157, %v1249
        %v1251 = vpop.f32.mrb[0].mxu0
        %v1252 = vpop.f32.mrb[0].mxu0
        %v1253 = vadd.f32 %v1157, %v1252
        %v1254 = vpop.f32.mrb[0].mxu0
        %1255 = vdwg.mxu0
        %v1256 = vpack.c.bf16 %v1245, %v1242
        %v1257 = vpack.c.bf16 %v1253, %v1250
        %v1260 = vunpack.c.l.b16 %v1256
        %v1261 = vunpack.c.h.b16 %v1256
        %v1262 = vunpack.c.l.b16 %v1257
        %v1263 = vunpack.c.h.b16 %v1257
        %v1264 = vpack.c.b16 %v1260, %v1260
        %v1265 = vpack.c.b16 %v1261, %v1261
        %v1266 = vpack.c.b16 %v1262, %v1262
        %v1267 = vpack.c.b16 %v1263, %v1263
        %s1272 = scalar_lea.vmem %s420, 16 [#allocation5]
        %1273 = vst.msk [vmem:[%s1272] sm:$0xf] %vm706, %v1264
        %1274 = vst.msk [vmem:[%s1272 + $0x4] sm:$0xf] %vm706, %v1265
        %1275 = vst.msk [vmem:[%s1272 + $0x8] sm:$0xf] %vm706, %v1266
        %1276 = vst.msk [vmem:[%s1272 + $0xc] sm:$0xf] %vm706, %v1267
        %s1277 = scalar_lea.vmem %s7, 64
        %v1278 = vld [vmem:[%s1277] sm:$0xf]
        %v1279 = vld [vmem:[%s1277 + $0x4] sm:$0xf]
        %v1280 = vld [vmem:[%s1277 + $0x8] sm:$0xf]
        %v1281 = vld [vmem:[%s1277 + $0xc] sm:$0xf]
        %v1282 = vld [vmem:[%s1277 + $0x10] sm:$0xf]
        %v1283 = vld [vmem:[%s1277 + $0x14] sm:$0xf]
        %v1284 = vld [vmem:[%s1277 + $0x18] sm:$0xf]
        %v1285 = vld [vmem:[%s1277 + $0x1c] sm:$0xf]
        %v1286 = vld [vmem:[%s1277 + $0x20] sm:$0xf]
        %v1287 = vld [vmem:[%s1277 + $0x24] sm:$0xf]
        %v1288 = vld [vmem:[%s1277 + $0x28] sm:$0xf]
        %v1289 = vld [vmem:[%s1277 + $0x2c] sm:$0xf]
        %v1290 = vld [vmem:[%s1277 + $0x30] sm:$0xf]
        %v1291 = vld [vmem:[%s1277 + $0x34] sm:$0xf]
        %v1292 = vld [vmem:[%s1277 + $0x38] sm:$0xf]
        %v1293 = vld [vmem:[%s1277 + $0x3c] sm:$0xf]
        %s1294 = scalar_lea.vmem %s8, 1
        %v1295 = vld [vmem:[%s1294] sm:$0x1]
        %v1297 = vlaneseq
        %v1298 = vshrl.u32 %v1297, 7
        %v1299 = vsub.s32 0, %v1298
        %v1300 = vrot.slane %v1295, %v1299
        %v1318 = vunpack.c.l.b16 %v1278
        %v1319 = vunpack.c.l.b16 %v1279
        %v1320 = vunpack.c.l.b16 %v1280
        %v1321 = vunpack.c.l.b16 %v1281
        %v1322 = vunpack.c.l.b16 %v1282
        %v1323 = vunpack.c.l.b16 %v1283
        %v1324 = vunpack.c.l.b16 %v1284
        %v1325 = vunpack.c.l.b16 %v1285
        %v1326 = vunpack.c.l.b16 %v1286
        %v1327 = vunpack.c.l.b16 %v1287
        %v1328 = vunpack.c.l.b16 %v1288
        %v1329 = vunpack.c.l.b16 %v1289
        %v1330 = vunpack.c.l.b16 %v1290
        %v1331 = vunpack.c.l.b16 %v1291
        %v1332 = vunpack.c.l.b16 %v1292
        %v1333 = vunpack.c.l.b16 %v1293
        %v1334 = vpack.c.b16 %v1319, %v1318
        %v1335 = vpack.c.b16 %v1321, %v1320
        %v1336 = vpack.c.b16 %v1323, %v1322
        %v1337 = vpack.c.b16 %v1325, %v1324
        %v1338 = vpack.c.b16 %v1327, %v1326
        %v1339 = vpack.c.b16 %v1329, %v1328
        %v1340 = vpack.c.b16 %v1331, %v1330
        %v1341 = vpack.c.b16 %v1333, %v1332
        %1350 = vmatprep.subr.bf16.mxu0 0
        %1351 = vmatpush1.bf16.msra.mxu0 %v1334
        %1352 = vmatprep.subr.bf16.mxu0 0
        %1353 = vmatpush1.bf16.msra.mxu0 %v1335
        %1354 = vmatprep.subr.bf16.mxu0 0
        %1355 = vmatpush1.bf16.msra.mxu0 %v1336
        %1356 = vmatprep.subr.bf16.mxu0 0
        %1357 = vmatpush1.bf16.msra.mxu0 %v1337
        %1358 = vmatprep.subr.bf16.mxu0 0
        %1359 = vmatpush1.bf16.msra.mxu0 %v1338
        %1360 = vmatprep.subr.bf16.mxu0 0
        %1361 = vmatpush1.bf16.msra.mxu0 %v1339
        %1362 = vmatprep.subr.bf16.mxu0 0
        %1363 = vmatpush1.bf16.msra.mxu0 %v1340
        %1364 = vmatprep.subr.bf16.mxu0 0
        %1365 = vmatpush1.bf16.msra.mxu0 %v1341
        %1366 = vmatprep.subr.bf16.mxu0 0
        %1367 = vmatpush1.bf16.msra.mxu0 0
        %1368 = vmatprep.subr.bf16.mxu0 0
        %1369 = vmatpush1.bf16.msra.mxu0 0
        %1370 = vmatprep.subr.bf16.mxu0 0
        %1371 = vmatpush1.bf16.msra.mxu0 0
        %1372 = vmatprep.subr.bf16.mxu0 0
        %1373 = vmatpush1.bf16.msra.mxu0 0
        %1374 = vmatprep.subr.bf16.mxu0 0
        %1375 = vmatpush1.bf16.msra.mxu0 0
        %1376 = vmatprep.subr.bf16.mxu0 0
        %1377 = vmatpush1.bf16.msra.mxu0 0
        %1378 = vmatprep.subr.bf16.mxu0 0
        %1379 = vmatpush1.bf16.msra.mxu0 0
        %1380 = vmatprep.subr.bf16.mxu0 0
        %1381 = vmatpush1.bf16.msra.mxu0 0
        %1382 = vmatprep.mubr.bf16.mxu0 0
        %1383 = vmatmul.mubr.bf16.gmra.mrb[0].mxu0 %v568
        %v1384 = vpop.f32.mrb[0].mxu0
        %v1385 = vadd.f32 %v1300, %v1384
        %v1386 = vpop.f32.mrb[0].mxu0
        %v1387 = vpop.f32.mrb[0].mxu0
        %v1388 = vadd.f32 %v1300, %v1387
        %v1389 = vpop.f32.mrb[0].mxu0
        %1390 = vmatprep.mubr.bf16.mxu0 0
        %1391 = vmatmul.mubr.bf16.gmra.mrb[0].mxu0 %v569
        %v1392 = vpop.f32.mrb[0].mxu0
        %v1393 = vadd.f32 %v1300, %v1392
        %v1394 = vpop.f32.mrb[0].mxu0
        %v1395 = vpop.f32.mrb[0].mxu0
        %v1396 = vadd.f32 %v1300, %v1395
        %v1397 = vpop.f32.mrb[0].mxu0
        %1398 = vdwg.mxu0
        %v1399 = vpack.c.bf16 %v1388, %v1385
        %v1400 = vpack.c.bf16 %v1396, %v1393
        %v1403 = vunpack.c.l.b16 %v1399
        %v1404 = vunpack.c.h.b16 %v1399
        %v1405 = vunpack.c.l.b16 %v1400
        %v1406 = vunpack.c.h.b16 %v1400
        %v1407 = vpack.c.b16 %v1403, %v1403
        %v1408 = vpack.c.b16 %v1404, %v1404
        %v1409 = vpack.c.b16 %v1405, %v1405
        %v1410 = vpack.c.b16 %v1406, %v1406
        %s1415 = scalar_lea.vmem %s426, 16 [#allocation6]
        %1416 = vst.msk [vmem:[%s1415] sm:$0xf] %vm706, %v1407
        %1417 = vst.msk [vmem:[%s1415 + $0x4] sm:$0xf] %vm706, %v1408
        %1418 = vst.msk [vmem:[%s1415 + $0x8] sm:$0xf] %vm706, %v1409
        %1419 = vst.msk [vmem:[%s1415 + $0xc] sm:$0xf] %vm706, %v1410
        %s1420 = scalar_lea.vmem %s3, 128
        %v1421 = vld [vmem:[%s1420] sm:$0xf]
        %v1422 = vld [vmem:[%s1420 + $0x4] sm:$0xf]
        %v1423 = vld [vmem:[%s1420 + $0x8] sm:$0xf]
        %v1424 = vld [vmem:[%s1420 + $0xc] sm:$0xf]
        %v1425 = vld [vmem:[%s1420 + $0x10] sm:$0xf]
        %v1426 = vld [vmem:[%s1420 + $0x14] sm:$0xf]
        %v1427 = vld [vmem:[%s1420 + $0x18] sm:$0xf]
        %v1428 = vld [vmem:[%s1420 + $0x1c] sm:$0xf]
        %v1429 = vld [vmem:[%s1420 + $0x20] sm:$0xf]
        %v1430 = vld [vmem:[%s1420 + $0x24] sm:$0xf]
        %v1431 = vld [vmem:[%s1420 + $0x28] sm:$0xf]
        %v1432 = vld [vmem:[%s1420 + $0x2c] sm:$0xf]
        %v1433 = vld [vmem:[%s1420 + $0x30] sm:$0xf]
        %v1434 = vld [vmem:[%s1420 + $0x34] sm:$0xf]
        %v1435 = vld [vmem:[%s1420 + $0x38] sm:$0xf]
        %v1436 = vld [vmem:[%s1420 + $0x3c] sm:$0xf]
        %s1437 = scalar_lea.vmem %s4, 2
        %v1438 = vld [vmem:[%s1437] sm:$0x1]
        %v1440 = vlaneseq
        %v1441 = vshrl.u32 %v1440, 7
        %v1442 = vsub.s32 0, %v1441
        %v1443 = vrot.slane %v1438, %v1442
        %v1461 = vunpack.c.l.b16 %v1421
        %v1462 = vunpack.c.l.b16 %v1422
        %v1463 = vunpack.c.l.b16 %v1423
        %v1464 = vunpack.c.l.b16 %v1424
        %v1465 = vunpack.c.l.b16 %v1425
        %v1466 = vunpack.c.l.b16 %v1426
        %v1467 = vunpack.c.l.b16 %v1427
        %v1468 = vunpack.c.l.b16 %v1428
        %v1469 = vunpack.c.l.b16 %v1429
        %v1470 = vunpack.c.l.b16 %v1430
        %v1471 = vunpack.c.l.b16 %v1431
        %v1472 = vunpack.c.l.b16 %v1432
        %v1473 = vunpack.c.l.b16 %v1433
        %v1474 = vunpack.c.l.b16 %v1434
        %v1475 = vunpack.c.l.b16 %v1435
        %v1476 = vunpack.c.l.b16 %v1436
        %v1477 = vpack.c.b16 %v1462, %v1461
        %v1478 = vpack.c.b16 %v1464, %v1463
        %v1479 = vpack.c.b16 %v1466, %v1465
        %v1480 = vpack.c.b16 %v1468, %v1467
        %v1481 = vpack.c.b16 %v1470, %v1469
        %v1482 = vpack.c.b16 %v1472, %v1471
        %v1483 = vpack.c.b16 %v1474, %v1473
        %v1484 = vpack.c.b16 %v1476, %v1475
        %1493 = vmatprep.subr.bf16.mxu0 0
        %1494 = vmatpush1.bf16.msra.mxu0 %v1477
        %1495 = vmatprep.subr.bf16.mxu0 0
        %1496 = vmatpush1.bf16.msra.mxu0 %v1478
        %1497 = vmatprep.subr.bf16.mxu0 0
        %1498 = vmatpush1.bf16.msra.mxu0 %v1479
        %1499 = vmatprep.subr.bf16.mxu0 0
        %1500 = vmatpush1.bf16.msra.mxu0 %v1480
        %1501 = vmatprep.subr.bf16.mxu0 0
        %1502 = vmatpush1.bf16.msra.mxu0 %v1481
        %1503 = vmatprep.subr.bf16.mxu0 0
        %1504 = vmatpush1.bf16.msra.mxu0 %v1482
        %1505 = vmatprep.subr.bf16.mxu0 0
        %1506 = vmatpush1.bf16.msra.mxu0 %v1483
        %1507 = vmatprep.subr.bf16.mxu0 0
        %1508 = vmatpush1.bf16.msra.mxu0 %v1484
        %1509 = vmatprep.subr.bf16.mxu0 0
        %1510 = vmatpush1.bf16.msra.mxu0 0
        %1511 = vmatprep.subr.bf16.mxu0 0
        %1512 = vmatpush1.bf16.msra.mxu0 0
        %1513 = vmatprep.subr.bf16.mxu0 0
        %1514 = vmatpush1.bf16.msra.mxu0 0
        %1515 = vmatprep.subr.bf16.mxu0 0
        %1516 = vmatpush1.bf16.msra.mxu0 0
        %1517 = vmatprep.subr.bf16.mxu0 0
        %1518 = vmatpush1.bf16.msra.mxu0 0
        %1519 = vmatprep.subr.bf16.mxu0 0
        %1520 = vmatpush1.bf16.msra.mxu0 0
        %1521 = vmatprep.subr.bf16.mxu0 0
        %1522 = vmatpush1.bf16.msra.mxu0 0
        %1523 = vmatprep.subr.bf16.mxu0 0
        %1524 = vmatpush1.bf16.msra.mxu0 0
        %1525 = vmatprep.mubr.bf16.mxu0 0
        %1526 = vmatmul.mubr.bf16.gmra.mrb[0].mxu0 %v568
        %v1527 = vpop.f32.mrb[0].mxu0
        %v1528 = vadd.f32 %v1443, %v1527
        %v1529 = vpop.f32.mrb[0].mxu0
        %v1530 = vpop.f32.mrb[0].mxu0
        %v1531 = vadd.f32 %v1443, %v1530
        %v1532 = vpop.f32.mrb[0].mxu0
        %1533 = vmatprep.mubr.bf16.mxu0 0
        %1534 = vmatmul.mubr.bf16.gmra.mrb[0].mxu0 %v569
        %v1535 = vpop.f32.mrb[0].mxu0
        %v1536 = vadd.f32 %v1443, %v1535
        %v1537 = vpop.f32.mrb[0].mxu0
        %v1538 = vpop.f32.mrb[0].mxu0
        %v1539 = vadd.f32 %v1443, %v1538
        %v1540 = vpop.f32.mrb[0].mxu0
        %1541 = vdwg.mxu0
        %v1542 = vpack.c.bf16 %v1531, %v1528
        %v1543 = vpack.c.bf16 %v1539, %v1536
        %v1546 = vunpack.c.l.b16 %v1542
        %v1547 = vunpack.c.h.b16 %v1542
        %v1548 = vunpack.c.l.b16 %v1543
        %v1549 = vunpack.c.h.b16 %v1543
        %v1550 = vpack.c.b16 %v1546, %v1546
        %v1551 = vpack.c.b16 %v1547, %v1547
        %v1552 = vpack.c.b16 %v1548, %v1548
        %v1553 = vpack.c.b16 %v1549, %v1549
        %s1558 = scalar_lea.vmem %s414, 32 [#allocation4]
        %1559 = vst.msk [vmem:[%s1558] sm:$0xf] %vm706, %v1550
        %1560 = vst.msk [vmem:[%s1558 + $0x4] sm:$0xf] %vm706, %v1551
        %1561 = vst.msk [vmem:[%s1558 + $0x8] sm:$0xf] %vm706, %v1552
        %1562 = vst.msk [vmem:[%s1558 + $0xc] sm:$0xf] %vm706, %v1553
        %s1563 = scalar_lea.vmem %s5, 128
        %v1564 = vld [vmem:[%s1563] sm:$0xf]
        %v1565 = vld [vmem:[%s1563 + $0x4] sm:$0xf]
        %v1566 = vld [vmem:[%s1563 + $0x8] sm:$0xf]
        %v1567 = vld [vmem:[%s1563 + $0xc] sm:$0xf]
        %v1568 = vld [vmem:[%s1563 + $0x10] sm:$0xf]
        %v1569 = vld [vmem:[%s1563 + $0x14] sm:$0xf]
        %v1570 = vld [vmem:[%s1563 + $0x18] sm:$0xf]
        %v1571 = vld [vmem:[%s1563 + $0x1c] sm:$0xf]
        %v1572 = vld [vmem:[%s1563 + $0x20] sm:$0xf]
        %v1573 = vld [vmem:[%s1563 + $0x24] sm:$0xf]
        %v1574 = vld [vmem:[%s1563 + $0x28] sm:$0xf]
        %v1575 = vld [vmem:[%s1563 + $0x2c] sm:$0xf]
        %v1576 = vld [vmem:[%s1563 + $0x30] sm:$0xf]
        %v1577 = vld [vmem:[%s1563 + $0x34] sm:$0xf]
        %v1578 = vld [vmem:[%s1563 + $0x38] sm:$0xf]
        %v1579 = vld [vmem:[%s1563 + $0x3c] sm:$0xf]
        %s1580 = scalar_lea.vmem %s6, 2
        %v1581 = vld [vmem:[%s1580] sm:$0x1]
        %v1583 = vlaneseq
        %v1584 = vshrl.u32 %v1583, 7
        %v1585 = vsub.s32 0, %v1584
        %v1586 = vrot.slane %v1581, %v1585
        %v1604 = vunpack.c.l.b16 %v1564
        %v1605 = vunpack.c.l.b16 %v1565
        %v1606 = vunpack.c.l.b16 %v1566
        %v1607 = vunpack.c.l.b16 %v1567
        %v1608 = vunpack.c.l.b16 %v1568
        %v1609 = vunpack.c.l.b16 %v1569
        %v1610 = vunpack.c.l.b16 %v1570
        %v1611 = vunpack.c.l.b16 %v1571
        %v1612 = vunpack.c.l.b16 %v1572
        %v1613 = vunpack.c.l.b16 %v1573
        %v1614 = vunpack.c.l.b16 %v1574
        %v1615 = vunpack.c.l.b16 %v1575
        %v1616 = vunpack.c.l.b16 %v1576
        %v1617 = vunpack.c.l.b16 %v1577
        %v1618 = vunpack.c.l.b16 %v1578
        %v1619 = vunpack.c.l.b16 %v1579
        %v1620 = vpack.c.b16 %v1605, %v1604
        %v1621 = vpack.c.b16 %v1607, %v1606
        %v1622 = vpack.c.b16 %v1609, %v1608
        %v1623 = vpack.c.b16 %v1611, %v1610
        %v1624 = vpack.c.b16 %v1613, %v1612
        %v1625 = vpack.c.b16 %v1615, %v1614
        %v1626 = vpack.c.b16 %v1617, %v1616
        %v1627 = vpack.c.b16 %v1619, %v1618
        %1636 = vmatprep.subr.bf16.mxu0 0
        %1637 = vmatpush1.bf16.msra.mxu0 %v1620
        %1638 = vmatprep.subr.bf16.mxu0 0
        %1639 = vmatpush1.bf16.msra.mxu0 %v1621
        %1640 = vmatprep.subr.bf16.mxu0 0
        %1641 = vmatpush1.bf16.msra.mxu0 %v1622
        %1642 = vmatprep.subr.bf16.mxu0 0
        %1643 = vmatpush1.bf16.msra.mxu0 %v1623
        %1644 = vmatprep.subr.bf16.mxu0 0
        %1645 = vmatpush1.bf16.msra.mxu0 %v1624
        %1646 = vmatprep.subr.bf16.mxu0 0
        %1647 = vmatpush1.bf16.msra.mxu0 %v1625
        %1648 = vmatprep.subr.bf16.mxu0 0
        %1649 = vmatpush1.bf16.msra.mxu0 %v1626
        %1650 = vmatprep.subr.bf16.mxu0 0
        %1651 = vmatpush1.bf16.msra.mxu0 %v1627
        %1652 = vmatprep.subr.bf16.mxu0 0
        %1653 = vmatpush1.bf16.msra.mxu0 0
        %1654 = vmatprep.subr.bf16.mxu0 0
        %1655 = vmatpush1.bf16.msra.mxu0 0
        %1656 = vmatprep.subr.bf16.mxu0 0
        %1657 = vmatpush1.bf16.msra.mxu0 0
        %1658 = vmatprep.subr.bf16.mxu0 0
        %1659 = vmatpush1.bf16.msra.mxu0 0
        %1660 = vmatprep.subr.bf16.mxu0 0
        %1661 = vmatpush1.bf16.msra.mxu0 0
        %1662 = vmatprep.subr.bf16.mxu0 0
        %1663 = vmatpush1.bf16.msra.mxu0 0
        %1664 = vmatprep.subr.bf16.mxu0 0
        %1665 = vmatpush1.bf16.msra.mxu0 0
        %1666 = vmatprep.subr.bf16.mxu0 0
        %1667 = vmatpush1.bf16.msra.mxu0 0
        %1668 = vmatprep.mubr.bf16.mxu0 0
        %1669 = vmatmul.mubr.bf16.gmra.mrb[0].mxu0 %v568
        %v1670 = vpop.f32.mrb[0].mxu0
        %v1671 = vadd.f32 %v1586, %v1670
        %v1672 = vpop.f32.mrb[0].mxu0
        %v1673 = vpop.f32.mrb[0].mxu0
        %v1674 = vadd.f32 %v1586, %v1673
        %v1675 = vpop.f32.mrb[0].mxu0
        %1676 = vmatprep.mubr.bf16.mxu0 0
        %1677 = vmatmul.mubr.bf16.gmra.mrb[0].mxu0 %v569
        %v1678 = vpop.f32.mrb[0].mxu0
        %v1679 = vadd.f32 %v1586, %v1678
        %v1680 = vpop.f32.mrb[0].mxu0
        %v1681 = vpop.f32.mrb[0].mxu0
        %v1682 = vadd.f32 %v1586, %v1681
        %v1683 = vpop.f32.mrb[0].mxu0
        %1684 = vdwg.mxu0
        %v1685 = vpack.c.bf16 %v1674, %v1671
        %v1686 = vpack.c.bf16 %v1682, %v1679
        %v1689 = vunpack.c.l.b16 %v1685
        %v1690 = vunpack.c.h.b16 %v1685
        %v1691 = vunpack.c.l.b16 %v1686
        %v1692 = vunpack.c.h.b16 %v1686
        %v1693 = vpack.c.b16 %v1689, %v1689
        %v1694 = vpack.c.b16 %v1690, %v1690
        %v1695 = vpack.c.b16 %v1691, %v1691
        %v1696 = vpack.c.b16 %v1692, %v1692
        %s1701 = scalar_lea.vmem %s420, 32 [#allocation5]
        %1702 = vst.msk [vmem:[%s1701] sm:$0xf] %vm706, %v1693
        %1703 = vst.msk [vmem:[%s1701 + $0x4] sm:$0xf] %vm706, %v1694
        %1704 = vst.msk [vmem:[%s1701 + $0x8] sm:$0xf] %vm706, %v1695
        %1705 = vst.msk [vmem:[%s1701 + $0xc] sm:$0xf] %vm706, %v1696
        %s1706 = scalar_lea.vmem %s7, 128
        %v1707 = vld [vmem:[%s1706] sm:$0xf]
        %v1708 = vld [vmem:[%s1706 + $0x4] sm:$0xf]
        %v1709 = vld [vmem:[%s1706 + $0x8] sm:$0xf]
        %v1710 = vld [vmem:[%s1706 + $0xc] sm:$0xf]
        %v1711 = vld [vmem:[%s1706 + $0x10] sm:$0xf]
        %v1712 = vld [vmem:[%s1706 + $0x14] sm:$0xf]
        %v1713 = vld [vmem:[%s1706 + $0x18] sm:$0xf]
        %v1714 = vld [vmem:[%s1706 + $0x1c] sm:$0xf]
        %v1715 = vld [vmem:[%s1706 + $0x20] sm:$0xf]
        %v1716 = vld [vmem:[%s1706 + $0x24] sm:$0xf]
        %v1717 = vld [vmem:[%s1706 + $0x28] sm:$0xf]
        %v1718 = vld [vmem:[%s1706 + $0x2c] sm:$0xf]
        %v1719 = vld [vmem:[%s1706 + $0x30] sm:$0xf]
        %v1720 = vld [vmem:[%s1706 + $0x34] sm:$0xf]
        %v1721 = vld [vmem:[%s1706 + $0x38] sm:$0xf]
        %v1722 = vld [vmem:[%s1706 + $0x3c] sm:$0xf]
        %s1723 = scalar_lea.vmem %s8, 2
        %v1724 = vld [vmem:[%s1723] sm:$0x1]
        %v1726 = vlaneseq
        %v1727 = vshrl.u32 %v1726, 7
        %v1728 = vsub.s32 0, %v1727
        %v1729 = vrot.slane %v1724, %v1728
        %v1747 = vunpack.c.l.b16 %v1707
        %v1748 = vunpack.c.l.b16 %v1708
        %v1749 = vunpack.c.l.b16 %v1709
        %v1750 = vunpack.c.l.b16 %v1710
        %v1751 = vunpack.c.l.b16 %v1711
        %v1752 = vunpack.c.l.b16 %v1712
        %v1753 = vunpack.c.l.b16 %v1713
        %v1754 = vunpack.c.l.b16 %v1714
        %v1755 = vunpack.c.l.b16 %v1715
        %v1756 = vunpack.c.l.b16 %v1716
        %v1757 = vunpack.c.l.b16 %v1717
        %v1758 = vunpack.c.l.b16 %v1718
        %v1759 = vunpack.c.l.b16 %v1719
        %v1760 = vunpack.c.l.b16 %v1720
        %v1761 = vunpack.c.l.b16 %v1721
        %v1762 = vunpack.c.l.b16 %v1722
        %v1763 = vpack.c.b16 %v1748, %v1747
        %v1764 = vpack.c.b16 %v1750, %v1749
        %v1765 = vpack.c.b16 %v1752, %v1751
        %v1766 = vpack.c.b16 %v1754, %v1753
        %v1767 = vpack.c.b16 %v1756, %v1755
        %v1768 = vpack.c.b16 %v1758, %v1757
        %v1769 = vpack.c.b16 %v1760, %v1759
        %v1770 = vpack.c.b16 %v1762, %v1761
        %1779 = vmatprep.subr.bf16.mxu0 0
        %1780 = vmatpush1.bf16.msra.mxu0 %v1763
        %1781 = vmatprep.subr.bf16.mxu0 0
        %1782 = vmatpush1.bf16.msra.mxu0 %v1764
        %1783 = vmatprep.subr.bf16.mxu0 0
        %1784 = vmatpush1.bf16.msra.mxu0 %v1765
        %1785 = vmatprep.subr.bf16.mxu0 0
        %1786 = vmatpush1.bf16.msra.mxu0 %v1766
        %1787 = vmatprep.subr.bf16.mxu0 0
        %1788 = vmatpush1.bf16.msra.mxu0 %v1767
        %1789 = vmatprep.subr.bf16.mxu0 0
        %1790 = vmatpush1.bf16.msra.mxu0 %v1768
        %1791 = vmatprep.subr.bf16.mxu0 0
        %1792 = vmatpush1.bf16.msra.mxu0 %v1769
        %1793 = vmatprep.subr.bf16.mxu0 0
        %1794 = vmatpush1.bf16.msra.mxu0 %v1770
        %1795 = vmatprep.subr.bf16.mxu0 0
        %1796 = vmatpush1.bf16.msra.mxu0 0
        %1797 = vmatprep.subr.bf16.mxu0 0
        %1798 = vmatpush1.bf16.msra.mxu0 0
        %1799 = vmatprep.subr.bf16.mxu0 0
        %1800 = vmatpush1.bf16.msra.mxu0 0
        %1801 = vmatprep.subr.bf16.mxu0 0
        %1802 = vmatpush1.bf16.msra.mxu0 0
        %1803 = vmatprep.subr.bf16.mxu0 0
        %1804 = vmatpush1.bf16.msra.mxu0 0
        %1805 = vmatprep.subr.bf16.mxu0 0
        %1806 = vmatpush1.bf16.msra.mxu0 0
        %1807 = vmatprep.subr.bf16.mxu0 0
        %1808 = vmatpush1.bf16.msra.mxu0 0
        %1809 = vmatprep.subr.bf16.mxu0 0
        %1810 = vmatpush1.bf16.msra.mxu0 0
        %1811 = vmatprep.mubr.bf16.mxu0 0
        %1812 = vmatmul.mubr.bf16.gmra.mrb[0].mxu0 %v568
        %v1813 = vpop.f32.mrb[0].mxu0
        %v1814 = vadd.f32 %v1729, %v1813
        %v1815 = vpop.f32.mrb[0].mxu0
        %v1816 = vpop.f32.mrb[0].mxu0
        %v1817 = vadd.f32 %v1729, %v1816
        %v1818 = vpop.f32.mrb[0].mxu0
        %1819 = vmatprep.mubr.bf16.mxu0 0
        %1820 = vmatmul.mubr.bf16.gmra.mrb[0].mxu0 %v569
        %v1821 = vpop.f32.mrb[0].mxu0
        %v1822 = vadd.f32 %v1729, %v1821
        %v1823 = vpop.f32.mrb[0].mxu0
        %v1824 = vpop.f32.mrb[0].mxu0
        %v1825 = vadd.f32 %v1729, %v1824
        %v1826 = vpop.f32.mrb[0].mxu0
        %1827 = vdwg.mxu0
        %v1828 = vpack.c.bf16 %v1817, %v1814
        %v1829 = vpack.c.bf16 %v1825, %v1822
        %v1832 = vunpack.c.l.b16 %v1828
        %v1833 = vunpack.c.h.b16 %v1828
        %v1834 = vunpack.c.l.b16 %v1829
        %v1835 = vunpack.c.h.b16 %v1829
        %v1836 = vpack.c.b16 %v1832, %v1832
        %v1837 = vpack.c.b16 %v1833, %v1833
        %v1838 = vpack.c.b16 %v1834, %v1834
        %v1839 = vpack.c.b16 %v1835, %v1835
        %s1844 = scalar_lea.vmem %s426, 32 [#allocation6]
        %1845 = vst.msk [vmem:[%s1844] sm:$0xf] %vm706, %v1836
        %1846 = vst.msk [vmem:[%s1844 + $0x4] sm:$0xf] %vm706, %v1837
        %1847 = vst.msk [vmem:[%s1844 + $0x8] sm:$0xf] %vm706, %v1838
        %1848 = vst.msk [vmem:[%s1844 + $0xc] sm:$0xf] %vm706, %v1839
        %s1849 = scalar_lea.vmem %s3, 192
        %v1850 = vld [vmem:[%s1849] sm:$0xf]
        %v1851 = vld [vmem:[%s1849 + $0x4] sm:$0xf]
        %v1852 = vld [vmem:[%s1849 + $0x8] sm:$0xf]
        %v1853 = vld [vmem:[%s1849 + $0xc] sm:$0xf]
        %v1854 = vld [vmem:[%s1849 + $0x10] sm:$0xf]
        %v1855 = vld [vmem:[%s1849 + $0x14] sm:$0xf]
        %v1856 = vld [vmem:[%s1849 + $0x18] sm:$0xf]
        %v1857 = vld [vmem:[%s1849 + $0x1c] sm:$0xf]
        %v1858 = vld [vmem:[%s1849 + $0x20] sm:$0xf]
        %v1859 = vld [vmem:[%s1849 + $0x24] sm:$0xf]
        %v1860 = vld [vmem:[%s1849 + $0x28] sm:$0xf]
        %v1861 = vld [vmem:[%s1849 + $0x2c] sm:$0xf]
        %v1862 = vld [vmem:[%s1849 + $0x30] sm:$0xf]
        %v1863 = vld [vmem:[%s1849 + $0x34] sm:$0xf]
        %v1864 = vld [vmem:[%s1849 + $0x38] sm:$0xf]
        %v1865 = vld [vmem:[%s1849 + $0x3c] sm:$0xf]
        %s1866 = scalar_lea.vmem %s4, 3
        %v1867 = vld [vmem:[%s1866] sm:$0x1]
        %v1869 = vlaneseq
        %v1870 = vshrl.u32 %v1869, 7
        %v1871 = vsub.s32 0, %v1870
        %v1872 = vrot.slane %v1867, %v1871
        %v1890 = vunpack.c.l.b16 %v1850
        %v1891 = vunpack.c.l.b16 %v1851
        %v1892 = vunpack.c.l.b16 %v1852
        %v1893 = vunpack.c.l.b16 %v1853
        %v1894 = vunpack.c.l.b16 %v1854
        %v1895 = vunpack.c.l.b16 %v1855
        %v1896 = vunpack.c.l.b16 %v1856
        %v1897 = vunpack.c.l.b16 %v1857
        %v1898 = vunpack.c.l.b16 %v1858
        %v1899 = vunpack.c.l.b16 %v1859
        %v1900 = vunpack.c.l.b16 %v1860
        %v1901 = vunpack.c.l.b16 %v1861
        %v1902 = vunpack.c.l.b16 %v1862
        %v1903 = vunpack.c.l.b16 %v1863
        %v1904 = vunpack.c.l.b16 %v1864
        %v1905 = vunpack.c.l.b16 %v1865
        %v1906 = vpack.c.b16 %v1891, %v1890
        %v1907 = vpack.c.b16 %v1893, %v1892
        %v1908 = vpack.c.b16 %v1895, %v1894
        %v1909 = vpack.c.b16 %v1897, %v1896
        %v1910 = vpack.c.b16 %v1899, %v1898
        %v1911 = vpack.c.b16 %v1901, %v1900
        %v1912 = vpack.c.b16 %v1903, %v1902
        %v1913 = vpack.c.b16 %v1905, %v1904
        %1922 = vmatprep.subr.bf16.mxu0 0
        %1923 = vmatpush1.bf16.msra.mxu0 %v1906
        %1924 = vmatprep.subr.bf16.mxu0 0
        %1925 = vmatpush1.bf16.msra.mxu0 %v1907
        %1926 = vmatprep.subr.bf16.mxu0 0
        %1927 = vmatpush1.bf16.msra.mxu0 %v1908
        %1928 = vmatprep.subr.bf16.mxu0 0
        %1929 = vmatpush1.bf16.msra.mxu0 %v1909
        %1930 = vmatprep.subr.bf16.mxu0 0
        %1931 = vmatpush1.bf16.msra.mxu0 %v1910
        %1932 = vmatprep.subr.bf16.mxu0 0
        %1933 = vmatpush1.bf16.msra.mxu0 %v1911
        %1934 = vmatprep.subr.bf16.mxu0 0
        %1935 = vmatpush1.bf16.msra.mxu0 %v1912
        %1936 = vmatprep.subr.bf16.mxu0 0
        %1937 = vmatpush1.bf16.msra.mxu0 %v1913
        %1938 = vmatprep.subr.bf16.mxu0 0
        %1939 = vmatpush1.bf16.msra.mxu0 0
        %1940 = vmatprep.subr.bf16.mxu0 0
        %1941 = vmatpush1.bf16.msra.mxu0 0
        %1942 = vmatprep.subr.bf16.mxu0 0
        %1943 = vmatpush1.bf16.msra.mxu0 0
        %1944 = vmatprep.subr.bf16.mxu0 0
        %1945 = vmatpush1.bf16.msra.mxu0 0
        %1946 = vmatprep.subr.bf16.mxu0 0
        %1947 = vmatpush1.bf16.msra.mxu0 0
        %1948 = vmatprep.subr.bf16.mxu0 0
        %1949 = vmatpush1.bf16.msra.mxu0 0
        %1950 = vmatprep.subr.bf16.mxu0 0
        %1951 = vmatpush1.bf16.msra.mxu0 0
        %1952 = vmatprep.subr.bf16.mxu0 0
        %1953 = vmatpush1.bf16.msra.mxu0 0
        %1954 = vmatprep.mubr.bf16.mxu0 0
        %1955 = vmatmul.mubr.bf16.gmra.mrb[0].mxu0 %v568
        %v1956 = vpop.f32.mrb[0].mxu0
        %v1957 = vadd.f32 %v1872, %v1956
        %v1958 = vpop.f32.mrb[0].mxu0
        %v1959 = vpop.f32.mrb[0].mxu0
        %v1960 = vadd.f32 %v1872, %v1959
        %v1961 = vpop.f32.mrb[0].mxu0
        %1962 = vmatprep.mubr.bf16.mxu0 0
        %1963 = vmatmul.mubr.bf16.gmra.mrb[0].mxu0 %v569
        %v1964 = vpop.f32.mrb[0].mxu0
        %v1965 = vadd.f32 %v1872, %v1964
        %v1966 = vpop.f32.mrb[0].mxu0
        %v1967 = vpop.f32.mrb[0].mxu0
        %v1968 = vadd.f32 %v1872, %v1967
        %v1969 = vpop.f32.mrb[0].mxu0
        %1970 = vdwg.mxu0
        %v1971 = vpack.c.bf16 %v1960, %v1957
        %v1972 = vpack.c.bf16 %v1968, %v1965
        %v1975 = vunpack.c.l.b16 %v1971
        %v1976 = vunpack.c.h.b16 %v1971
        %v1977 = vunpack.c.l.b16 %v1972
        %v1978 = vunpack.c.h.b16 %v1972
        %v1979 = vpack.c.b16 %v1975, %v1975
        %v1980 = vpack.c.b16 %v1976, %v1976
        %v1981 = vpack.c.b16 %v1977, %v1977
        %v1982 = vpack.c.b16 %v1978, %v1978
        %s1987 = scalar_lea.vmem %s414, 48 [#allocation4]
        %1988 = vst.msk [vmem:[%s1987] sm:$0xf] %vm706, %v1979
        %1989 = vst.msk [vmem:[%s1987 + $0x4] sm:$0xf] %vm706, %v1980
        %1990 = vst.msk [vmem:[%s1987 + $0x8] sm:$0xf] %vm706, %v1981
        %1991 = vst.msk [vmem:[%s1987 + $0xc] sm:$0xf] %vm706, %v1982
        %s1992 = scalar_lea.vmem %s5, 192
        %v1993 = vld [vmem:[%s1992] sm:$0xf]
        %v1994 = vld [vmem:[%s1992 + $0x4] sm:$0xf]
        %v1995 = vld [vmem:[%s1992 + $0x8] sm:$0xf]
        %v1996 = vld [vmem:[%s1992 + $0xc] sm:$0xf]
        %v1997 = vld [vmem:[%s1992 + $0x10] sm:$0xf]
        %v1998 = vld [vmem:[%s1992 + $0x14] sm:$0xf]
        %v1999 = vld [vmem:[%s1992 + $0x18] sm:$0xf]
        %v2000 = vld [vmem:[%s1992 + $0x1c] sm:$0xf]
        %v2001 = vld [vmem:[%s1992 + $0x20] sm:$0xf]
        %v2002 = vld [vmem:[%s1992 + $0x24] sm:$0xf]
        %v2003 = vld [vmem:[%s1992 + $0x28] sm:$0xf]
        %v2004 = vld [vmem:[%s1992 + $0x2c] sm:$0xf]
        %v2005 = vld [vmem:[%s1992 + $0x30] sm:$0xf]
        %v2006 = vld [vmem:[%s1992 + $0x34] sm:$0xf]
        %v2007 = vld [vmem:[%s1992 + $0x38] sm:$0xf]
        %v2008 = vld [vmem:[%s1992 + $0x3c] sm:$0xf]
        %s2009 = scalar_lea.vmem %s6, 3
        %v2010 = vld [vmem:[%s2009] sm:$0x1]
        %v2012 = vlaneseq
        %v2013 = vshrl.u32 %v2012, 7
        %v2014 = vsub.s32 0, %v2013
        %v2015 = vrot.slane %v2010, %v2014
        %v2033 = vunpack.c.l.b16 %v1993
        %v2034 = vunpack.c.l.b16 %v1994
        %v2035 = vunpack.c.l.b16 %v1995
        %v2036 = vunpack.c.l.b16 %v1996
        %v2037 = vunpack.c.l.b16 %v1997
        %v2038 = vunpack.c.l.b16 %v1998
        %v2039 = vunpack.c.l.b16 %v1999
        %v2040 = vunpack.c.l.b16 %v2000
        %v2041 = vunpack.c.l.b16 %v2001
        %v2042 = vunpack.c.l.b16 %v2002
        %v2043 = vunpack.c.l.b16 %v2003
        %v2044 = vunpack.c.l.b16 %v2004
        %v2045 = vunpack.c.l.b16 %v2005
        %v2046 = vunpack.c.l.b16 %v2006
        %v2047 = vunpack.c.l.b16 %v2007
        %v2048 = vunpack.c.l.b16 %v2008
        %v2049 = vpack.c.b16 %v2034, %v2033
        %v2050 = vpack.c.b16 %v2036, %v2035
        %v2051 = vpack.c.b16 %v2038, %v2037
        %v2052 = vpack.c.b16 %v2040, %v2039
        %v2053 = vpack.c.b16 %v2042, %v2041
        %v2054 = vpack.c.b16 %v2044, %v2043
        %v2055 = vpack.c.b16 %v2046, %v2045
        %v2056 = vpack.c.b16 %v2048, %v2047
        %2065 = vmatprep.subr.bf16.mxu0 0
        %2066 = vmatpush1.bf16.msra.mxu0 %v2049
        %2067 = vmatprep.subr.bf16.mxu0 0
        %2068 = vmatpush1.bf16.msra.mxu0 %v2050
        %2069 = vmatprep.subr.bf16.mxu0 0
        %2070 = vmatpush1.bf16.msra.mxu0 %v2051
        %2071 = vmatprep.subr.bf16.mxu0 0
        %2072 = vmatpush1.bf16.msra.mxu0 %v2052
        %2073 = vmatprep.subr.bf16.mxu0 0
        %2074 = vmatpush1.bf16.msra.mxu0 %v2053
        %2075 = vmatprep.subr.bf16.mxu0 0
        %2076 = vmatpush1.bf16.msra.mxu0 %v2054
        %2077 = vmatprep.subr.bf16.mxu0 0
        %2078 = vmatpush1.bf16.msra.mxu0 %v2055
        %2079 = vmatprep.subr.bf16.mxu0 0
        %2080 = vmatpush1.bf16.msra.mxu0 %v2056
        %2081 = vmatprep.subr.bf16.mxu0 0
        %2082 = vmatpush1.bf16.msra.mxu0 0
        %2083 = vmatprep.subr.bf16.mxu0 0
        %2084 = vmatpush1.bf16.msra.mxu0 0
        %2085 = vmatprep.subr.bf16.mxu0 0
        %2086 = vmatpush1.bf16.msra.mxu0 0
        %2087 = vmatprep.subr.bf16.mxu0 0
        %2088 = vmatpush1.bf16.msra.mxu0 0
        %2089 = vmatprep.subr.bf16.mxu0 0
        %2090 = vmatpush1.bf16.msra.mxu0 0
        %2091 = vmatprep.subr.bf16.mxu0 0
        %2092 = vmatpush1.bf16.msra.mxu0 0
        %2093 = vmatprep.subr.bf16.mxu0 0
        %2094 = vmatpush1.bf16.msra.mxu0 0
        %2095 = vmatprep.subr.bf16.mxu0 0
        %2096 = vmatpush1.bf16.msra.mxu0 0
        %2097 = vmatprep.mubr.bf16.mxu0 0
        %2098 = vmatmul.mubr.bf16.gmra.mrb[0].mxu0 %v568
        %v2099 = vpop.f32.mrb[0].mxu0
        %v2100 = vadd.f32 %v2015, %v2099
        %v2101 = vpop.f32.mrb[0].mxu0
        %v2102 = vpop.f32.mrb[0].mxu0
        %v2103 = vadd.f32 %v2015, %v2102
        %v2104 = vpop.f32.mrb[0].mxu0
        %2105 = vmatprep.mubr.bf16.mxu0 0
        %2106 = vmatmul.mubr.bf16.gmra.mrb[0].mxu0 %v569
        %v2107 = vpop.f32.mrb[0].mxu0
        %v2108 = vadd.f32 %v2015, %v2107
        %v2109 = vpop.f32.mrb[0].mxu0
        %v2110 = vpop.f32.mrb[0].mxu0
        %v2111 = vadd.f32 %v2015, %v2110
        %v2112 = vpop.f32.mrb[0].mxu0
        %2113 = vdwg.mxu0
        %v2114 = vpack.c.bf16 %v2103, %v2100
        %v2115 = vpack.c.bf16 %v2111, %v2108
        %v2118 = vunpack.c.l.b16 %v2114
        %v2119 = vunpack.c.h.b16 %v2114
        %v2120 = vunpack.c.l.b16 %v2115
        %v2121 = vunpack.c.h.b16 %v2115
        %v2122 = vpack.c.b16 %v2118, %v2118
        %v2123 = vpack.c.b16 %v2119, %v2119
        %v2124 = vpack.c.b16 %v2120, %v2120
        %v2125 = vpack.c.b16 %v2121, %v2121
        %s2130 = scalar_lea.vmem %s420, 48 [#allocation5]
        %2131 = vst.msk [vmem:[%s2130] sm:$0xf] %vm706, %v2122
        %2132 = vst.msk [vmem:[%s2130 + $0x4] sm:$0xf] %vm706, %v2123
        %2133 = vst.msk [vmem:[%s2130 + $0x8] sm:$0xf] %vm706, %v2124
        %2134 = vst.msk [vmem:[%s2130 + $0xc] sm:$0xf] %vm706, %v2125
        %s2135 = scalar_lea.vmem %s7, 192
        %v2136 = vld [vmem:[%s2135] sm:$0xf]
        %v2137 = vld [vmem:[%s2135 + $0x4] sm:$0xf]
        %v2138 = vld [vmem:[%s2135 + $0x8] sm:$0xf]
        %v2139 = vld [vmem:[%s2135 + $0xc] sm:$0xf]
        %v2140 = vld [vmem:[%s2135 + $0x10] sm:$0xf]
        %v2141 = vld [vmem:[%s2135 + $0x14] sm:$0xf]
        %v2142 = vld [vmem:[%s2135 + $0x18] sm:$0xf]
        %v2143 = vld [vmem:[%s2135 + $0x1c] sm:$0xf]
        %v2144 = vld [vmem:[%s2135 + $0x20] sm:$0xf]
        %v2145 = vld [vmem:[%s2135 + $0x24] sm:$0xf]
        %v2146 = vld [vmem:[%s2135 + $0x28] sm:$0xf]
        %v2147 = vld [vmem:[%s2135 + $0x2c] sm:$0xf]
        %v2148 = vld [vmem:[%s2135 + $0x30] sm:$0xf]
        %v2149 = vld [vmem:[%s2135 + $0x34] sm:$0xf]
        %v2150 = vld [vmem:[%s2135 + $0x38] sm:$0xf]
        %v2151 = vld [vmem:[%s2135 + $0x3c] sm:$0xf]
        %s2152 = scalar_lea.vmem %s8, 3
        %v2153 = vld [vmem:[%s2152] sm:$0x1]
        %v2155 = vlaneseq
        %v2156 = vshrl.u32 %v2155, 7
        %v2157 = vsub.s32 0, %v2156
        %v2158 = vrot.slane %v2153, %v2157
        %v2176 = vunpack.c.l.b16 %v2136
        %v2177 = vunpack.c.l.b16 %v2137
        %v2178 = vunpack.c.l.b16 %v2138
        %v2179 = vunpack.c.l.b16 %v2139
        %v2180 = vunpack.c.l.b16 %v2140
        %v2181 = vunpack.c.l.b16 %v2141
        %v2182 = vunpack.c.l.b16 %v2142
        %v2183 = vunpack.c.l.b16 %v2143
        %v2184 = vunpack.c.l.b16 %v2144
        %v2185 = vunpack.c.l.b16 %v2145
        %v2186 = vunpack.c.l.b16 %v2146
        %v2187 = vunpack.c.l.b16 %v2147
        %v2188 = vunpack.c.l.b16 %v2148
        %v2189 = vunpack.c.l.b16 %v2149
        %v2190 = vunpack.c.l.b16 %v2150
        %v2191 = vunpack.c.l.b16 %v2151
        %v2192 = vpack.c.b16 %v2177, %v2176
        %v2193 = vpack.c.b16 %v2179, %v2178
        %v2194 = vpack.c.b16 %v2181, %v2180
        %v2195 = vpack.c.b16 %v2183, %v2182
        %v2196 = vpack.c.b16 %v2185, %v2184
        %v2197 = vpack.c.b16 %v2187, %v2186
        %v2198 = vpack.c.b16 %v2189, %v2188
        %v2199 = vpack.c.b16 %v2191, %v2190
        %2208 = vmatprep.subr.bf16.mxu0 0
        %2209 = vmatpush1.bf16.msra.mxu0 %v2192
        %2210 = vmatprep.subr.bf16.mxu0 0
        %2211 = vmatpush1.bf16.msra.mxu0 %v2193
        %2212 = vmatprep.subr.bf16.mxu0 0
        %2213 = vmatpush1.bf16.msra.mxu0 %v2194
        %2214 = vmatprep.subr.bf16.mxu0 0
        %2215 = vmatpush1.bf16.msra.mxu0 %v2195
        %2216 = vmatprep.subr.bf16.mxu0 0
        %2217 = vmatpush1.bf16.msra.mxu0 %v2196
        %2218 = vmatprep.subr.bf16.mxu0 0
        %2219 = vmatpush1.bf16.msra.mxu0 %v2197
        %2220 = vmatprep.subr.bf16.mxu0 0
        %2221 = vmatpush1.bf16.msra.mxu0 %v2198
        %2222 = vmatprep.subr.bf16.mxu0 0
        %2223 = vmatpush1.bf16.msra.mxu0 %v2199
        %2224 = vmatprep.subr.bf16.mxu0 0
        %2225 = vmatpush1.bf16.msra.mxu0 0
        %2226 = vmatprep.subr.bf16.mxu0 0
        %2227 = vmatpush1.bf16.msra.mxu0 0
        %2228 = vmatprep.subr.bf16.mxu0 0
        %2229 = vmatpush1.bf16.msra.mxu0 0
        %2230 = vmatprep.subr.bf16.mxu0 0
        %2231 = vmatpush1.bf16.msra.mxu0 0
        %2232 = vmatprep.subr.bf16.mxu0 0
        %2233 = vmatpush1.bf16.msra.mxu0 0
        %2234 = vmatprep.subr.bf16.mxu0 0
        %2235 = vmatpush1.bf16.msra.mxu0 0
        %2236 = vmatprep.subr.bf16.mxu0 0
        %2237 = vmatpush1.bf16.msra.mxu0 0
        %2238 = vmatprep.subr.bf16.mxu0 0
        %2239 = vmatpush1.bf16.msra.mxu0 0
        %2240 = vmatprep.mubr.bf16.mxu0 0
        %2241 = vmatmul.mubr.bf16.gmra.mrb[0].mxu0 %v568
        %v2242 = vpop.f32.mrb[0].mxu0
        %v2243 = vadd.f32 %v2158, %v2242
        %v2244 = vpop.f32.mrb[0].mxu0
        %v2245 = vpop.f32.mrb[0].mxu0
        %v2246 = vadd.f32 %v2158, %v2245
        %v2247 = vpop.f32.mrb[0].mxu0
        %2248 = vmatprep.mubr.bf16.mxu0 0
        %2249 = vmatmul.mubr.bf16.gmra.mrb[0].mxu0 %v569
        %v2250 = vpop.f32.mrb[0].mxu0
        %v2251 = vadd.f32 %v2158, %v2250
        %v2252 = vpop.f32.mrb[0].mxu0
        %v2253 = vpop.f32.mrb[0].mxu0
        %v2254 = vadd.f32 %v2158, %v2253
        %v2255 = vpop.f32.mrb[0].mxu0
        %2256 = vdwg.mxu0
        %v2257 = vpack.c.bf16 %v2246, %v2243
        %v2258 = vpack.c.bf16 %v2254, %v2251
        %v2261 = vunpack.c.l.b16 %v2257
        %v2262 = vunpack.c.h.b16 %v2257
        %v2263 = vunpack.c.l.b16 %v2258
        %v2264 = vunpack.c.h.b16 %v2258
        %v2265 = vpack.c.b16 %v2261, %v2261
        %v2266 = vpack.c.b16 %v2262, %v2262
        %v2267 = vpack.c.b16 %v2263, %v2263
        %v2268 = vpack.c.b16 %v2264, %v2264
        %s2273 = scalar_lea.vmem %s426, 48 [#allocation6]
        %2274 = vst.msk [vmem:[%s2273] sm:$0xf] %vm706, %v2265
        %2275 = vst.msk [vmem:[%s2273 + $0x4] sm:$0xf] %vm706, %v2266
        %2276 = vst.msk [vmem:[%s2273 + $0x8] sm:$0xf] %vm706, %v2267
        %2277 = vst.msk [vmem:[%s2273 + $0xc] sm:$0xf] %vm706, %v2268
        %s2278 = sand.u32 %s229, 1
        %s2279 = scalar_lea.sflag [#allocation3], %s2278
        %s2280 = sand.u32 %s229, 1
        %s2281 = smul.addr %s2280, 32
        %s2282 = scalar_lea.vmem [#allocation2], %s2281
        %s2283 = sand.u32 %s255, 1
        %s2284 = sand.u32 %s255, 1
        %s2285 = smul.addr %s2284, 64
        %s2286 = scalar_lea.vmem [#allocation4], %s2285
        %s2287 = sand.u32 %s281, 1
        %s2288 = sand.u32 %s281, 1
        %s2289 = smul.addr %s2288, 64
        %s2290 = scalar_lea.vmem [#allocation5], %s2289
        %s2291 = sand.u32 %s307, 1
        %s2292 = sand.u32 %s307, 1
        %s2293 = smul.addr %s2292, 64
        %s2294 = scalar_lea.vmem [#allocation6], %s2293
        // Predicated region
        $region57: #{tpu_custom_call.1} parent=55 // pred_check
          %p2295 = pneg %p239
        $region58: #{tpu_custom_call.1} parent=55 // pred_check_branch
          %2297 = sbr.rel (%p2295) target = $region60
        $region59: #{tpu_custom_call.1} parent=55 // pred_region
          %s2298 = smul.u32 4, %s27
          %s2300 = ssub.s32 512, 512
          %2301 = vsyncadd %s2279, %s2300
          %s2302 = smul.addr %s2298, 128
          %s2303 = scalar_lea.hbm %s9, %s2302
          %s2304 = sshll.u32 %s2282, 4
          %s2305 = int_to_ptr.vmem [resolvable:$true] %s2304
          %2310 = dma.vmem_to_hbm [thread:$0]  %s2305, 512, %s2303, %s2279, 128, 128, 8
        $region60: #{tpu_custom_call.1} parent=55 // pred_fallthru
          _
        // Predicated region
        $region61: #{tpu_custom_call.1} parent=55 // pred_check
          %p2311 = pneg %p265
        $region62: #{tpu_custom_call.1} parent=55 // pred_check_branch
          %2313 = sbr.rel (%p2311) target = $region64
        $region63: #{tpu_custom_call.1} parent=55 // pred_region
          %s2314 = smul.u32 4, %s27
          %s2315 = smul.addr %s2314, 4
          %s2316 = scalar_lea.vmem %s10, %s2315
          // Predicated region
          $region65: #{tpu_custom_call.1} parent=63 // pred_check
            _
          $region66: #{tpu_custom_call.1} parent=63 // pred_check_branch
            %2318 = sbr.rel (0) target = $region68
          $region67: #{tpu_custom_call.1} parent=63 // pred_region
            // Predicated region
            $region69: #{tpu_custom_call.1} parent=67 // pred_check
              _
            $region70: #{tpu_custom_call.1} parent=67 // pred_check_branch
              %2320 = sbr.rel target = $region72
            $region71: #{tpu_custom_call.1} parent=67 // pred_region
              // Predicated region
              $region84: #{tpu_custom_call.1} parent=71 // pred_check
                _
              $region85: #{tpu_custom_call.1} parent=71 // pred_check_branch
                %2365 = sbr.rel (0) target = $region87
              $region86: #{tpu_custom_call.1} parent=71 // pred_region
                loop: start=0, step=1, limit=1
                $region88: #{tpu_custom_call.1} parent=86 // loop_pre_header
                  _
                $region89: #{tpu_custom_call.1} parent=86 // loop_header
                  %s2367 = sphi 0, %s2371
                  %p2368 = scmp.ge.s32.totalorder %s2367, 1
                  %s2372 = sphi %s2286, %s2286
                  %s2373 = sphi %s2316, %s2316
                $region90: #{tpu_custom_call.1} parent=86 // loop_header_branch
                  %2370 = sbr.rel (%p2368) target = $region94
                $region91: #{tpu_custom_call.1} parent=86 // loop_body
                  _
                $region92: #{tpu_custom_call.1} parent=86 // loop_footer
                  %s2371 = sadd.s32 1, %s2367
                $region93: #{tpu_custom_call.1} parent=86 // loop_footer_branch
                  %2366 = sbr.rel target = $region89
                $region94: #{tpu_custom_call.1} parent=86 // loop_exit
                  _
                loop: start=0, step=1, limit=1
                $region95: #{tpu_custom_call.1} parent=86 // loop_pre_header
                  _
                $region96: #{tpu_custom_call.1} parent=86 // loop_header
                  %s2376 = sphi 0, %s2380
                  %p2377 = scmp.ge.s32.totalorder %s2376, 1
                  %s2381 = sphi %s2286, %s2286
                  %s2382 = sphi %s2316, %s2316
                $region97: #{tpu_custom_call.1} parent=86 // loop_header_branch
                  %2379 = sbr.rel (%p2377) target = $region101
                $region98: #{tpu_custom_call.1} parent=86 // loop_body
                  %v2383 = vld [vmem:[%s2381] sm:$0xf]
                  %2384 = vst [vmem:[%s2382] sm:$0xf] %v2383
                  %v2385 = vld [vmem:[%s2381 + $0x4] sm:$0xf]
                  %2386 = vst [vmem:[%s2382 + $0x4] sm:$0xf] %v2385
                  %v2387 = vld [vmem:[%s2381 + $0x8] sm:$0xf]
                  %2388 = vst [vmem:[%s2382 + $0x8] sm:$0xf] %v2387
                  %v2389 = vld [vmem:[%s2381 + $0xc] sm:$0xf]
                  %2390 = vst [vmem:[%s2382 + $0xc] sm:$0xf] %v2389
                  %v2391 = vld [vmem:[%s2381 + $0x10] sm:$0xf]
                  %2392 = vst [vmem:[%s2382 + $0x40] sm:$0xf] %v2391
                  %v2393 = vld [vmem:[%s2381 + $0x14] sm:$0xf]
                  %2394 = vst [vmem:[%s2382 + $0x44] sm:$0xf] %v2393
                  %v2395 = vld [vmem:[%s2381 + $0x18] sm:$0xf]
                  %2396 = vst [vmem:[%s2382 + $0x48] sm:$0xf] %v2395
                  %v2397 = vld [vmem:[%s2381 + $0x1c] sm:$0xf]
                  %2398 = vst [vmem:[%s2382 + $0x4c] sm:$0xf] %v2397
                  %v2399 = vld [vmem:[%s2381 + $0x20] sm:$0xf]
                  %2400 = vst [vmem:[%s2382 + $0x80] sm:$0xf] %v2399
                  %v2401 = vld [vmem:[%s2381 + $0x24] sm:$0xf]
                  %2402 = vst [vmem:[%s2382 + $0x84] sm:$0xf] %v2401
                  %v2403 = vld [vmem:[%s2381 + $0x28] sm:$0xf]
                  %2404 = vst [vmem:[%s2382 + $0x88] sm:$0xf] %v2403
                  %v2405 = vld [vmem:[%s2381 + $0x2c] sm:$0xf]
                  %2406 = vst [vmem:[%s2382 + $0x8c] sm:$0xf] %v2405
                  %v2407 = vld [vmem:[%s2381 + $0x30] sm:$0xf]
                  %2408 = vst [vmem:[%s2382 + $0xc0] sm:$0xf] %v2407
                  %v2409 = vld [vmem:[%s2381 + $0x34] sm:$0xf]
                  %2410 = vst [vmem:[%s2382 + $0xc4] sm:$0xf] %v2409
                  %v2411 = vld [vmem:[%s2381 + $0x38] sm:$0xf]
                  %2412 = vst [vmem:[%s2382 + $0xc8] sm:$0xf] %v2411
                  %v2413 = vld [vmem:[%s2381 + $0x3c] sm:$0xf]
                  %2414 = vst [vmem:[%s2382 + $0xcc] sm:$0xf] %v2413
                $region99: #{tpu_custom_call.1} parent=86 // loop_footer
                  %s2380 = sadd.s32 1, %s2376
                $region100: #{tpu_custom_call.1} parent=86 // loop_footer_branch
                  %2375 = sbr.rel target = $region96
                $region101: #{tpu_custom_call.1} parent=86 // loop_exit
                  _
              $region87: #{tpu_custom_call.1} parent=71 // pred_fallthru
                _
            $region72: #{tpu_custom_call.1} parent=67 // pred_fallthru
              _
            // Predicated region
            $region73: #{tpu_custom_call.1} parent=67 // pred_check
              _
            $region74: #{tpu_custom_call.1} parent=67 // pred_check_branch
              %2322 = sbr.rel (0) target = $region76
            $region75: #{tpu_custom_call.1} parent=67 // pred_region
              loop: start=0, step=1, limit=1
              $region77: #{tpu_custom_call.1} parent=75 // loop_pre_header
                _
              $region78: #{tpu_custom_call.1} parent=75 // loop_header
                %s2325 = sphi 0, %s2329
                %p2326 = scmp.ge.s32.totalorder %s2325, 1
                %s2330 = sphi %s2286, %s2286
                %s2331 = sphi %s2316, %s2316
              $region79: #{tpu_custom_call.1} parent=75 // loop_header_branch
                %2328 = sbr.rel (%p2326) target = $region83
              $region80: #{tpu_custom_call.1} parent=75 // loop_body
                %v2332 = vld [vmem:[%s2330] sm:$0xf]
                %2333 = vst [vmem:[%s2331] sm:$0xf] %v2332
                %v2334 = vld [vmem:[%s2330 + $0x4] sm:$0xf]
                %2335 = vst [vmem:[%s2331 + $0x4] sm:$0xf] %v2334
                %v2336 = vld [vmem:[%s2330 + $0x8] sm:$0xf]
                %2337 = vst [vmem:[%s2331 + $0x8] sm:$0xf] %v2336
                %v2338 = vld [vmem:[%s2330 + $0xc] sm:$0xf]
                %2339 = vst [vmem:[%s2331 + $0xc] sm:$0xf] %v2338
                %v2340 = vld [vmem:[%s2330 + $0x10] sm:$0xf]
                %2341 = vst [vmem:[%s2331 + $0x40] sm:$0xf] %v2340
                %v2342 = vld [vmem:[%s2330 + $0x14] sm:$0xf]
                %2343 = vst [vmem:[%s2331 + $0x44] sm:$0xf] %v2342
                %v2344 = vld [vmem:[%s2330 + $0x18] sm:$0xf]
                %2345 = vst [vmem:[%s2331 + $0x48] sm:$0xf] %v2344
                %v2346 = vld [vmem:[%s2330 + $0x1c] sm:$0xf]
                %2347 = vst [vmem:[%s2331 + $0x4c] sm:$0xf] %v2346
                %v2348 = vld [vmem:[%s2330 + $0x20] sm:$0xf]
                %2349 = vst [vmem:[%s2331 + $0x80] sm:$0xf] %v2348
                %v2350 = vld [vmem:[%s2330 + $0x24] sm:$0xf]
                %2351 = vst [vmem:[%s2331 + $0x84] sm:$0xf] %v2350
                %v2352 = vld [vmem:[%s2330 + $0x28] sm:$0xf]
                %2353 = vst [vmem:[%s2331 + $0x88] sm:$0xf] %v2352
                %v2354 = vld [vmem:[%s2330 + $0x2c] sm:$0xf]
                %2355 = vst [vmem:[%s2331 + $0x8c] sm:$0xf] %v2354
                %v2356 = vld [vmem:[%s2330 + $0x30] sm:$0xf]
                %2357 = vst [vmem:[%s2331 + $0xc0] sm:$0xf] %v2356
                %v2358 = vld [vmem:[%s2330 + $0x34] sm:$0xf]
                %2359 = vst [vmem:[%s2331 + $0xc4] sm:$0xf] %v2358
                %v2360 = vld [vmem:[%s2330 + $0x38] sm:$0xf]
                %2361 = vst [vmem:[%s2331 + $0xc8] sm:$0xf] %v2360
                %v2362 = vld [vmem:[%s2330 + $0x3c] sm:$0xf]
                %2363 = vst [vmem:[%s2331 + $0xcc] sm:$0xf] %v2362
              $region81: #{tpu_custom_call.1} parent=75 // loop_footer
                %s2329 = sadd.s32 1, %s2325
              $region82: #{tpu_custom_call.1} parent=75 // loop_footer_branch
                %2324 = sbr.rel target = $region78
              $region83: #{tpu_custom_call.1} parent=75 // loop_exit
                _
            $region76: #{tpu_custom_call.1} parent=67 // pred_fallthru
              _
          $region68: #{tpu_custom_call.1} parent=63 // pred_fallthru
            _
          %2415 = vnop
        $region64: #{tpu_custom_call.1} parent=55 // pred_fallthru
          _
        // Predicated region
        $region102: #{tpu_custom_call.1} parent=55 // pred_check
          %p2416 = pneg %p291
        $region103: #{tpu_custom_call.1} parent=55 // pred_check_branch
          %2418 = sbr.rel (%p2416) target = $region105
        $region104: #{tpu_custom_call.1} parent=55 // pred_region
          %s2419 = smul.u32 4, %s27
          %s2420 = smul.addr %s2419, 4
          %s2421 = scalar_lea.vmem %s11, %s2420
          // Predicated region
          $region106: #{tpu_custom_call.1} parent=104 // pred_check
            _
          $region107: #{tpu_custom_call.1} parent=104 // pred_check_branch
            %2423 = sbr.rel (0) target = $region109
          $region108: #{tpu_custom_call.1} parent=104 // pred_region
            // Predicated region
            $region110: #{tpu_custom_call.1} parent=108 // pred_check
              _
            $region111: #{tpu_custom_call.1} parent=108 // pred_check_branch
              %2425 = sbr.rel target = $region113
            $region112: #{tpu_custom_call.1} parent=108 // pred_region
              // Predicated region
              $region125: #{tpu_custom_call.1} parent=112 // pred_check
                _
              $region126: #{tpu_custom_call.1} parent=112 // pred_check_branch
                %2470 = sbr.rel (0) target = $region128
              $region127: #{tpu_custom_call.1} parent=112 // pred_region
                loop: start=0, step=1, limit=1
                $region129: #{tpu_custom_call.1} parent=127 // loop_pre_header
                  _
                $region130: #{tpu_custom_call.1} parent=127 // loop_header
                  %s2472 = sphi 0, %s2476
                  %p2473 = scmp.ge.s32.totalorder %s2472, 1
                  %s2477 = sphi %s2290, %s2290
                  %s2478 = sphi %s2421, %s2421
                $region131: #{tpu_custom_call.1} parent=127 // loop_header_branch
                  %2475 = sbr.rel (%p2473) target = $region135
                $region132: #{tpu_custom_call.1} parent=127 // loop_body
                  _
                $region133: #{tpu_custom_call.1} parent=127 // loop_footer
                  %s2476 = sadd.s32 1, %s2472
                $region134: #{tpu_custom_call.1} parent=127 // loop_footer_branch
                  %2471 = sbr.rel target = $region130
                $region135: #{tpu_custom_call.1} parent=127 // loop_exit
                  _
                loop: start=0, step=1, limit=1
                $region136: #{tpu_custom_call.1} parent=127 // loop_pre_header
                  _
                $region137: #{tpu_custom_call.1} parent=127 // loop_header
                  %s2481 = sphi 0, %s2485
                  %p2482 = scmp.ge.s32.totalorder %s2481, 1
                  %s2486 = sphi %s2290, %s2290
                  %s2487 = sphi %s2421, %s2421
                $region138: #{tpu_custom_call.1} parent=127 // loop_header_branch
                  %2484 = sbr.rel (%p2482) target = $region142
                $region139: #{tpu_custom_call.1} parent=127 // loop_body
                  %v2488 = vld [vmem:[%s2486] sm:$0xf]
                  %2489 = vst [vmem:[%s2487] sm:$0xf] %v2488
                  %v2490 = vld [vmem:[%s2486 + $0x4] sm:$0xf]
                  %2491 = vst [vmem:[%s2487 + $0x4] sm:$0xf] %v2490
                  %v2492 = vld [vmem:[%s2486 + $0x8] sm:$0xf]
                  %2493 = vst [vmem:[%s2487 + $0x8] sm:$0xf] %v2492
                  %v2494 = vld [vmem:[%s2486 + $0xc] sm:$0xf]
                  %2495 = vst [vmem:[%s2487 + $0xc] sm:$0xf] %v2494
                  %v2496 = vld [vmem:[%s2486 + $0x10] sm:$0xf]
                  %2497 = vst [vmem:[%s2487 + $0x40] sm:$0xf] %v2496
                  %v2498 = vld [vmem:[%s2486 + $0x14] sm:$0xf]
                  %2499 = vst [vmem:[%s2487 + $0x44] sm:$0xf] %v2498
                  %v2500 = vld [vmem:[%s2486 + $0x18] sm:$0xf]
                  %2501 = vst [vmem:[%s2487 + $0x48] sm:$0xf] %v2500
                  %v2502 = vld [vmem:[%s2486 + $0x1c] sm:$0xf]
                  %2503 = vst [vmem:[%s2487 + $0x4c] sm:$0xf] %v2502
                  %v2504 = vld [vmem:[%s2486 + $0x20] sm:$0xf]
                  %2505 = vst [vmem:[%s2487 + $0x80] sm:$0xf] %v2504
                  %v2506 = vld [vmem:[%s2486 + $0x24] sm:$0xf]
                  %2507 = vst [vmem:[%s2487 + $0x84] sm:$0xf] %v2506
                  %v2508 = vld [vmem:[%s2486 + $0x28] sm:$0xf]
                  %2509 = vst [vmem:[%s2487 + $0x88] sm:$0xf] %v2508
                  %v2510 = vld [vmem:[%s2486 + $0x2c] sm:$0xf]
                  %2511 = vst [vmem:[%s2487 + $0x8c] sm:$0xf] %v2510
                  %v2512 = vld [vmem:[%s2486 + $0x30] sm:$0xf]
                  %2513 = vst [vmem:[%s2487 + $0xc0] sm:$0xf] %v2512
                  %v2514 = vld [vmem:[%s2486 + $0x34] sm:$0xf]
                  %2515 = vst [vmem:[%s2487 + $0xc4] sm:$0xf] %v2514
                  %v2516 = vld [vmem:[%s2486 + $0x38] sm:$0xf]
                  %2517 = vst [vmem:[%s2487 + $0xc8] sm:$0xf] %v2516
                  %v2518 = vld [vmem:[%s2486 + $0x3c] sm:$0xf]
                  %2519 = vst [vmem:[%s2487 + $0xcc] sm:$0xf] %v2518
                $region140: #{tpu_custom_call.1} parent=127 // loop_footer
                  %s2485 = sadd.s32 1, %s2481
                $region141: #{tpu_custom_call.1} parent=127 // loop_footer_branch
                  %2480 = sbr.rel target = $region137
                $region142: #{tpu_custom_call.1} parent=127 // loop_exit
                  _
              $region128: #{tpu_custom_call.1} parent=112 // pred_fallthru
                _
            $region113: #{tpu_custom_call.1} parent=108 // pred_fallthru
              _
            // Predicated region
            $region114: #{tpu_custom_call.1} parent=108 // pred_check
              _
            $region115: #{tpu_custom_call.1} parent=108 // pred_check_branch
              %2427 = sbr.rel (0) target = $region117
            $region116: #{tpu_custom_call.1} parent=108 // pred_region
              loop: start=0, step=1, limit=1
              $region118: #{tpu_custom_call.1} parent=116 // loop_pre_header
                _
              $region119: #{tpu_custom_call.1} parent=116 // loop_header
                %s2430 = sphi 0, %s2434
                %p2431 = scmp.ge.s32.totalorder %s2430, 1
                %s2435 = sphi %s2290, %s2290
                %s2436 = sphi %s2421, %s2421
              $region120: #{tpu_custom_call.1} parent=116 // loop_header_branch
                %2433 = sbr.rel (%p2431) target = $region124
              $region121: #{tpu_custom_call.1} parent=116 // loop_body
                %v2437 = vld [vmem:[%s2435] sm:$0xf]
                %2438 = vst [vmem:[%s2436] sm:$0xf] %v2437
                %v2439 = vld [vmem:[%s2435 + $0x4] sm:$0xf]
                %2440 = vst [vmem:[%s2436 + $0x4] sm:$0xf] %v2439
                %v2441 = vld [vmem:[%s2435 + $0x8] sm:$0xf]
                %2442 = vst [vmem:[%s2436 + $0x8] sm:$0xf] %v2441
                %v2443 = vld [vmem:[%s2435 + $0xc] sm:$0xf]
                %2444 = vst [vmem:[%s2436 + $0xc] sm:$0xf] %v2443
                %v2445 = vld [vmem:[%s2435 + $0x10] sm:$0xf]
                %2446 = vst [vmem:[%s2436 + $0x40] sm:$0xf] %v2445
                %v2447 = vld [vmem:[%s2435 + $0x14] sm:$0xf]
                %2448 = vst [vmem:[%s2436 + $0x44] sm:$0xf] %v2447
                %v2449 = vld [vmem:[%s2435 + $0x18] sm:$0xf]
                %2450 = vst [vmem:[%s2436 + $0x48] sm:$0xf] %v2449
                %v2451 = vld [vmem:[%s2435 + $0x1c] sm:$0xf]
                %2452 = vst [vmem:[%s2436 + $0x4c] sm:$0xf] %v2451
                %v2453 = vld [vmem:[%s2435 + $0x20] sm:$0xf]
                %2454 = vst [vmem:[%s2436 + $0x80] sm:$0xf] %v2453
                %v2455 = vld [vmem:[%s2435 + $0x24] sm:$0xf]
                %2456 = vst [vmem:[%s2436 + $0x84] sm:$0xf] %v2455
                %v2457 = vld [vmem:[%s2435 + $0x28] sm:$0xf]
                %2458 = vst [vmem:[%s2436 + $0x88] sm:$0xf] %v2457
                %v2459 = vld [vmem:[%s2435 + $0x2c] sm:$0xf]
                %2460 = vst [vmem:[%s2436 + $0x8c] sm:$0xf] %v2459
                %v2461 = vld [vmem:[%s2435 + $0x30] sm:$0xf]
                %2462 = vst [vmem:[%s2436 + $0xc0] sm:$0xf] %v2461
                %v2463 = vld [vmem:[%s2435 + $0x34] sm:$0xf]
                %2464 = vst [vmem:[%s2436 + $0xc4] sm:$0xf] %v2463
                %v2465 = vld [vmem:[%s2435 + $0x38] sm:$0xf]
                %2466 = vst [vmem:[%s2436 + $0xc8] sm:$0xf] %v2465
                %v2467 = vld [vmem:[%s2435 + $0x3c] sm:$0xf]
                %2468 = vst [vmem:[%s2436 + $0xcc] sm:$0xf] %v2467
              $region122: #{tpu_custom_call.1} parent=116 // loop_footer
                %s2434 = sadd.s32 1, %s2430
              $region123: #{tpu_custom_call.1} parent=116 // loop_footer_branch
                %2429 = sbr.rel target = $region119
              $region124: #{tpu_custom_call.1} parent=116 // loop_exit
                _
            $region117: #{tpu_custom_call.1} parent=108 // pred_fallthru
              _
          $region109: #{tpu_custom_call.1} parent=104 // pred_fallthru
            _
          %2520 = vnop
        $region105: #{tpu_custom_call.1} parent=55 // pred_fallthru
          _
        // Predicated region
        $region143: #{tpu_custom_call.1} parent=55 // pred_check
          %p2521 = pneg %p317
        $region144: #{tpu_custom_call.1} parent=55 // pred_check_branch
          %2523 = sbr.rel (%p2521) target = $region146
        $region145: #{tpu_custom_call.1} parent=55 // pred_region
          %s2524 = smul.u32 4, %s27
          %s2525 = smul.addr %s2524, 4
          %s2526 = scalar_lea.vmem %s12, %s2525
          // Predicated region
          $region147: #{tpu_custom_call.1} parent=145 // pred_check
            _
          $region148: #{tpu_custom_call.1} parent=145 // pred_check_branch
            %2528 = sbr.rel (0) target = $region150
          $region149: #{tpu_custom_call.1} parent=145 // pred_region
            // Predicated region
            $region151: #{tpu_custom_call.1} parent=149 // pred_check
              _
            $region152: #{tpu_custom_call.1} parent=149 // pred_check_branch
              %2530 = sbr.rel target = $region154
            $region153: #{tpu_custom_call.1} parent=149 // pred_region
              // Predicated region
              $region166: #{tpu_custom_call.1} parent=153 // pred_check
                _
              $region167: #{tpu_custom_call.1} parent=153 // pred_check_branch
                %2575 = sbr.rel (0) target = $region169
              $region168: #{tpu_custom_call.1} parent=153 // pred_region
                loop: start=0, step=1, limit=1
                $region170: #{tpu_custom_call.1} parent=168 // loop_pre_header
                  _
                $region171: #{tpu_custom_call.1} parent=168 // loop_header
                  %s2577 = sphi 0, %s2581
                  %p2578 = scmp.ge.s32.totalorder %s2577, 1
                  %s2582 = sphi %s2294, %s2294
                  %s2583 = sphi %s2526, %s2526
                $region172: #{tpu_custom_call.1} parent=168 // loop_header_branch
                  %2580 = sbr.rel (%p2578) target = $region176
                $region173: #{tpu_custom_call.1} parent=168 // loop_body
                  _
                $region174: #{tpu_custom_call.1} parent=168 // loop_footer
                  %s2581 = sadd.s32 1, %s2577
                $region175: #{tpu_custom_call.1} parent=168 // loop_footer_branch
                  %2576 = sbr.rel target = $region171
                $region176: #{tpu_custom_call.1} parent=168 // loop_exit
                  _
                loop: start=0, step=1, limit=1
                $region177: #{tpu_custom_call.1} parent=168 // loop_pre_header
                  _
                $region178: #{tpu_custom_call.1} parent=168 // loop_header
                  %s2586 = sphi 0, %s2590
                  %p2587 = scmp.ge.s32.totalorder %s2586, 1
                  %s2591 = sphi %s2294, %s2294
                  %s2592 = sphi %s2526, %s2526
                $region179: #{tpu_custom_call.1} parent=168 // loop_header_branch
                  %2589 = sbr.rel (%p2587) target = $region183
                $region180: #{tpu_custom_call.1} parent=168 // loop_body
                  %v2593 = vld [vmem:[%s2591] sm:$0xf]
                  %2594 = vst [vmem:[%s2592] sm:$0xf] %v2593
                  %v2595 = vld [vmem:[%s2591 + $0x4] sm:$0xf]
                  %2596 = vst [vmem:[%s2592 + $0x4] sm:$0xf] %v2595
                  %v2597 = vld [vmem:[%s2591 + $0x8] sm:$0xf]
                  %2598 = vst [vmem:[%s2592 + $0x8] sm:$0xf] %v2597
                  %v2599 = vld [vmem:[%s2591 + $0xc] sm:$0xf]
                  %2600 = vst [vmem:[%s2592 + $0xc] sm:$0xf] %v2599
                  %v2601 = vld [vmem:[%s2591 + $0x10] sm:$0xf]
                  %2602 = vst [vmem:[%s2592 + $0x40] sm:$0xf] %v2601
                  %v2603 = vld [vmem:[%s2591 + $0x14] sm:$0xf]
                  %2604 = vst [vmem:[%s2592 + $0x44] sm:$0xf] %v2603
                  %v2605 = vld [vmem:[%s2591 + $0x18] sm:$0xf]
                  %2606 = vst [vmem:[%s2592 + $0x48] sm:$0xf] %v2605
                  %v2607 = vld [vmem:[%s2591 + $0x1c] sm:$0xf]
                  %2608 = vst [vmem:[%s2592 + $0x4c] sm:$0xf] %v2607
                  %v2609 = vld [vmem:[%s2591 + $0x20] sm:$0xf]
                  %2610 = vst [vmem:[%s2592 + $0x80] sm:$0xf] %v2609
                  %v2611 = vld [vmem:[%s2591 + $0x24] sm:$0xf]
                  %2612 = vst [vmem:[%s2592 + $0x84] sm:$0xf] %v2611
                  %v2613 = vld [vmem:[%s2591 + $0x28] sm:$0xf]
                  %2614 = vst [vmem:[%s2592 + $0x88] sm:$0xf] %v2613
                  %v2615 = vld [vmem:[%s2591 + $0x2c] sm:$0xf]
                  %2616 = vst [vmem:[%s2592 + $0x8c] sm:$0xf] %v2615
                  %v2617 = vld [vmem:[%s2591 + $0x30] sm:$0xf]
                  %2618 = vst [vmem:[%s2592 + $0xc0] sm:$0xf] %v2617
                  %v2619 = vld [vmem:[%s2591 + $0x34] sm:$0xf]
                  %2620 = vst [vmem:[%s2592 + $0xc4] sm:$0xf] %v2619
                  %v2621 = vld [vmem:[%s2591 + $0x38] sm:$0xf]
                  %2622 = vst [vmem:[%s2592 + $0xc8] sm:$0xf] %v2621
                  %v2623 = vld [vmem:[%s2591 + $0x3c] sm:$0xf]
                  %2624 = vst [vmem:[%s2592 + $0xcc] sm:$0xf] %v2623
                $region181: #{tpu_custom_call.1} parent=168 // loop_footer
                  %s2590 = sadd.s32 1, %s2586
                $region182: #{tpu_custom_call.1} parent=168 // loop_footer_branch
                  %2585 = sbr.rel target = $region178
                $region183: #{tpu_custom_call.1} parent=168 // loop_exit
                  _
              $region169: #{tpu_custom_call.1} parent=153 // pred_fallthru
                _
            $region154: #{tpu_custom_call.1} parent=149 // pred_fallthru
              _
            // Predicated region
            $region155: #{tpu_custom_call.1} parent=149 // pred_check
              _
            $region156: #{tpu_custom_call.1} parent=149 // pred_check_branch
              %2532 = sbr.rel (0) target = $region158
            $region157: #{tpu_custom_call.1} parent=149 // pred_region
              loop: start=0, step=1, limit=1
              $region159: #{tpu_custom_call.1} parent=157 // loop_pre_header
                _
              $region160: #{tpu_custom_call.1} parent=157 // loop_header
                %s2535 = sphi 0, %s2539
                %p2536 = scmp.ge.s32.totalorder %s2535, 1
                %s2540 = sphi %s2294, %s2294
                %s2541 = sphi %s2526, %s2526
              $region161: #{tpu_custom_call.1} parent=157 // loop_header_branch
                %2538 = sbr.rel (%p2536) target = $region165
              $region162: #{tpu_custom_call.1} parent=157 // loop_body
                %v2542 = vld [vmem:[%s2540] sm:$0xf]
                %2543 = vst [vmem:[%s2541] sm:$0xf] %v2542
                %v2544 = vld [vmem:[%s2540 + $0x4] sm:$0xf]
                %2545 = vst [vmem:[%s2541 + $0x4] sm:$0xf] %v2544
                %v2546 = vld [vmem:[%s2540 + $0x8] sm:$0xf]
                %2547 = vst [vmem:[%s2541 + $0x8] sm:$0xf] %v2546
                %v2548 = vld [vmem:[%s2540 + $0xc] sm:$0xf]
                %2549 = vst [vmem:[%s2541 + $0xc] sm:$0xf] %v2548
                %v2550 = vld [vmem:[%s2540 + $0x10] sm:$0xf]
                %2551 = vst [vmem:[%s2541 + $0x40] sm:$0xf] %v2550
                %v2552 = vld [vmem:[%s2540 + $0x14] sm:$0xf]
                %2553 = vst [vmem:[%s2541 + $0x44] sm:$0xf] %v2552
                %v2554 = vld [vmem:[%s2540 + $0x18] sm:$0xf]
                %2555 = vst [vmem:[%s2541 + $0x48] sm:$0xf] %v2554
                %v2556 = vld [vmem:[%s2540 + $0x1c] sm:$0xf]
                %2557 = vst [vmem:[%s2541 + $0x4c] sm:$0xf] %v2556
                %v2558 = vld [vmem:[%s2540 + $0x20] sm:$0xf]
                %2559 = vst [vmem:[%s2541 + $0x80] sm:$0xf] %v2558
                %v2560 = vld [vmem:[%s2540 + $0x24] sm:$0xf]
                %2561 = vst [vmem:[%s2541 + $0x84] sm:$0xf] %v2560
                %v2562 = vld [vmem:[%s2540 + $0x28] sm:$0xf]
                %2563 = vst [vmem:[%s2541 + $0x88] sm:$0xf] %v2562
                %v2564 = vld [vmem:[%s2540 + $0x2c] sm:$0xf]
                %2565 = vst [vmem:[%s2541 + $0x8c] sm:$0xf] %v2564
                %v2566 = vld [vmem:[%s2540 + $0x30] sm:$0xf]
                %2567 = vst [vmem:[%s2541 + $0xc0] sm:$0xf] %v2566
                %v2568 = vld [vmem:[%s2540 + $0x34] sm:$0xf]
                %2569 = vst [vmem:[%s2541 + $0xc4] sm:$0xf] %v2568
                %v2570 = vld [vmem:[%s2540 + $0x38] sm:$0xf]
                %2571 = vst [vmem:[%s2541 + $0xc8] sm:$0xf] %v2570
                %v2572 = vld [vmem:[%s2540 + $0x3c] sm:$0xf]
                %2573 = vst [vmem:[%s2541 + $0xcc] sm:$0xf] %v2572
              $region163: #{tpu_custom_call.1} parent=157 // loop_footer
                %s2539 = sadd.s32 1, %s2535
              $region164: #{tpu_custom_call.1} parent=157 // loop_footer_branch
                %2534 = sbr.rel target = $region160
              $region165: #{tpu_custom_call.1} parent=157 // loop_exit
                _
            $region158: #{tpu_custom_call.1} parent=149 // pred_fallthru
              _
          $region150: #{tpu_custom_call.1} parent=145 // pred_fallthru
            _
          %2625 = vnop
        $region146: #{tpu_custom_call.1} parent=55 // pred_fallthru
          _
      $region56: #{tpu_custom_call.1} parent=5 // pred_fallthru
        _
      %p2626 = scmp.le.s32.totalorder 2, %s22
      // Predicated region
      $region184: #{tpu_custom_call.1} parent=5 // pred_check
        %p2627 = pneg %p2626
      $region185: #{tpu_custom_call.1} parent=5 // pred_check_branch
        %2629 = sbr.rel (%p2627) target = $region187
      $region186: #{tpu_custom_call.1} parent=5 // pred_region
        %s2630 = ssub.s32 %s22, 2
        // Predicated region
        $region188: #{tpu_custom_call.1} parent=186 // pred_check
          %p2631 = pneg %p245
        $region189: #{tpu_custom_call.1} parent=186 // pred_check_branch
          %2633 = sbr.rel (%p2631) target = $region191
        $region190: #{tpu_custom_call.1} parent=186 // pred_region
          %s2634 = sand.u32 %s230, 1
          %s2635 = scalar_lea.sflag [#allocation3], %s2634
          %s2636 = sand.u32 %s230, 1
          %s2637 = smul.addr %s2636, 32
          %s2638 = scalar_lea.vmem [#allocation2], %s2637
          %2639 = dma.done %s2635, 512
        $region191: #{tpu_custom_call.1} parent=186 // pred_fallthru
          _
        // Predicated region
        $region192: #{tpu_custom_call.1} parent=186 // pred_check
          %p2640 = pneg %p271
        $region193: #{tpu_custom_call.1} parent=186 // pred_check_branch
          %2642 = sbr.rel (%p2640) target = $region195
        $region194: #{tpu_custom_call.1} parent=186 // pred_region
          %s2643 = sand.u32 %s256, 1
          %s2644 = sand.u32 %s256, 1
          %s2645 = smul.addr %s2644, 64
          %s2646 = scalar_lea.vmem [#allocation4], %s2645
        $region195: #{tpu_custom_call.1} parent=186 // pred_fallthru
          _
        // Predicated region
        $region196: #{tpu_custom_call.1} parent=186 // pred_check
          %p2647 = pneg %p297
        $region197: #{tpu_custom_call.1} parent=186 // pred_check_branch
          %2649 = sbr.rel (%p2647) target = $region199
        $region198: #{tpu_custom_call.1} parent=186 // pred_region
          %s2650 = sand.u32 %s282, 1
          %s2651 = sand.u32 %s282, 1
          %s2652 = smul.addr %s2651, 64
          %s2653 = scalar_lea.vmem [#allocation5], %s2652
        $region199: #{tpu_custom_call.1} parent=186 // pred_fallthru
          _
        // Predicated region
        $region200: #{tpu_custom_call.1} parent=186 // pred_check
          %p2654 = pneg %p323
        $region201: #{tpu_custom_call.1} parent=186 // pred_check_branch
          %2656 = sbr.rel (%p2654) target = $region203
        $region202: #{tpu_custom_call.1} parent=186 // pred_region
          %s2657 = sand.u32 %s308, 1
          %s2658 = sand.u32 %s308, 1
          %s2659 = smul.addr %s2658, 64
          %s2660 = scalar_lea.vmem [#allocation6], %s2659
        $region203: #{tpu_custom_call.1} parent=186 // pred_fallthru
          _
      $region187: #{tpu_custom_call.1} parent=5 // pred_fallthru
        _
    $region6: #{tpu_custom_call.1} parent=1 // loop_footer
      %s26 = sadd.s32 1, %s22
    $region7: #{tpu_custom_call.1} parent=1 // loop_footer_branch
      %21 = sbr.rel target = $region3
    $region8: #{tpu_custom_call.1} parent=1 // loop_exit
      _
    %2661 = vsyncpa [#allocation3], 1
    %s2662 = scalar_lea.sflag [#allocation3], 1
    %2663 = vsyncpa %s2662, 1

</llo_original>
